<compile_context>
chip_gen: v5e
topology: v5e:2x2
jax: 0.10.0
libtpu: 0.0.40
codegen_flags: <defaults>
</compile_context>

<pallas_src>
import functools
import math

import jax
import jax.numpy as jnp
from jax.experimental import pallas as pl
from jax.experimental.pallas import tpu as pltpu


# ----------------------------------------------------------------------------
# Helpers
# ----------------------------------------------------------------------------

TM_MAX = 256       # max rows per matmul block (demo M is always <= 64)
TN = 640           # output-channel tile (all UNET widths are multiples of 320)
TK = 1280          # reduction tile


def _round_up(x, m):
    return ((x + m - 1) // m) * m


# ----------------------------------------------------------------------------
# Pallas kernels
# ----------------------------------------------------------------------------

def _matmul_kernel(a_ref, b_ref, bias_ref, o_ref, acc_ref):
    """bf16 x bf16 -> f32 accumulate, bias fused into the last-k epilogue."""
    @pl.when(pl.program_id(2) == 0)
    def _():
        acc_ref[...] = jnp.zeros_like(acc_ref)

    acc_ref[...] += jnp.dot(a_ref[...], b_ref[...],
                            preferred_element_type=jnp.float32)

    @pl.when(pl.program_id(2) == pl.num_programs(2) - 1)
    def _():
        o_ref[...] = acc_ref[...] + bias_ref[...]


@functools.lru_cache(maxsize=None)
def _matmul_fn(Mp, Kp, Np):
    tm = Mp if Mp <= TM_MAX else TM_MAX
    tn = TN
    tk = TK
    grid = (Mp // tm, Np // tn, Kp // tk)
    f = pl.pallas_call(
        _matmul_kernel,
        out_shape=jax.ShapeDtypeStruct((Mp, Np), jnp.float32),
        grid_spec=pltpu.PrefetchScalarGridSpec(
            num_scalar_prefetch=0,
            grid=grid,
            in_specs=[pl.BlockSpec((tm, tk), lambda i, j, k: (i, k)),
                      pl.BlockSpec((tk, tn), lambda i, j, k: (k, j)),
                      pl.BlockSpec((1, tn), lambda i, j, k: (0, j))],
            out_specs=pl.BlockSpec((tm, tn), lambda i, j, k: (i, j)),
            scratch_shapes=[pltpu.VMEM((tm, tn), jnp.float32)]),
        compiler_params=pltpu.CompilerParams(
            dimension_semantics=("parallel", "parallel", "arbitrary")),
    )
    return jax.jit(f)


def matmul_p(a, p):
    """a: (M, K) f32; p['w']: (Kp, Np) bf16 pre-padded; p['b']: (1, Np) f32."""
    M, K = a.shape
    Kp, Np = p['w'].shape
    if M <= 64:
        Mp = 64
    elif M <= TM_MAX:
        Mp = _round_up(M, 64)
    else:
        Mp = _round_up(M, TM_MAX)
    a_p = jnp.pad(a.astype(jnp.bfloat16), ((0, Mp - M), (0, Kp - K)))
    y = _matmul_fn(Mp, Kp, Np)(a_p, p['w'], p['b'])
    return y[:M, :p['n_out']]


def _rownorm_kernel(x_ref, g_ref, b_ref, o_ref, *, eps, act):
    """Per-row mean/var normalization (LayerNorm rows or GroupNorm groups) + opt. SiLU."""
    x = x_ref[...]
    mu = jnp.mean(x, axis=-1, keepdims=True)
    xc = x - mu
    var = jnp.mean(xc * xc, axis=-1, keepdims=True)
    y = xc * jax.lax.rsqrt(var + eps) * g_ref[...] + b_ref[...]
    if act:                                          # fused SiLU
        y = y * jax.nn.sigmoid(y)
    o_ref[...] = y


@functools.lru_cache(maxsize=None)
def _rownorm_fn(R, C, g_rows, eps, act):
    f = pl.pallas_call(
        functools.partial(_rownorm_kernel, eps=eps, act=act),
        out_shape=jax.ShapeDtypeStruct((R, C), jnp.float32))
    return jax.jit(f)


def rownorm(x2, g, b, eps, act):
    R, C = x2.shape
    return _rownorm_fn(R, C, g.shape[0], float(eps), bool(act))(x2, g, b)


def _silu_kernel(x_ref, o_ref):
    x = x_ref[...]
    o_ref[...] = x * jax.nn.sigmoid(x)


@functools.lru_cache(maxsize=None)
def _silu_fn(R, C):
    return jax.jit(pl.pallas_call(
        _silu_kernel, out_shape=jax.ShapeDtypeStruct((R, C), jnp.float32)))


def silu(x2):
    return _silu_fn(*x2.shape)(x2)


def _flash_attn_kernel(q_ref, k_ref, v_ref, o_ref, m_sc, l_sc, acc_sc, *, kv_len, tkv):
    """Online-softmax attention; q is pre-scaled; padded kv positions are masked."""
    ki = pl.program_id(1)

    @pl.when(ki == 0)
    def _():
        m_sc[...] = jnp.full_like(m_sc, -1e30)
        l_sc[...] = jnp.zeros_like(l_sc)
        acc_sc[...] = jnp.zeros_like(acc_sc)

    s = jnp.einsum('bqd,bkd->bqk', q_ref[...], k_ref[...],
                   preferred_element_type=jnp.float32)
    kv_pos = ki * tkv + jax.lax.broadcasted_iota(jnp.int32, s.shape, 2)
    s = jnp.where(kv_pos < kv_len, s, -1e30)

    m_prev = m_sc[...]
    m_new = jnp.maximum(m_prev, jnp.max(s, axis=-1, keepdims=True))
    alpha = jnp.exp(m_prev - m_new)
    p = jnp.exp(s - m_new)
    l_sc[...] = alpha * l_sc[...] + jnp.sum(p, axis=-1, keepdims=True)
    acc_sc[...] = alpha * acc_sc[...] + jnp.einsum(
        'bqk,bkd->bqd', p.astype(v_ref.dtype), v_ref[...],
        preferred_element_type=jnp.float32)
    m_sc[...] = m_new

    @pl.when(ki == pl.num_programs(1) - 1)
    def _():
        o_ref[...] = acc_sc[...] * pl.reciprocal(l_sc[...], approx=True)


@functools.lru_cache(maxsize=None)
def _attention_fn(BH, Sqp, Skp, Dp, tq, tkv, kv_len):
    grid = (Sqp // tq, Skp // tkv)
    f = pl.pallas_call(
        functools.partial(_flash_attn_kernel, kv_len=kv_len, tkv=tkv),
        out_shape=jax.ShapeDtypeStruct((BH, Sqp, Dp), jnp.float32),
        grid_spec=pltpu.PrefetchScalarGridSpec(
            num_scalar_prefetch=0,
            grid=grid,
            in_specs=[pl.BlockSpec((BH, tq, Dp), lambda qi, ki: (0, qi, 0)),
                      pl.BlockSpec((BH, tkv, Dp), lambda qi, ki: (0, ki, 0)),
                      pl.BlockSpec((BH, tkv, Dp), lambda qi, ki: (0, ki, 0))],
            out_specs=pl.BlockSpec((BH, tq, Dp), lambda qi, ki: (0, qi, 0)),
            scratch_shapes=[pltpu.VMEM((BH, tq, 1), jnp.float32),
                            pltpu.VMEM((BH, tq, 1), jnp.float32),
                            pltpu.VMEM((BH, tq, Dp), jnp.float32)]),
        compiler_params=pltpu.CompilerParams(
            dimension_semantics=("parallel", "arbitrary")),
    )
    return jax.jit(f)


def attention(q, k, v):
    """q: (BH, Sq, Dh), k/v: (BH, Sk, Dh) -> softmax(q k^T / sqrt(Dh)) v  (f32)."""
    BH, Sq, Dh = q.shape
    Sk = k.shape[1]
    scale = 1.0 / math.sqrt(Dh)
    Dp = _round_up(Dh, 128)
    Sqp = _round_up(Sq, 8) if Sq <= 128 else _round_up(Sq, 128)
    tq = Sqp if Sqp <= 128 else 128
    tkv = 128
    Skp = _round_up(Sk, tkv)
    qp = jnp.pad((q * scale).astype(jnp.bfloat16),
                 ((0, 0), (0, Sqp - Sq), (0, Dp - Dh)))
    kp = jnp.pad(k.astype(jnp.bfloat16), ((0, 0), (0, Skp - Sk), (0, Dp - Dh)))
    vp = jnp.pad(v.astype(jnp.bfloat16), ((0, 0), (0, Skp - Sk), (0, Dp - Dh)))
    o = _attention_fn(BH, Sqp, Skp, Dp, tq, tkv, Sk)(qp, kp, vp)
    return o[:, :Sq, :Dh]


# ----------------------------------------------------------------------------
# Layer wrappers (plain-JAX glue around the Pallas kernels)
# ----------------------------------------------------------------------------

def groupnorm(x, p, eps, act, groups=32):
    """x: (N, H, W, C) NHWC."""
    N, H, W, C = x.shape
    G = groups
    Cg = C // G
    HW = H * W
    # TODO(synk): the (HW, C) -> (G, HW*Cg) regroup could be fused into the kernel via a
    # one-hot group matmul to make this fully transpose-free.
    xr = x.reshape(N, HW, G, Cg).transpose(0, 2, 1, 3).reshape(N * G, HW * Cg)
    gmap = jnp.broadcast_to(p['gamma'].reshape(G, 1, Cg), (G, HW, Cg)).reshape(G, HW * Cg)
    bmap = jnp.broadcast_to(p['beta'].reshape(G, 1, Cg), (G, HW, Cg)).reshape(G, HW * Cg)
    if N > 1:
        gmap = jnp.tile(gmap, (N, 1))
        bmap = jnp.tile(bmap, (N, 1))
    y = rownorm(xr, gmap, bmap, eps, act)
    return y.reshape(N, G, HW, Cg).transpose(0, 2, 1, 3).reshape(N, H, W, C)


def layernorm(x2, p, eps=1e-5):
    return rownorm(x2, p['gamma'].reshape(1, -1), p['beta'].reshape(1, -1), eps, False)


def conv2d(x, p, stride=1):
    """x: (N, H, W, C) NHWC; weights pre-packed as (K, N) bf16."""
    N, H, W, C = x.shape
    if p['ksize'] == 1:
        y = matmul_p(x.reshape(N * H * W, C), p)
        return y.reshape(N, H, W, p['n_out'])
    # 3x3, padding=1 -> im2col + MXU matmul.
    # TODO(synk): the 9-tap gather could be folded into the matmul index_map (k-tap grid
    # axis) to avoid materializing the im2col matrix in HBM.
    xp = jnp.pad(x, ((0, 0), (1, 1), (1, 1), (0, 0)))
    Ho = (H + 2 - 3) // stride + 1
    Wo = (W + 2 - 3) // stride + 1
    cols = [xp[:, di:di + stride * (Ho - 1) + 1:stride,
               dj:dj + stride * (Wo - 1) + 1:stride, :]
            for di in range(3) for dj in range(3)]
    a = jnp.concatenate(cols, axis=-1).reshape(N * Ho * Wo, 9 * C)
    y = matmul_p(a, p)
    return y.reshape(N, Ho, Wo, p['n_out'])


def self_attention(x, p, n_heads):
    N, S, C = x.shape
    dh = C // n_heads
    qkv = matmul_p(x.reshape(N * S, C), p['in_proj'])
    q, k, v = jnp.split(qkv, 3, axis=-1)

    def heads(t, seq):
        return t.reshape(N, seq, n_heads, dh).transpose(0, 2, 1, 3).reshape(N * n_heads, seq, dh)

    o = attention(heads(q, S), heads(k, S), heads(v, S))
    o = o.reshape(N, n_heads, S, dh).transpose(0, 2, 1, 3).reshape(N * S, C)
    return matmul_p(o, p['out_proj']).reshape(N, S, C)


def cross_attention(x, ctx, p, n_heads):
    N, S, C = x.shape
    L = ctx.shape[1]
    dh = C // n_heads
    q = matmul_p(x.reshape(N * S, C), p['q_proj'])
    k = matmul_p(ctx.reshape(N * L, -1), p['k_proj'])
    v = matmul_p(ctx.reshape(N * L, -1), p['v_proj'])

    def heads(t, seq):
        return t.reshape(N, seq, n_heads, dh).transpose(0, 2, 1, 3).reshape(N * n_heads, seq, dh)

    o = attention(heads(q, S), heads(k, L), heads(v, L))
    o = o.reshape(N, n_heads, S, dh).transpose(0, 2, 1, 3).reshape(N * S, C)
    return matmul_p(o, p['out_proj']).reshape(N, S, C)


def residual_block(feature, time, p):
    residue = feature
    h = groupnorm(feature, p['gn_f'], eps=1e-5, act=True)          # GN + fused SiLU
    h = conv2d(h, p['conv_f'])
    t = silu(time)
    t = matmul_p(t, p['lin_t'])                                     # (1, cout)
    h = h + t.reshape(t.shape[0], 1, 1, -1)
    h = groupnorm(h, p['gn_m'], eps=1e-5, act=True)
    h = conv2d(h, p['conv_m'])
    res = residue if p['res'] is None else conv2d(residue, p['res'])
    return h + res


def attention_block(x, context, p):
    n_heads = p['n_heads']
    residue_long = x
    h = groupnorm(x, p['gn'], eps=1e-6, act=False)
    h = conv2d(h, p['conv_in'])
    N, H, W, C = h.shape
    S = H * W
    h = h.reshape(N, S, C)

    rs = h
    t = layernorm(h.reshape(N * S, C), p['ln1'])
    h = self_attention(t.reshape(N, S, C), p['attn1'], n_heads) + rs

    rs = h
    t = layernorm(h.reshape(N * S, C), p['ln2'])
    h = cross_attention(t.reshape(N, S, C), context, p['attn2'], n_heads) + rs

    rs = h
    t = layernorm(h.reshape(N * S, C), p['ln3'])
    g = matmul_p(t, p['geglu1'])                                    # (N*S, 8C)
    a, gate = jnp.split(g, 2, axis=-1)
    # TODO(synk): exact (erf) GELU gating stays in plain-JAX glue (could be fused into
    # the geglu1 matmul epilogue).
    t = a * jax.nn.gelu(gate, approximate=False)
    h = matmul_p(t, p['geglu2']).reshape(N, S, C) + rs

    h = h.reshape(N, H, W, C)
    return conv2d(h, p['conv_out']) + residue_long


def upsample(x, p):
    x = jnp.repeat(jnp.repeat(x, 2, axis=1), 2, axis=2)             # nearest 2x (glue)
    return conv2d(x, p['conv'])


# ----------------------------------------------------------------------------
# Deterministic parameter init (shapes from UNET.__init__), pre-packed for TPU
# ----------------------------------------------------------------------------

class _Init:
    def __init__(self, seed=0):
        self.key = jax.random.PRNGKey(seed)

    def take(self):
        self.key, k = jax.random.split(self.key)
        return k


_INIT = _Init(0)


def _normal(shape, fan_in):
    return jax.random.normal(_INIT.take(), shape, jnp.float32) * (1.0 / math.sqrt(fan_in))


def _pack_matmul_weight(w_kn, b_n, ksize=None):
    """w_kn: (K, N) f32, b_n: (N,) f32 -> padded bf16 weight + f32 bias, ready for MXU."""
    K, Nout = w_kn.shape
    Kp = _round_up(K, TK)
    Np = _round_up(Nout, TN)
    wp = jnp.pad(w_kn, ((0, Kp - K), (0, Np - Nout))).astype(jnp.bfloat16)
    bp = jnp.pad(b_n, (0, Np - Nout)).reshape(1, Np).astype(jnp.float32)
    out = {'w': wp, 'b': bp, 'n_out': Nout, 'k_in': K}
    if ksize is not None:
        out['ksize'] = ksize
    return out


def init_conv(cin, cout, k):
    w = _normal((cout, cin, k, k), cin * k * k)                 # OIHW
    b = jnp.zeros((cout,), jnp.float32)
    w_kn = w.transpose(2, 3, 1, 0).reshape(k * k * cin, cout)   # (kh,kw,cin) x cout
    return _pack_matmul_weight(w_kn, b, ksize=k)


def init_linear(cin, cout, bias=True):
    w = _normal((cout, cin), cin)
    b = jnp.zeros((cout,), jnp.float32)                         # zero bias if bias=False
    return _pack_matmul_weight(w.T, b)


def init_norm(c):
    return {'gamma': jnp.ones((c,), jnp.float32),
            'beta': jnp.zeros((c,), jnp.float32)}


def init_residual_block(cin, cout, n_time=1280):
    return {'gn_f': init_norm(cin),
            'conv_f': init_conv(cin, cout, 3),
            'lin_t': init_linear(n_time, cout),
            'gn_m': init_norm(cout),
            'conv_m': init_conv(cout, cout, 3),
            'res': None if cin == cout else init_conv(cin, cout, 1)}


def init_attention_block(n_heads, n_embed, d_context=768):
    ch = n_heads * n_embed
    return {'n_heads': n_heads,
            'gn': init_norm(ch),
            'conv_in': init_conv(ch, ch, 1),
            'ln1': init_norm(ch),
            'attn1': {'in_proj': init_linear(ch, 3 * ch, bias=False),
                      'out_proj': init_linear(ch, ch, bias=True)},
            'ln2': init_norm(ch),
            'attn2': {'q_proj': init_linear(ch, ch, bias=False),
                      'k_proj': init_linear(d_context, ch, bias=False),
                      'v_proj': init_linear(d_context, ch, bias=False),
                      'out_proj': init_linear(ch, ch, bias=True)},
            'ln3': init_norm(ch),
            'geglu1': init_linear(ch, 4 * ch * 2),
            'geglu2': init_linear(4 * ch, ch),
            'conv_out': init_conv(ch, ch, 1)}


def init_unet():
    def conv(cin, cout, stride=1):
        return ('conv', {'p': init_conv(cin, cout, 3), 'stride': stride})

    def res(cin, cout):
        return ('res', init_residual_block(cin, cout))

    def attn(h, e):
        return ('attn', init_attention_block(h, e))

    def ups(c):
        return ('up', {'conv': init_conv(c, c, 3)})

    encoders = [
        [conv(4, 320)],
        [res(320, 320), attn(8, 40)],
        [res(320, 320), attn(8, 40)],
        [conv(320, 320, stride=2)],
        [res(320, 640), attn(8, 80)],
        [res(640, 640), attn(8, 80)],
        [conv(640, 640, stride=2)],
        [res(640, 1280), attn(8, 160)],
        [res(1280, 1280), attn(8, 160)],
        [conv(1280, 1280, stride=2)],
        [res(1280, 1280)],
        [res(1280, 1280)],
    ]
    bottleneck = [res(1280, 1280), attn(8, 160), res(1280, 1280)]
    decoders = [
        [res(2560, 1280)],
        [res(2560, 1280)],
        [res(2560, 1280), ups(1280)],
        [res(2560, 1280), attn(8, 160)],
        [res(2560, 1280), attn(8, 160)],
        [res(1920, 1280), attn(8, 160), ups(1280)],
        [res(1920, 640), attn(8, 80)],
        [res(1280, 640), attn(8, 80)],
        [res(960, 640), attn(8, 80), ups(640)],
        [res(960, 320), attn(8, 40)],
        [res(640, 320), attn(8, 40)],
        [res(640, 320), attn(8, 40)],
    ]
    return {'encoders': encoders, 'bottleneck': bottleneck, 'decoders': decoders}


# ----------------------------------------------------------------------------
# UNET forward (NCHW in/out to mirror the PyTorch interface; NHWC internally)
# ----------------------------------------------------------------------------

def run_switch(layers, x, context, time):
    for kind, p in layers:
        if kind == 'conv':
            x = conv2d(x, p['p'], stride=p['stride'])
        elif kind == 'res':
            x = residual_block(x, time, p)
        elif kind == 'attn':
            x = attention_block(x, context, p)
        elif kind == 'up':
            x = upsample(x, p)
    return x


def unet_forward(params, x_nchw, context, time):
    x = x_nchw.transpose(0, 2, 3, 1)                 # NCHW -> NHWC once
    skips = []
    for layers in params['encoders']:
        x = run_switch(layers, x, context, time)
        skips.append(x)
    x = run_switch(params['bottleneck'], x, context, time)
    for layers in params['decoders']:
        x = jnp.concatenate([x, skips.pop()], axis=-1)   # channel concat (NHWC)
        x = run_switch(layers, x, context, time)
    return x.transpose(0, 3, 1, 2)                   # back to NCHW


if __name__ == "__main__":
    key = jax.random.PRNGKey(0)
    kx, kc, kt = jax.random.split(key, 3)
    # Small, module-consistent shapes: latent (1, 4, 8, 8), context (1, 8, 768), time (1, 1280).
    x = jax.random.normal(kx, (1, 4, 8, 8), jnp.float32)
    context = jax.random.normal(kc, (1, 8, 768), jnp.float32)
    time = jax.random.normal(kt, (1, 1280), jnp.float32)

    params = init_unet()
    out = unet_forward(params, x, context, time)
    out = jax.block_until_ready(out)
    assert out.shape == (1, 320, 8, 8), out.shape
    assert bool(jnp.all(jnp.isfinite(out)))
    print("KERNEL_OK")
</pallas_src>

<mosaic_0001>
module attributes {stable_mosaic.version = 11 : i64} {
  func.func @_matmul_kernel(%arg0: i32, %arg1: i32, %arg2: i32, %arg3: memref<64x1280xbf16, #tpu.memory_space<vmem>>, %arg4: memref<1280x640xbf16, #tpu.memory_space<vmem>>, %arg5: memref<1x640xf32, #tpu.memory_space<vmem>>, %arg6: memref<64x640xf32, #tpu.memory_space<vmem>>, %arg7: memref<64x640xf32, #tpu.memory_space<vmem>>) attributes {dimension_semantics = [#tpu.dimension_semantics<parallel>, #tpu.dimension_semantics<parallel>, #tpu.dimension_semantics<arbitrary>], iteration_bounds = array<i64: 1, 1, 1>, scalar_prefetch = 0 : i64, scratch_operands = 1 : i64, tpu.core_type = #tpu.core_type<tc>, window_params = [{transform_indices = @transform_0, window_bounds = array<i64: 64, 1280>}, {transform_indices = @transform_1, window_bounds = array<i64: 1280, 640>}, {transform_indices = @transform_2, window_bounds = array<i64: 1, 640>}, {transform_indices = @transform_3, window_bounds = array<i64: 64, 640>}]} {
    %c0_i32 = arith.constant 0 : i32
    %0 = arith.cmpi eq, %arg2, %c0_i32 : i32
    %1 = arith.extui %0 : i1 to i32
    %c0_i32_0 = arith.constant 0 : i32
    %2 = arith.cmpi ne, %1, %c0_i32_0 : i32
    scf.if %2 {
      %cst_10 = arith.constant 0.000000e+00 : f32
      %12 = vector.broadcast %cst_10 : f32 to vector<64x640xf32>
      %c0_11 = arith.constant 0 : index
      %c0_12 = arith.constant 0 : index
      %13 = vector.load %arg7[%c0_11, %c0_12] : memref<64x640xf32, #tpu.memory_space<vmem>>, vector<64x640xf32>
      tpu.vector_store %arg7[%c0_11, %c0_12], %12 {strides = array<i32>} : memref<64x640xf32, #tpu.memory_space<vmem>>, vector<64x640xf32>,
    } else {
    }
    %c0 = arith.constant 0 : index
    %c0_1 = arith.constant 0 : index
    %3 = vector.load %arg7[%c0, %c0_1] : memref<64x640xf32, #tpu.memory_space<vmem>>, vector<64x640xf32>
    %c0_2 = arith.constant 0 : index
    %c0_3 = arith.constant 0 : index
    %4 = vector.load %arg3[%c0_2, %c0_3] : memref<64x1280xbf16, #tpu.memory_space<vmem>>, vector<64x1280xbf16>
    %c0_4 = arith.constant 0 : index
    %c0_5 = arith.constant 0 : index
    %5 = vector.load %arg4[%c0_4, %c0_5] : memref<1280x640xbf16, #tpu.memory_space<vmem>>, vector<1280x640xbf16>
    %cst = arith.constant dense<0.000000e+00> : vector<64x640xf32>
    %6 = tpu.matmul %4, %5, %cst {dimension_numbers = #tpu.dot_dimension_numbers<[1], [0], [0], [1], [0, 0, 1, 1], [], []>} : vector<64x1280xbf16>, vector<1280x640xbf16>, vector<64x640xf32> -> vector<64x640xf32>
    %7 = arith.addf %3, %6 : vector<64x640xf32>
    %c0_6 = arith.constant 0 : index
    %c0_7 = arith.constant 0 : index
    %8 = vector.load %arg7[%c0_6, %c0_7] : memref<64x640xf32, #tpu.memory_space<vmem>>, vector<64x640xf32>
    tpu.vector_store %arg7[%c0_6, %c0_7], %7 {strides = array<i32>} : memref<64x640xf32, #tpu.memory_space<vmem>>, vector<64x640xf32>,
    %c0_i32_8 = arith.constant 0 : i32
    %9 = arith.cmpi eq, %arg2, %c0_i32_8 : i32
    %10 = arith.extui %9 : i1 to i32
    %c0_i32_9 = arith.constant 0 : i32
    %11 = arith.cmpi ne, %10, %c0_i32_9 : i32
    scf.if %11 {
      %c0_10 = arith.constant 0 : index
      %c0_11 = arith.constant 0 : index
      %12 = vector.load %arg7[%c0_10, %c0_11] : memref<64x640xf32, #tpu.memory_space<vmem>>, vector<64x640xf32>
      %c0_12 = arith.constant 0 : index
      %c0_13 = arith.constant 0 : index
      %13 = vector.load %arg5[%c0_12, %c0_13] : memref<1x640xf32, #tpu.memory_space<vmem>>, vector<1x640xf32>
      %14 = vector.broadcast %13 : vector<1x640xf32> to vector<64x640xf32>
      %15 = arith.addf %12, %14 : vector<64x640xf32>
      %c0_14 = arith.constant 0 : index
      %c0_15 = arith.constant 0 : index
      %16 = vector.load %arg6[%c0_14, %c0_15] : memref<64x640xf32, #tpu.memory_space<vmem>>, vector<64x640xf32>
      tpu.vector_store %arg6[%c0_14, %c0_15], %15 {strides = array<i32>} : memref<64x640xf32, #tpu.memory_space<vmem>>, vector<64x640xf32>,
    } else {
    }
    return
  }
  func.func @transform_0(%arg0: i32, %arg1: i32, %arg2: i32) -> (i32, i32) {
    %c0_i32 = arith.constant 0 : i32
    return %arg0, %arg2 : i32, i32
  }
  func.func @transform_1(%arg0: i32, %arg1: i32, %arg2: i32) -> (i32, i32) {
    %c0_i32 = arith.constant 0 : i32
    return %arg2, %arg1 : i32, i32
  }
  func.func @transform_2(%arg0: i32, %arg1: i32, %arg2: i32) -> (i32, i32) {
    %c0_i32 = arith.constant 0 : i32
    %c0_i32_0 = arith.constant 0 : i32
    return %c0_i32, %arg1 : i32, i32
  }
  func.func @transform_3(%arg0: i32, %arg1: i32, %arg2: i32) -> (i32, i32) {
    %c0_i32 = arith.constant 0 : i32
    return %arg0, %arg1 : i32, i32
  }
}

</mosaic_0001>

<llo_original>
// kernel: tpu_custom_call.1
$region0: #{tpu_custom_call.1}
  #allocation0 [shape = 'u32[]', space=smem, size = 0x4, offset = 0x4, fixed_abs, tag = 'smem constant byte address 0x4 - core index']
  #allocation1 [shape = 'u32[72,128]{1,0:T(1,128)}', space=vmem, size = 0x9000, scoped, tag = 'internal scratch']
  #allocation2 [shape = 'f32[64,640]{1,0:T(8,128)}', space=vmem, size = 0x28000, scoped, tag = 'scratch operand']
  %s0 = inlined_call_operand.hbm [shape: bf16[64,1280], index: 0, kind: input, shape index: {}]
  %s1 = inlined_call_operand.hbm [shape: bf16[1280,640], index: 1, kind: input, shape index: {}]
  %s2 = inlined_call_operand.hbm [shape: f32[1,640], index: 2, kind: input, shape index: {}]
  %s3 = inlined_call_operand.hbm [shape: f32[64,640], index: 3, kind: output, shape index: {}]
  %s4 = sld [smem:[#allocation0]]
  $region42: #{tpu_custom_call.1} parent=0
    _
  %s6 = ssub.s32 1, %s4
  %s7 = scalar_select 0, %s6, %s4
  $region1: #{tpu_custom_call.1} parent=0
    #allocation3 [shape = 'u8[163840]{0}', space=vmem, size = 0x28000, scoped, tag = 'input window, operand 0, single buffered']
    #allocation4 [shape = 's32[1]{0}', space=sflag, size = 0x4, scoped, tag = 'scoped memory for tpu_custom_call.1']
    #allocation5 [shape = 's32[1]{0}', space=sflag, size = 0x4, scoped, tag = 'scoped memory for tpu_custom_call.1']
    #allocation6 [shape = 'u8[1638400]{0}', space=vmem, size = 0x190000, scoped, tag = 'input window, operand 1, single buffered']
    #allocation7 [shape = 's32[1]{0}', space=sflag, size = 0x4, scoped, tag = 'scoped memory for tpu_custom_call.1']
    #allocation8 [shape = 'u8[2560]{0}', space=vmem, size = 0xc00, scoped, tag = 'input window, operand 2, single buffered']
    #allocation9 [shape = 'u8[163840]{0}', space=vmem, size = 0x28000, scoped, tag = 'output window, operand 0, single buffered']
    %8 = vsyncpa [#allocation4], 0
    %9 = vsyncpa [#allocation7], 0
    %10 = vsyncpa [#allocation5], 0
    // Predicated region
    $region2: #{tpu_custom_call.1} parent=1 // pred_check
      _
    $region3: #{tpu_custom_call.1} parent=1 // pred_check_branch
      %12 = sbr.rel (0) target = $region5
    $region4: #{tpu_custom_call.1} parent=1 // pred_region
      %14 = vsyncadd [#allocation4], 0
      %s15 = sshll.u32 %s0, 4
      %s16 = int_to_ptr.hbm [resolvable:$true] %s15
      %s17 = sshll.u32 [#allocation3], 4
      %s18 = int_to_ptr.vmem [resolvable:$true] %s17
      %23 = dma.hbm_to_vmem [thread:$0]  %s16, 5120, %s18, [#allocation4], 640, 640, 40
    $region5: #{tpu_custom_call.1} parent=1 // pred_fallthru
      _
    // Predicated region
    $region6: #{tpu_custom_call.1} parent=1 // pred_check
      _
    $region7: #{tpu_custom_call.1} parent=1 // pred_check_branch
      %25 = sbr.rel (0) target = $region9
    $region8: #{tpu_custom_call.1} parent=1 // pred_region
      %27 = vsyncadd [#allocation7], 0
      %s28 = sshll.u32 %s1, 4
      %s29 = int_to_ptr.hbm [resolvable:$true] %s28
      %s30 = sshll.u32 [#allocation6], 4
      %s31 = int_to_ptr.vmem [resolvable:$true] %s30
      %36 = dma.hbm_to_vmem [thread:$0]  %s29, 51200, %s31, [#allocation7], 320, 320, 20
    $region9: #{tpu_custom_call.1} parent=1 // pred_fallthru
      _
    // Predicated region
    $region10: #{tpu_custom_call.1} parent=1 // pred_check
      _
    $region11: #{tpu_custom_call.1} parent=1 // pred_check_branch
      %38 = sbr.rel (0) target = $region13
    $region12: #{tpu_custom_call.1} parent=1 // pred_region
      %40 = vsyncadd [#allocation7], 0
      %s42 = sshll.u32 %s2, 4
      %s43 = int_to_ptr.hbm [resolvable:$true] %s42
      %s44 = sshll.u32 [#allocation8], 4
      %s45 = int_to_ptr.vmem [resolvable:$true] %s44
      %47 = dma.hbm_to_vmem [thread:$0]  %s43, 80, %s45, [#allocation7]
    $region13: #{tpu_custom_call.1} parent=1 // pred_fallthru
      _
    // Predicated region
    $region14: #{tpu_custom_call.1} parent=1 // pred_check
      _
    $region15: #{tpu_custom_call.1} parent=1 // pred_check_branch
      %49 = sbr.rel (0) target = $region17
    $region16: #{tpu_custom_call.1} parent=1 // pred_region
      %51 = dma.done [#allocation4], 5120
    $region17: #{tpu_custom_call.1} parent=1 // pred_fallthru
      _
    // Predicated region
    $region18: #{tpu_custom_call.1} parent=1 // pred_check
      _
    $region19: #{tpu_custom_call.1} parent=1 // pred_check_branch
      %53 = sbr.rel (0) target = $region21
    $region20: #{tpu_custom_call.1} parent=1 // pred_region
      %55 = dma.done [#allocation7], 51200
    $region21: #{tpu_custom_call.1} parent=1 // pred_fallthru
      _
    // Predicated region
    $region22: #{tpu_custom_call.1} parent=1 // pred_check
      _
    $region23: #{tpu_custom_call.1} parent=1 // pred_check_branch
      %57 = sbr.rel (0) target = $region25
    $region24: #{tpu_custom_call.1} parent=1 // pred_region
      %59 = dma.done [#allocation7], 80
    $region25: #{tpu_custom_call.1} parent=1 // pred_fallthru
      _
    %p60 = scmp.eq.s32.totalorder 0, 0
    // Predicated region
    $region26: #{tpu_custom_call.1} parent=1 // pred_check
      %p61 = pneg %p60
    $region27: #{tpu_custom_call.1} parent=1 // pred_check_branch
      %63 = sbr.rel (%p61) target = $region29
    $region28: #{tpu_custom_call.1} parent=1 // pred_region
      %64 = vst [vmem:[#allocation2] sm:$0xff] 0.0
      %65 = vst [vmem:[#allocation2 + $0x8] sm:$0xff] 0.0
      %66 = vst [vmem:[#allocation2 + $0x10] sm:$0xff] 0.0
      %67 = vst [vmem:[#allocation2 + $0x18] sm:$0xff] 0.0
      %68 = vst [vmem:[#allocation2 + $0x20] sm:$0xff] 0.0
      %69 = vst [vmem:[#allocation2 + $0x28] sm:$0xff] 0.0
      %70 = vst [vmem:[#allocation2 + $0x30] sm:$0xff] 0.0
      %71 = vst [vmem:[#allocation2 + $0x38] sm:$0xff] 0.0
      %72 = vst [vmem:[#allocation2 + $0x40] sm:$0xff] 0.0
      %73 = vst [vmem:[#allocation2 + $0x48] sm:$0xff] 0.0
      %74 = vst [vmem:[#allocation2 + $0x50] sm:$0xff] 0.0
      %75 = vst [vmem:[#allocation2 + $0x58] sm:$0xff] 0.0
      %76 = vst [vmem:[#allocation2 + $0x60] sm:$0xff] 0.0
      %77 = vst [vmem:[#allocation2 + $0x68] sm:$0xff] 0.0
      %78 = vst [vmem:[#allocation2 + $0x70] sm:$0xff] 0.0
      %79 = vst [vmem:[#allocation2 + $0x78] sm:$0xff] 0.0
      %80 = vst [vmem:[#allocation2 + $0x80] sm:$0xff] 0.0
      %81 = vst [vmem:[#allocation2 + $0x88] sm:$0xff] 0.0
      %82 = vst [vmem:[#allocation2 + $0x90] sm:$0xff] 0.0
      %83 = vst [vmem:[#allocation2 + $0x98] sm:$0xff] 0.0
      %84 = vst [vmem:[#allocation2 + $0xa0] sm:$0xff] 0.0
      %85 = vst [vmem:[#allocation2 + $0xa8] sm:$0xff] 0.0
      %86 = vst [vmem:[#allocation2 + $0xb0] sm:$0xff] 0.0
      %87 = vst [vmem:[#allocation2 + $0xb8] sm:$0xff] 0.0
      %88 = vst [vmem:[#allocation2 + $0xc0] sm:$0xff] 0.0
      %89 = vst [vmem:[#allocation2 + $0xc8] sm:$0xff] 0.0
      %90 = vst [vmem:[#allocation2 + $0xd0] sm:$0xff] 0.0
      %91 = vst [vmem:[#allocation2 + $0xd8] sm:$0xff] 0.0
      %92 = vst [vmem:[#allocation2 + $0xe0] sm:$0xff] 0.0
      %93 = vst [vmem:[#allocation2 + $0xe8] sm:$0xff] 0.0
      %94 = vst [vmem:[#allocation2 + $0xf0] sm:$0xff] 0.0
      %95 = vst [vmem:[#allocation2 + $0xf8] sm:$0xff] 0.0
      %96 = vst [vmem:[#allocation2 + $0x100] sm:$0xff] 0.0
      %97 = vst [vmem:[#allocation2 + $0x108] sm:$0xff] 0.0
      %98 = vst [vmem:[#allocation2 + $0x110] sm:$0xff] 0.0
      %99 = vst [vmem:[#allocation2 + $0x118] sm:$0xff] 0.0
      %100 = vst [vmem:[#allocation2 + $0x120] sm:$0xff] 0.0
      %101 = vst [vmem:[#allocation2 + $0x128] sm:$0xff] 0.0
      %102 = vst [vmem:[#allocation2 + $0x130] sm:$0xff] 0.0
      %103 = vst [vmem:[#allocation2 + $0x138] sm:$0xff] 0.0
    $region29: #{tpu_custom_call.1} parent=1 // pred_fallthru
      _
    %v104 = vld [vmem:[#allocation2] sm:$0xff]
    %v105 = vld [vmem:[#allocation2 + $0x8] sm:$0xff]
    %v106 = vld [vmem:[#allocation2 + $0x10] sm:$0xff]
    %v107 = vld [vmem:[#allocation2 + $0x18] sm:$0xff]
    %v108 = vld [vmem:[#allocation2 + $0x20] sm:$0xff]
    %v109 = vld [vmem:[#allocation2 + $0x28] sm:$0xff]
    %v110 = vld [vmem:[#allocation2 + $0x30] sm:$0xff]
    %v111 = vld [vmem:[#allocation2 + $0x38] sm:$0xff]
    %v112 = vld [vmem:[#allocation2 + $0x40] sm:$0xff]
    %v113 = vld [vmem:[#allocation2 + $0x48] sm:$0xff]
    %v114 = vld [vmem:[#allocation2 + $0x50] sm:$0xff]
    %v115 = vld [vmem:[#allocation2 + $0x58] sm:$0xff]
    %v116 = vld [vmem:[#allocation2 + $0x60] sm:$0xff]
    %v117 = vld [vmem:[#allocation2 + $0x68] sm:$0xff]
    %v118 = vld [vmem:[#allocation2 + $0x70] sm:$0xff]
    %v119 = vld [vmem:[#allocation2 + $0x78] sm:$0xff]
    %v120 = vld [vmem:[#allocation2 + $0x80] sm:$0xff]
    %v121 = vld [vmem:[#allocation2 + $0x88] sm:$0xff]
    %v122 = vld [vmem:[#allocation2 + $0x90] sm:$0xff]
    %v123 = vld [vmem:[#allocation2 + $0x98] sm:$0xff]
    %v124 = vld [vmem:[#allocation2 + $0xa0] sm:$0xff]
    %v125 = vld [vmem:[#allocation2 + $0xa8] sm:$0xff]
    %v126 = vld [vmem:[#allocation2 + $0xb0] sm:$0xff]
    %v127 = vld [vmem:[#allocation2 + $0xb8] sm:$0xff]
    %v128 = vld [vmem:[#allocation2 + $0xc0] sm:$0xff]
    %v129 = vld [vmem:[#allocation2 + $0xc8] sm:$0xff]
    %v130 = vld [vmem:[#allocation2 + $0xd0] sm:$0xff]
    %v131 = vld [vmem:[#allocation2 + $0xd8] sm:$0xff]
    %v132 = vld [vmem:[#allocation2 + $0xe0] sm:$0xff]
    %v133 = vld [vmem:[#allocation2 + $0xe8] sm:$0xff]
    %v134 = vld [vmem:[#allocation2 + $0xf0] sm:$0xff]
    %v135 = vld [vmem:[#allocation2 + $0xf8] sm:$0xff]
    %v136 = vld [vmem:[#allocation2 + $0x100] sm:$0xff]
    %v137 = vld [vmem:[#allocation2 + $0x108] sm:$0xff]
    %v138 = vld [vmem:[#allocation2 + $0x110] sm:$0xff]
    %v139 = vld [vmem:[#allocation2 + $0x118] sm:$0xff]
    %v140 = vld [vmem:[#allocation2 + $0x120] sm:$0xff]
    %v141 = vld [vmem:[#allocation2 + $0x128] sm:$0xff]
    %v142 = vld [vmem:[#allocation2 + $0x130] sm:$0xff]
    %v143 = vld [vmem:[#allocation2 + $0x138] sm:$0xff]
    %v144 = vld [vmem:[#allocation3] sm:$0xff]
    %v145 = vld [vmem:[#allocation3 + $0x8] sm:$0xff]
    %v146 = vld [vmem:[#allocation3 + $0x10] sm:$0xff]
    %v147 = vld [vmem:[#allocation3 + $0x18] sm:$0xff]
    %v148 = vld [vmem:[#allocation3 + $0x20] sm:$0xff]
    %v149 = vld [vmem:[#allocation3 + $0x28] sm:$0xff]
    %v150 = vld [vmem:[#allocation3 + $0x30] sm:$0xff]
    %v151 = vld [vmem:[#allocation3 + $0x38] sm:$0xff]
    %v152 = vld [vmem:[#allocation3 + $0x40] sm:$0xff]
    %v153 = vld [vmem:[#allocation3 + $0x48] sm:$0xff]
    %v154 = vld [vmem:[#allocation3 + $0x50] sm:$0xff]
    %v155 = vld [vmem:[#allocation3 + $0x58] sm:$0xff]
    %v156 = vld [vmem:[#allocation3 + $0x60] sm:$0xff]
    %v157 = vld [vmem:[#allocation3 + $0x68] sm:$0xff]
    %v158 = vld [vmem:[#allocation3 + $0x70] sm:$0xff]
    %v159 = vld [vmem:[#allocation3 + $0x78] sm:$0xff]
    %v160 = vld [vmem:[#allocation3 + $0x80] sm:$0xff]
    %v161 = vld [vmem:[#allocation3 + $0x88] sm:$0xff]
    %v162 = vld [vmem:[#allocation3 + $0x90] sm:$0xff]
    %v163 = vld [vmem:[#allocation3 + $0x98] sm:$0xff]
    %v164 = vld [vmem:[#allocation3 + $0xa0] sm:$0xff]
    %v165 = vld [vmem:[#allocation3 + $0xa8] sm:$0xff]
    %v166 = vld [vmem:[#allocation3 + $0xb0] sm:$0xff]
    %v167 = vld [vmem:[#allocation3 + $0xb8] sm:$0xff]
    %v168 = vld [vmem:[#allocation3 + $0xc0] sm:$0xff]
    %v169 = vld [vmem:[#allocation3 + $0xc8] sm:$0xff]
    %v170 = vld [vmem:[#allocation3 + $0xd0] sm:$0xff]
    %v171 = vld [vmem:[#allocation3 + $0xd8] sm:$0xff]
    %v172 = vld [vmem:[#allocation3 + $0xe0] sm:$0xff]
    %v173 = vld [vmem:[#allocation3 + $0xe8] sm:$0xff]
    %v174 = vld [vmem:[#allocation3 + $0xf0] sm:$0xff]
    %v175 = vld [vmem:[#allocation3 + $0xf8] sm:$0xff]
    %v176 = vld [vmem:[#allocation3 + $0x100] sm:$0xff]
    %v177 = vld [vmem:[#allocation3 + $0x108] sm:$0xff]
    %v178 = vld [vmem:[#allocation3 + $0x110] sm:$0xff]
    %v179 = vld [vmem:[#allocation3 + $0x118] sm:$0xff]
    %v180 = vld [vmem:[#allocation3 + $0x120] sm:$0xff]
    %v181 = vld [vmem:[#allocation3 + $0x128] sm:$0xff]
    %v182 = vld [vmem:[#allocation3 + $0x130] sm:$0xff]
    %v183 = vld [vmem:[#allocation3 + $0x138] sm:$0xff]
    %v184 = vld [vmem:[#allocation6] sm:$0xff]
    %v185 = vld [vmem:[#allocation6 + $0x8] sm:$0xff]
    %v186 = vld [vmem:[#allocation6 + $0x10] sm:$0xf]
    %v187 = vld [vmem:[#allocation6 + $0x14] sm:$0xff]
    %v188 = vld [vmem:[#allocation6 + $0x1c] sm:$0xff]
    %v189 = vld [vmem:[#allocation6 + $0x24] sm:$0xf]
    %v190 = vld [vmem:[#allocation6 + $0x28] sm:$0xff]
    %v191 = vld [vmem:[#allocation6 + $0x30] sm:$0xff]
    %v192 = vld [vmem:[#allocation6 + $0x38] sm:$0xf]
    %v193 = vld [vmem:[#allocation6 + $0x3c] sm:$0xff]
    %v194 = vld [vmem:[#allocation6 + $0x44] sm:$0xff]
    %v195 = vld [vmem:[#allocation6 + $0x4c] sm:$0xf]
    %v196 = vld [vmem:[#allocation6 + $0x50] sm:$0xff]
    %v197 = vld [vmem:[#allocation6 + $0x58] sm:$0xff]
    %v198 = vld [vmem:[#allocation6 + $0x60] sm:$0xf]
    %v199 = vld [vmem:[#allocation6 + $0x64] sm:$0xff]
    %v200 = vld [vmem:[#allocation6 + $0x6c] sm:$0xff]
    %v201 = vld [vmem:[#allocation6 + $0x74] sm:$0xf]
    %v202 = vld [vmem:[#allocation6 + $0x78] sm:$0xff]
    %v203 = vld [vmem:[#allocation6 + $0x80] sm:$0xff]
    %v204 = vld [vmem:[#allocation6 + $0x88] sm:$0xf]
    %v205 = vld [vmem:[#allocation6 + $0x8c] sm:$0xff]
    %v206 = vld [vmem:[#allocation6 + $0x94] sm:$0xff]
    %v207 = vld [vmem:[#allocation6 + $0x9c] sm:$0xf]
    %v208 = vld [vmem:[#allocation6 + $0xa0] sm:$0xff]
    %v209 = vld [vmem:[#allocation6 + $0xa8] sm:$0xff]
    %v210 = vld [vmem:[#allocation6 + $0xb0] sm:$0xf]
    %v211 = vld [vmem:[#allocation6 + $0xb4] sm:$0xff]
    %v212 = vld [vmem:[#allocation6 + $0xbc] sm:$0xff]
    %v213 = vld [vmem:[#allocation6 + $0xc4] sm:$0xf]
    %v214 = vld [vmem:[#allocation6 + $0xc8] sm:$0xff]
    %v215 = vld [vmem:[#allocation6 + $0xd0] sm:$0xff]
    %v216 = vld [vmem:[#allocation6 + $0xd8] sm:$0xf]
    %v217 = vld [vmem:[#allocation6 + $0xdc] sm:$0xff]
    %v218 = vld [vmem:[#allocation6 + $0xe4] sm:$0xff]
    %v219 = vld [vmem:[#allocation6 + $0xec] sm:$0xf]
    %v220 = vld [vmem:[#allocation6 + $0xf0] sm:$0xff]
    %v221 = vld [vmem:[#allocation6 + $0xf8] sm:$0xff]
    %v222 = vld [vmem:[#allocation6 + $0x100] sm:$0xf]
    %v223 = vld [vmem:[#allocation6 + $0x104] sm:$0xff]
    %v224 = vld [vmem:[#allocation6 + $0x10c] sm:$0xff]
    %v225 = vld [vmem:[#allocation6 + $0x114] sm:$0xf]
    %v226 = vld [vmem:[#allocation6 + $0x118] sm:$0xff]
    %v227 = vld [vmem:[#allocation6 + $0x120] sm:$0xff]
    %v228 = vld [vmem:[#allocation6 + $0x128] sm:$0xf]
    %v229 = vld [vmem:[#allocation6 + $0x12c] sm:$0xff]
    %v230 = vld [vmem:[#allocation6 + $0x134] sm:$0xff]
    %v231 = vld [vmem:[#allocation6 + $0x13c] sm:$0xf]
    %v232 = vld [vmem:[#allocation6 + $0x140] sm:$0xff]
    %v233 = vld [vmem:[#allocation6 + $0x148] sm:$0xff]
    %v234 = vld [vmem:[#allocation6 + $0x150] sm:$0xf]
    %v235 = vld [vmem:[#allocation6 + $0x154] sm:$0xff]
    %v236 = vld [vmem:[#allocation6 + $0x15c] sm:$0xff]
    %v237 = vld [vmem:[#allocation6 + $0x164] sm:$0xf]
    %v238 = vld [vmem:[#allocation6 + $0x168] sm:$0xff]
    %v239 = vld [vmem:[#allocation6 + $0x170] sm:$0xff]
    %v240 = vld [vmem:[#allocation6 + $0x178] sm:$0xf]
    %v241 = vld [vmem:[#allocation6 + $0x17c] sm:$0xff]
    %v242 = vld [vmem:[#allocation6 + $0x184] sm:$0xff]
    %v243 = vld [vmem:[#allocation6 + $0x18c] sm:$0xf]
    %v244 = vld [vmem:[#allocation6 + $0x190] sm:$0xff]
    %v245 = vld [vmem:[#allocation6 + $0x198] sm:$0xff]
    %v246 = vld [vmem:[#allocation6 + $0x1a0] sm:$0xf]
    %v247 = vld [vmem:[#allocation6 + $0x1a4] sm:$0xff]
    %v248 = vld [vmem:[#allocation6 + $0x1ac] sm:$0xff]
    %v249 = vld [vmem:[#allocation6 + $0x1b4] sm:$0xf]
    %v250 = vld [vmem:[#allocation6 + $0x1b8] sm:$0xff]
    %v251 = vld [vmem:[#allocation6 + $0x1c0] sm:$0xff]
    %v252 = vld [vmem:[#allocation6 + $0x1c8] sm:$0xf]
    %v253 = vld [vmem:[#allocation6 + $0x1cc] sm:$0xff]
    %v254 = vld [vmem:[#allocation6 + $0x1d4] sm:$0xff]
    %v255 = vld [vmem:[#allocation6 + $0x1dc] sm:$0xf]
    %v256 = vld [vmem:[#allocation6 + $0x1e0] sm:$0xff]
    %v257 = vld [vmem:[#allocation6 + $0x1e8] sm:$0xff]
    %v258 = vld [vmem:[#allocation6 + $0x1f0] sm:$0xf]
    %v259 = vld [vmem:[#allocation6 + $0x1f4] sm:$0xff]
    %v260 = vld [vmem:[#allocation6 + $0x1fc] sm:$0xff]
    %v261 = vld [vmem:[#allocation6 + $0x204] sm:$0xf]
    %v262 = vld [vmem:[#allocation6 + $0x208] sm:$0xff]
    %v263 = vld [vmem:[#allocation6 + $0x210] sm:$0xff]
    %v264 = vld [vmem:[#allocation6 + $0x218] sm:$0xf]
    %v265 = vld [vmem:[#allocation6 + $0x21c] sm:$0xff]
    %v266 = vld [vmem:[#allocation6 + $0x224] sm:$0xff]
    %v267 = vld [vmem:[#allocation6 + $0x22c] sm:$0xf]
    %v268 = vld [vmem:[#allocation6 + $0x230] sm:$0xff]
    %v269 = vld [vmem:[#allocation6 + $0x238] sm:$0xff]
    %v270 = vld [vmem:[#allocation6 + $0x240] sm:$0xf]
    %v271 = vld [vmem:[#allocation6 + $0x244] sm:$0xff]
    %v272 = vld [vmem:[#allocation6 + $0x24c] sm:$0xff]
    %v273 = vld [vmem:[#allocation6 + $0x254] sm:$0xf]
    %v274 = vld [vmem:[#allocation6 + $0x258] sm:$0xff]
    %v275 = vld [vmem:[#allocation6 + $0x260] sm:$0xff]
    %v276 = vld [vmem:[#allocation6 + $0x268] sm:$0xf]
    %v277 = vld [vmem:[#allocation6 + $0x26c] sm:$0xff]
    %v278 = vld [vmem:[#allocation6 + $0x274] sm:$0xff]
    %v279 = vld [vmem:[#allocation6 + $0x27c] sm:$0xf]
    %v280 = vld [vmem:[#allocation6 + $0x280] sm:$0xff]
    %v281 = vld [vmem:[#allocation6 + $0x288] sm:$0xff]
    %v282 = vld [vmem:[#allocation6 + $0x290] sm:$0xf]
    %v283 = vld [vmem:[#allocation6 + $0x294] sm:$0xff]
    %v284 = vld [vmem:[#allocation6 + $0x29c] sm:$0xff]
    %v285 = vld [vmem:[#allocation6 + $0x2a4] sm:$0xf]
    %v286 = vld [vmem:[#allocation6 + $0x2a8] sm:$0xff]
    %v287 = vld [vmem:[#allocation6 + $0x2b0] sm:$0xff]
    %v288 = vld [vmem:[#allocation6 + $0x2b8] sm:$0xf]
    %v289 = vld [vmem:[#allocation6 + $0x2bc] sm:$0xff]
    %v290 = vld [vmem:[#allocation6 + $0x2c4] sm:$0xff]
    %v291 = vld [vmem:[#allocation6 + $0x2cc] sm:$0xf]
    %v292 = vld [vmem:[#allocation6 + $0x2d0] sm:$0xff]
    %v293 = vld [vmem:[#allocation6 + $0x2d8] sm:$0xff]
    %v294 = vld [vmem:[#allocation6 + $0x2e0] sm:$0xf]
    %v295 = vld [vmem:[#allocation6 + $0x2e4] sm:$0xff]
    %v296 = vld [vmem:[#allocation6 + $0x2ec] sm:$0xff]
    %v297 = vld [vmem:[#allocation6 + $0x2f4] sm:$0xf]
    %v298 = vld [vmem:[#allocation6 + $0x2f8] sm:$0xff]
    %v299 = vld [vmem:[#allocation6 + $0x300] sm:$0xff]
    %v300 = vld [vmem:[#allocation6 + $0x308] sm:$0xf]
    %v301 = vld [vmem:[#allocation6 + $0x30c] sm:$0xff]
    %v302 = vld [vmem:[#allocation6 + $0x314] sm:$0xff]
    %v303 = vld [vmem:[#allocation6 + $0x31c] sm:$0xf]
    %v304 = vld [vmem:[#allocation6 + $0x320] sm:$0xff]
    %v305 = vld [vmem:[#allocation6 + $0x328] sm:$0xff]
    %v306 = vld [vmem:[#allocation6 + $0x330] sm:$0xf]
    %v307 = vld [vmem:[#allocation6 + $0x334] sm:$0xff]
    %v308 = vld [vmem:[#allocation6 + $0x33c] sm:$0xff]
    %v309 = vld [vmem:[#allocation6 + $0x344] sm:$0xf]
    %v310 = vld [vmem:[#allocation6 + $0x348] sm:$0xff]
    %v311 = vld [vmem:[#allocation6 + $0x350] sm:$0xff]
    %v312 = vld [vmem:[#allocation6 + $0x358] sm:$0xf]
    %v313 = vld [vmem:[#allocation6 + $0x35c] sm:$0xff]
    %v314 = vld [vmem:[#allocation6 + $0x364] sm:$0xff]
    %v315 = vld [vmem:[#allocation6 + $0x36c] sm:$0xf]
    %v316 = vld [vmem:[#allocation6 + $0x370] sm:$0xff]
    %v317 = vld [vmem:[#allocation6 + $0x378] sm:$0xff]
    %v318 = vld [vmem:[#allocation6 + $0x380] sm:$0xf]
    %v319 = vld [vmem:[#allocation6 + $0x384] sm:$0xff]
    %v320 = vld [vmem:[#allocation6 + $0x38c] sm:$0xff]
    %v321 = vld [vmem:[#allocation6 + $0x394] sm:$0xf]
    %v322 = vld [vmem:[#allocation6 + $0x398] sm:$0xff]
    %v323 = vld [vmem:[#allocation6 + $0x3a0] sm:$0xff]
    %v324 = vld [vmem:[#allocation6 + $0x3a8] sm:$0xf]
    %v325 = vld [vmem:[#allocation6 + $0x3ac] sm:$0xff]
    %v326 = vld [vmem:[#allocation6 + $0x3b4] sm:$0xff]
    %v327 = vld [vmem:[#allocation6 + $0x3bc] sm:$0xf]
    %v328 = vld [vmem:[#allocation6 + $0x3c0] sm:$0xff]
    %v329 = vld [vmem:[#allocation6 + $0x3c8] sm:$0xff]
    %v330 = vld [vmem:[#allocation6 + $0x3d0] sm:$0xf]
    %v331 = vld [vmem:[#allocation6 + $0x3d4] sm:$0xff]
    %v332 = vld [vmem:[#allocation6 + $0x3dc] sm:$0xff]
    %v333 = vld [vmem:[#allocation6 + $0x3e4] sm:$0xf]
    %v334 = vld [vmem:[#allocation6 + $0x3e8] sm:$0xff]
    %v335 = vld [vmem:[#allocation6 + $0x3f0] sm:$0xff]
    %v336 = vld [vmem:[#allocation6 + $0x3f8] sm:$0xf]
    %v337 = vld [vmem:[#allocation6 + $0x3fc] sm:$0xff]
    %v338 = vld [vmem:[#allocation6 + $0x404] sm:$0xff]
    %v339 = vld [vmem:[#allocation6 + $0x40c] sm:$0xf]
    %v340 = vld [vmem:[#allocation6 + $0x410] sm:$0xff]
    %v341 = vld [vmem:[#allocation6 + $0x418] sm:$0xff]
    %v342 = vld [vmem:[#allocation6 + $0x420] sm:$0xf]
    %v343 = vld [vmem:[#allocation6 + $0x424] sm:$0xff]
    %v344 = vld [vmem:[#allocation6 + $0x42c] sm:$0xff]
    %v345 = vld [vmem:[#allocation6 + $0x434] sm:$0xf]
    %v346 = vld [vmem:[#allocation6 + $0x438] sm:$0xff]
    %v347 = vld [vmem:[#allocation6 + $0x440] sm:$0xff]
    %v348 = vld [vmem:[#allocation6 + $0x448] sm:$0xf]
    %v349 = vld [vmem:[#allocation6 + $0x44c] sm:$0xff]
    %v350 = vld [vmem:[#allocation6 + $0x454] sm:$0xff]
    %v351 = vld [vmem:[#allocation6 + $0x45c] sm:$0xf]
    %v352 = vld [vmem:[#allocation6 + $0x460] sm:$0xff]
    %v353 = vld [vmem:[#allocation6 + $0x468] sm:$0xff]
    %v354 = vld [vmem:[#allocation6 + $0x470] sm:$0xf]
    %v355 = vld [vmem:[#allocation6 + $0x474] sm:$0xff]
    %v356 = vld [vmem:[#allocation6 + $0x47c] sm:$0xff]
    %v357 = vld [vmem:[#allocation6 + $0x484] sm:$0xf]
    %v358 = vld [vmem:[#allocation6 + $0x488] sm:$0xff]
    %v359 = vld [vmem:[#allocation6 + $0x490] sm:$0xff]
    %v360 = vld [vmem:[#allocation6 + $0x498] sm:$0xf]
    %v361 = vld [vmem:[#allocation6 + $0x49c] sm:$0xff]
    %v362 = vld [vmem:[#allocation6 + $0x4a4] sm:$0xff]
    %v363 = vld [vmem:[#allocation6 + $0x4ac] sm:$0xf]
    %v364 = vld [vmem:[#allocation6 + $0x4b0] sm:$0xff]
    %v365 = vld [vmem:[#allocation6 + $0x4b8] sm:$0xff]
    %v366 = vld [vmem:[#allocation6 + $0x4c0] sm:$0xf]
    %v367 = vld [vmem:[#allocation6 + $0x4c4] sm:$0xff]
    %v368 = vld [vmem:[#allocation6 + $0x4cc] sm:$0xff]
    %v369 = vld [vmem:[#allocation6 + $0x4d4] sm:$0xf]
    %v370 = vld [vmem:[#allocation6 + $0x4d8] sm:$0xff]
    %v371 = vld [vmem:[#allocation6 + $0x4e0] sm:$0xff]
    %v372 = vld [vmem:[#allocation6 + $0x4e8] sm:$0xf]
    %v373 = vld [vmem:[#allocation6 + $0x4ec] sm:$0xff]
    %v374 = vld [vmem:[#allocation6 + $0x4f4] sm:$0xff]
    %v375 = vld [vmem:[#allocation6 + $0x4fc] sm:$0xf]
    %v376 = vld [vmem:[#allocation6 + $0x500] sm:$0xff]
    %v377 = vld [vmem:[#allocation6 + $0x508] sm:$0xff]
    %v378 = vld [vmem:[#allocation6 + $0x510] sm:$0xf]
    %v379 = vld [vmem:[#allocation6 + $0x514] sm:$0xff]
    %v380 = vld [vmem:[#allocation6 + $0x51c] sm:$0xff]
    %v381 = vld [vmem:[#allocation6 + $0x524] sm:$0xf]
    %v382 = vld [vmem:[#allocation6 + $0x528] sm:$0xff]
    %v383 = vld [vmem:[#allocation6 + $0x530] sm:$0xff]
    %v384 = vld [vmem:[#allocation6 + $0x538] sm:$0xf]
    %v385 = vld [vmem:[#allocation6 + $0x53c] sm:$0xff]
    %v386 = vld [vmem:[#allocation6 + $0x544] sm:$0xff]
    %v387 = vld [vmem:[#allocation6 + $0x54c] sm:$0xf]
    %v388 = vld [vmem:[#allocation6 + $0x550] sm:$0xff]
    %v389 = vld [vmem:[#allocation6 + $0x558] sm:$0xff]
    %v390 = vld [vmem:[#allocation6 + $0x560] sm:$0xf]
    %v391 = vld [vmem:[#allocation6 + $0x564] sm:$0xff]
    %v392 = vld [vmem:[#allocation6 + $0x56c] sm:$0xff]
    %v393 = vld [vmem:[#allocation6 + $0x574] sm:$0xf]
    %v394 = vld [vmem:[#allocation6 + $0x578] sm:$0xff]
    %v395 = vld [vmem:[#allocation6 + $0x580] sm:$0xff]
    %v396 = vld [vmem:[#allocation6 + $0x588] sm:$0xf]
    %v397 = vld [vmem:[#allocation6 + $0x58c] sm:$0xff]
    %v398 = vld [vmem:[#allocation6 + $0x594] sm:$0xff]
    %v399 = vld [vmem:[#allocation6 + $0x59c] sm:$0xf]
    %v400 = vld [vmem:[#allocation6 + $0x5a0] sm:$0xff]
    %v401 = vld [vmem:[#allocation6 + $0x5a8] sm:$0xff]
    %v402 = vld [vmem:[#allocation6 + $0x5b0] sm:$0xf]
    %v403 = vld [vmem:[#allocation6 + $0x5b4] sm:$0xff]
    %v404 = vld [vmem:[#allocation6 + $0x5bc] sm:$0xff]
    %v405 = vld [vmem:[#allocation6 + $0x5c4] sm:$0xf]
    %v406 = vld [vmem:[#allocation6 + $0x5c8] sm:$0xff]
    %v407 = vld [vmem:[#allocation6 + $0x5d0] sm:$0xff]
    %v408 = vld [vmem:[#allocation6 + $0x5d8] sm:$0xf]
    %v409 = vld [vmem:[#allocation6 + $0x5dc] sm:$0xff]
    %v410 = vld [vmem:[#allocation6 + $0x5e4] sm:$0xff]
    %v411 = vld [vmem:[#allocation6 + $0x5ec] sm:$0xf]
    %v412 = vld [vmem:[#allocation6 + $0x5f0] sm:$0xff]
    %v413 = vld [vmem:[#allocation6 + $0x5f8] sm:$0xff]
    %v414 = vld [vmem:[#allocation6 + $0x600] sm:$0xf]
    %v415 = vld [vmem:[#allocation6 + $0x604] sm:$0xff]
    %v416 = vld [vmem:[#allocation6 + $0x60c] sm:$0xff]
    %v417 = vld [vmem:[#allocation6 + $0x614] sm:$0xf]
    %v418 = vld [vmem:[#allocation6 + $0x618] sm:$0xff]
    %v419 = vld [vmem:[#allocation6 + $0x620] sm:$0xff]
    %v420 = vld [vmem:[#allocation6 + $0x628] sm:$0xf]
    %v421 = vld [vmem:[#allocation6 + $0x62c] sm:$0xff]
    %v422 = vld [vmem:[#allocation6 + $0x634] sm:$0xff]
    %v423 = vld [vmem:[#allocation6 + $0x63c] sm:$0xf]
    %v424 = vld [vmem:[#allocation6 + $0x640] sm:$0xff]
    %v425 = vld [vmem:[#allocation6 + $0x648] sm:$0xff]
    %v426 = vld [vmem:[#allocation6 + $0x650] sm:$0xf]
    %v427 = vld [vmem:[#allocation6 + $0x654] sm:$0xff]
    %v428 = vld [vmem:[#allocation6 + $0x65c] sm:$0xff]
    %v429 = vld [vmem:[#allocation6 + $0x664] sm:$0xf]
    %v430 = vld [vmem:[#allocation6 + $0x668] sm:$0xff]
    %v431 = vld [vmem:[#allocation6 + $0x670] sm:$0xff]
    %v432 = vld [vmem:[#allocation6 + $0x678] sm:$0xf]
    %v433 = vld [vmem:[#allocation6 + $0x67c] sm:$0xff]
    %v434 = vld [vmem:[#allocation6 + $0x684] sm:$0xff]
    %v435 = vld [vmem:[#allocation6 + $0x68c] sm:$0xf]
    %v436 = vld [vmem:[#allocation6 + $0x690] sm:$0xff]
    %v437 = vld [vmem:[#allocation6 + $0x698] sm:$0xff]
    %v438 = vld [vmem:[#allocation6 + $0x6a0] sm:$0xf]
    %v439 = vld [vmem:[#allocation6 + $0x6a4] sm:$0xff]
    %v440 = vld [vmem:[#allocation6 + $0x6ac] sm:$0xff]
    %v441 = vld [vmem:[#allocation6 + $0x6b4] sm:$0xf]
    %v442 = vld [vmem:[#allocation6 + $0x6b8] sm:$0xff]
    %v443 = vld [vmem:[#allocation6 + $0x6c0] sm:$0xff]
    %v444 = vld [vmem:[#allocation6 + $0x6c8] sm:$0xf]
    %v445 = vld [vmem:[#allocation6 + $0x6cc] sm:$0xff]
    %v446 = vld [vmem:[#allocation6 + $0x6d4] sm:$0xff]
    %v447 = vld [vmem:[#allocation6 + $0x6dc] sm:$0xf]
    %v448 = vld [vmem:[#allocation6 + $0x6e0] sm:$0xff]
    %v449 = vld [vmem:[#allocation6 + $0x6e8] sm:$0xff]
    %v450 = vld [vmem:[#allocation6 + $0x6f0] sm:$0xf]
    %v451 = vld [vmem:[#allocation6 + $0x6f4] sm:$0xff]
    %v452 = vld [vmem:[#allocation6 + $0x6fc] sm:$0xff]
    %v453 = vld [vmem:[#allocation6 + $0x704] sm:$0xf]
    %v454 = vld [vmem:[#allocation6 + $0x708] sm:$0xff]
    %v455 = vld [vmem:[#allocation6 + $0x710] sm:$0xff]
    %v456 = vld [vmem:[#allocation6 + $0x718] sm:$0xf]
    %v457 = vld [vmem:[#allocation6 + $0x71c] sm:$0xff]
    %v458 = vld [vmem:[#allocation6 + $0x724] sm:$0xff]
    %v459 = vld [vmem:[#allocation6 + $0x72c] sm:$0xf]
    %v460 = vld [vmem:[#allocation6 + $0x730] sm:$0xff]
    %v461 = vld [vmem:[#allocation6 + $0x738] sm:$0xff]
    %v462 = vld [vmem:[#allocation6 + $0x740] sm:$0xf]
    %v463 = vld [vmem:[#allocation6 + $0x744] sm:$0xff]
    %v464 = vld [vmem:[#allocation6 + $0x74c] sm:$0xff]
    %v465 = vld [vmem:[#allocation6 + $0x754] sm:$0xf]
    %v466 = vld [vmem:[#allocation6 + $0x758] sm:$0xff]
    %v467 = vld [vmem:[#allocation6 + $0x760] sm:$0xff]
    %v468 = vld [vmem:[#allocation6 + $0x768] sm:$0xf]
    %v469 = vld [vmem:[#allocation6 + $0x76c] sm:$0xff]
    %v470 = vld [vmem:[#allocation6 + $0x774] sm:$0xff]
    %v471 = vld [vmem:[#allocation6 + $0x77c] sm:$0xf]
    %v472 = vld [vmem:[#allocation6 + $0x780] sm:$0xff]
    %v473 = vld [vmem:[#allocation6 + $0x788] sm:$0xff]
    %v474 = vld [vmem:[#allocation6 + $0x790] sm:$0xf]
    %v475 = vld [vmem:[#allocation6 + $0x794] sm:$0xff]
    %v476 = vld [vmem:[#allocation6 + $0x79c] sm:$0xff]
    %v477 = vld [vmem:[#allocation6 + $0x7a4] sm:$0xf]
    %v478 = vld [vmem:[#allocation6 + $0x7a8] sm:$0xff]
    %v479 = vld [vmem:[#allocation6 + $0x7b0] sm:$0xff]
    %v480 = vld [vmem:[#allocation6 + $0x7b8] sm:$0xf]
    %v481 = vld [vmem:[#allocation6 + $0x7bc] sm:$0xff]
    %v482 = vld [vmem:[#allocation6 + $0x7c4] sm:$0xff]
    %v483 = vld [vmem:[#allocation6 + $0x7cc] sm:$0xf]
    %v484 = vld [vmem:[#allocation6 + $0x7d0] sm:$0xff]
    %v485 = vld [vmem:[#allocation6 + $0x7d8] sm:$0xff]
    %v486 = vld [vmem:[#allocation6 + $0x7e0] sm:$0xf]
    %v487 = vld [vmem:[#allocation6 + $0x7e4] sm:$0xff]
    %v488 = vld [vmem:[#allocation6 + $0x7ec] sm:$0xff]
    %v489 = vld [vmem:[#allocation6 + $0x7f4] sm:$0xf]
    %v490 = vld [vmem:[#allocation6 + $0x7f8] sm:$0xff]
    %v491 = vld [vmem:[#allocation6 + $0x800] sm:$0xff]
    %v492 = vld [vmem:[#allocation6 + $0x808] sm:$0xf]
    %v493 = vld [vmem:[#allocation6 + $0x80c] sm:$0xff]
    %v494 = vld [vmem:[#allocation6 + $0x814] sm:$0xff]
    %v495 = vld [vmem:[#allocation6 + $0x81c] sm:$0xf]
    %v496 = vld [vmem:[#allocation6 + $0x820] sm:$0xff]
    %v497 = vld [vmem:[#allocation6 + $0x828] sm:$0xff]
    %v498 = vld [vmem:[#allocation6 + $0x830] sm:$0xf]
    %v499 = vld [vmem:[#allocation6 + $0x834] sm:$0xff]
    %v500 = vld [vmem:[#allocation6 + $0x83c] sm:$0xff]
    %v501 = vld [vmem:[#allocation6 + $0x844] sm:$0xf]
    %v502 = vld [vmem:[#allocation6 + $0x848] sm:$0xff]
    %v503 = vld [vmem:[#allocation6 + $0x850] sm:$0xff]
    %v504 = vld [vmem:[#allocation6 + $0x858] sm:$0xf]
    %v505 = vld [vmem:[#allocation6 + $0x85c] sm:$0xff]
    %v506 = vld [vmem:[#allocation6 + $0x864] sm:$0xff]
    %v507 = vld [vmem:[#allocation6 + $0x86c] sm:$0xf]
    %v508 = vld [vmem:[#allocation6 + $0x870] sm:$0xff]
    %v509 = vld [vmem:[#allocation6 + $0x878] sm:$0xff]
    %v510 = vld [vmem:[#allocation6 + $0x880] sm:$0xf]
    %v511 = vld [vmem:[#allocation6 + $0x884] sm:$0xff]
    %v512 = vld [vmem:[#allocation6 + $0x88c] sm:$0xff]
    %v513 = vld [vmem:[#allocation6 + $0x894] sm:$0xf]
    %v514 = vld [vmem:[#allocation6 + $0x898] sm:$0xff]
    %v515 = vld [vmem:[#allocation6 + $0x8a0] sm:$0xff]
    %v516 = vld [vmem:[#allocation6 + $0x8a8] sm:$0xf]
    %v517 = vld [vmem:[#allocation6 + $0x8ac] sm:$0xff]
    %v518 = vld [vmem:[#allocation6 + $0x8b4] sm:$0xff]
    %v519 = vld [vmem:[#allocation6 + $0x8bc] sm:$0xf]
    %v520 = vld [vmem:[#allocation6 + $0x8c0] sm:$0xff]
    %v521 = vld [vmem:[#allocation6 + $0x8c8] sm:$0xff]
    %v522 = vld [vmem:[#allocation6 + $0x8d0] sm:$0xf]
    %v523 = vld [vmem:[#allocation6 + $0x8d4] sm:$0xff]
    %v524 = vld [vmem:[#allocation6 + $0x8dc] sm:$0xff]
    %v525 = vld [vmem:[#allocation6 + $0x8e4] sm:$0xf]
    %v526 = vld [vmem:[#allocation6 + $0x8e8] sm:$0xff]
    %v527 = vld [vmem:[#allocation6 + $0x8f0] sm:$0xff]
    %v528 = vld [vmem:[#allocation6 + $0x8f8] sm:$0xf]
    %v529 = vld [vmem:[#allocation6 + $0x8fc] sm:$0xff]
    %v530 = vld [vmem:[#allocation6 + $0x904] sm:$0xff]
    %v531 = vld [vmem:[#allocation6 + $0x90c] sm:$0xf]
    %v532 = vld [vmem:[#allocation6 + $0x910] sm:$0xff]
    %v533 = vld [vmem:[#allocation6 + $0x918] sm:$0xff]
    %v534 = vld [vmem:[#allocation6 + $0x920] sm:$0xf]
    %v535 = vld [vmem:[#allocation6 + $0x924] sm:$0xff]
    %v536 = vld [vmem:[#allocation6 + $0x92c] sm:$0xff]
    %v537 = vld [vmem:[#allocation6 + $0x934] sm:$0xf]
    %v538 = vld [vmem:[#allocation6 + $0x938] sm:$0xff]
    %v539 = vld [vmem:[#allocation6 + $0x940] sm:$0xff]
    %v540 = vld [vmem:[#allocation6 + $0x948] sm:$0xf]
    %v541 = vld [vmem:[#allocation6 + $0x94c] sm:$0xff]
    %v542 = vld [vmem:[#allocation6 + $0x954] sm:$0xff]
    %v543 = vld [vmem:[#allocation6 + $0x95c] sm:$0xf]
    %v544 = vld [vmem:[#allocation6 + $0x960] sm:$0xff]
    %v545 = vld [vmem:[#allocation6 + $0x968] sm:$0xff]
    %v546 = vld [vmem:[#allocation6 + $0x970] sm:$0xf]
    %v547 = vld [vmem:[#allocation6 + $0x974] sm:$0xff]
    %v548 = vld [vmem:[#allocation6 + $0x97c] sm:$0xff]
    %v549 = vld [vmem:[#allocation6 + $0x984] sm:$0xf]
    %v550 = vld [vmem:[#allocation6 + $0x988] sm:$0xff]
    %v551 = vld [vmem:[#allocation6 + $0x990] sm:$0xff]
    %v552 = vld [vmem:[#allocation6 + $0x998] sm:$0xf]
    %v553 = vld [vmem:[#allocation6 + $0x99c] sm:$0xff]
    %v554 = vld [vmem:[#allocation6 + $0x9a4] sm:$0xff]
    %v555 = vld [vmem:[#allocation6 + $0x9ac] sm:$0xf]
    %v556 = vld [vmem:[#allocation6 + $0x9b0] sm:$0xff]
    %v557 = vld [vmem:[#allocation6 + $0x9b8] sm:$0xff]
    %v558 = vld [vmem:[#allocation6 + $0x9c0] sm:$0xf]
    %v559 = vld [vmem:[#allocation6 + $0x9c4] sm:$0xff]
    %v560 = vld [vmem:[#allocation6 + $0x9cc] sm:$0xff]
    %v561 = vld [vmem:[#allocation6 + $0x9d4] sm:$0xf]
    %v562 = vld [vmem:[#allocation6 + $0x9d8] sm:$0xff]
    %v563 = vld [vmem:[#allocation6 + $0x9e0] sm:$0xff]
    %v564 = vld [vmem:[#allocation6 + $0x9e8] sm:$0xf]
    %v565 = vld [vmem:[#allocation6 + $0x9ec] sm:$0xff]
    %v566 = vld [vmem:[#allocation6 + $0x9f4] sm:$0xff]
    %v567 = vld [vmem:[#allocation6 + $0x9fc] sm:$0xf]
    %v568 = vld [vmem:[#allocation6 + $0xa00] sm:$0xff]
    %v569 = vld [vmem:[#allocation6 + $0xa08] sm:$0xff]
    %v570 = vld [vmem:[#allocation6 + $0xa10] sm:$0xf]
    %v571 = vld [vmem:[#allocation6 + $0xa14] sm:$0xff]
    %v572 = vld [vmem:[#allocation6 + $0xa1c] sm:$0xff]
    %v573 = vld [vmem:[#allocation6 + $0xa24] sm:$0xf]
    %v574 = vld [vmem:[#allocation6 + $0xa28] sm:$0xff]
    %v575 = vld [vmem:[#allocation6 + $0xa30] sm:$0xff]
    %v576 = vld [vmem:[#allocation6 + $0xa38] sm:$0xf]
    %v577 = vld [vmem:[#allocation6 + $0xa3c] sm:$0xff]
    %v578 = vld [vmem:[#allocation6 + $0xa44] sm:$0xff]
    %v579 = vld [vmem:[#allocation6 + $0xa4c] sm:$0xf]
    %v580 = vld [vmem:[#allocation6 + $0xa50] sm:$0xff]
    %v581 = vld [vmem:[#allocation6 + $0xa58] sm:$0xff]
    %v582 = vld [vmem:[#allocation6 + $0xa60] sm:$0xf]
    %v583 = vld [vmem:[#allocation6 + $0xa64] sm:$0xff]
    %v584 = vld [vmem:[#allocation6 + $0xa6c] sm:$0xff]
    %v585 = vld [vmem:[#allocation6 + $0xa74] sm:$0xf]
    %v586 = vld [vmem:[#allocation6 + $0xa78] sm:$0xff]
    %v587 = vld [vmem:[#allocation6 + $0xa80] sm:$0xff]
    %v588 = vld [vmem:[#allocation6 + $0xa88] sm:$0xf]
    %v589 = vld [vmem:[#allocation6 + $0xa8c] sm:$0xff]
    %v590 = vld [vmem:[#allocation6 + $0xa94] sm:$0xff]
    %v591 = vld [vmem:[#allocation6 + $0xa9c] sm:$0xf]
    %v592 = vld [vmem:[#allocation6 + $0xaa0] sm:$0xff]
    %v593 = vld [vmem:[#allocation6 + $0xaa8] sm:$0xff]
    %v594 = vld [vmem:[#allocation6 + $0xab0] sm:$0xf]
    %v595 = vld [vmem:[#allocation6 + $0xab4] sm:$0xff]
    %v596 = vld [vmem:[#allocation6 + $0xabc] sm:$0xff]
    %v597 = vld [vmem:[#allocation6 + $0xac4] sm:$0xf]
    %v598 = vld [vmem:[#allocation6 + $0xac8] sm:$0xff]
    %v599 = vld [vmem:[#allocation6 + $0xad0] sm:$0xff]
    %v600 = vld [vmem:[#allocation6 + $0xad8] sm:$0xf]
    %v601 = vld [vmem:[#allocation6 + $0xadc] sm:$0xff]
    %v602 = vld [vmem:[#allocation6 + $0xae4] sm:$0xff]
    %v603 = vld [vmem:[#allocation6 + $0xaec] sm:$0xf]
    %v604 = vld [vmem:[#allocation6 + $0xaf0] sm:$0xff]
    %v605 = vld [vmem:[#allocation6 + $0xaf8] sm:$0xff]
    %v606 = vld [vmem:[#allocation6 + $0xb00] sm:$0xf]
    %v607 = vld [vmem:[#allocation6 + $0xb04] sm:$0xff]
    %v608 = vld [vmem:[#allocation6 + $0xb0c] sm:$0xff]
    %v609 = vld [vmem:[#allocation6 + $0xb14] sm:$0xf]
    %v610 = vld [vmem:[#allocation6 + $0xb18] sm:$0xff]
    %v611 = vld [vmem:[#allocation6 + $0xb20] sm:$0xff]
    %v612 = vld [vmem:[#allocation6 + $0xb28] sm:$0xf]
    %v613 = vld [vmem:[#allocation6 + $0xb2c] sm:$0xff]
    %v614 = vld [vmem:[#allocation6 + $0xb34] sm:$0xff]
    %v615 = vld [vmem:[#allocation6 + $0xb3c] sm:$0xf]
    %v616 = vld [vmem:[#allocation6 + $0xb40] sm:$0xff]
    %v617 = vld [vmem:[#allocation6 + $0xb48] sm:$0xff]
    %v618 = vld [vmem:[#allocation6 + $0xb50] sm:$0xf]
    %v619 = vld [vmem:[#allocation6 + $0xb54] sm:$0xff]
    %v620 = vld [vmem:[#allocation6 + $0xb5c] sm:$0xff]
    %v621 = vld [vmem:[#allocation6 + $0xb64] sm:$0xf]
    %v622 = vld [vmem:[#allocation6 + $0xb68] sm:$0xff]
    %v623 = vld [vmem:[#allocation6 + $0xb70] sm:$0xff]
    %v624 = vld [vmem:[#allocation6 + $0xb78] sm:$0xf]
    %v625 = vld [vmem:[#allocation6 + $0xb7c] sm:$0xff]
    %v626 = vld [vmem:[#allocation6 + $0xb84] sm:$0xff]
    %v627 = vld [vmem:[#allocation6 + $0xb8c] sm:$0xf]
    %v628 = vld [vmem:[#allocation6 + $0xb90] sm:$0xff]
    %v629 = vld [vmem:[#allocation6 + $0xb98] sm:$0xff]
    %v630 = vld [vmem:[#allocation6 + $0xba0] sm:$0xf]
    %v631 = vld [vmem:[#allocation6 + $0xba4] sm:$0xff]
    %v632 = vld [vmem:[#allocation6 + $0xbac] sm:$0xff]
    %v633 = vld [vmem:[#allocation6 + $0xbb4] sm:$0xf]
    %v634 = vld [vmem:[#allocation6 + $0xbb8] sm:$0xff]
    %v635 = vld [vmem:[#allocation6 + $0xbc0] sm:$0xff]
    %v636 = vld [vmem:[#allocation6 + $0xbc8] sm:$0xf]
    %v637 = vld [vmem:[#allocation6 + $0xbcc] sm:$0xff]
    %v638 = vld [vmem:[#allocation6 + $0xbd4] sm:$0xff]
    %v639 = vld [vmem:[#allocation6 + $0xbdc] sm:$0xf]
    %v640 = vld [vmem:[#allocation6 + $0xbe0] sm:$0xff]
    %v641 = vld [vmem:[#allocation6 + $0xbe8] sm:$0xff]
    %v642 = vld [vmem:[#allocation6 + $0xbf0] sm:$0xf]
    %v643 = vld [vmem:[#allocation6 + $0xbf4] sm:$0xff]
    %v644 = vld [vmem:[#allocation6 + $0xbfc] sm:$0xff]
    %v645 = vld [vmem:[#allocation6 + $0xc04] sm:$0xf]
    %v646 = vld [vmem:[#allocation6 + $0xc08] sm:$0xff]
    %v647 = vld [vmem:[#allocation6 + $0xc10] sm:$0xff]
    %v648 = vld [vmem:[#allocation6 + $0xc18] sm:$0xf]
    %v649 = vld [vmem:[#allocation6 + $0xc1c] sm:$0xff]
    %v650 = vld [vmem:[#allocation6 + $0xc24] sm:$0xff]
    %v651 = vld [vmem:[#allocation6 + $0xc2c] sm:$0xf]
    %v652 = vld [vmem:[#allocation6 + $0xc30] sm:$0xff]
    %v653 = vld [vmem:[#allocation6 + $0xc38] sm:$0xff]
    %v654 = vld [vmem:[#allocation6 + $0xc40] sm:$0xf]
    %v655 = vld [vmem:[#allocation6 + $0xc44] sm:$0xff]
    %v656 = vld [vmem:[#allocation6 + $0xc4c] sm:$0xff]
    %v657 = vld [vmem:[#allocation6 + $0xc54] sm:$0xf]
    %v658 = vld [vmem:[#allocation6 + $0xc58] sm:$0xff]
    %v659 = vld [vmem:[#allocation6 + $0xc60] sm:$0xff]
    %v660 = vld [vmem:[#allocation6 + $0xc68] sm:$0xf]
    %v661 = vld [vmem:[#allocation6 + $0xc6c] sm:$0xff]
    %v662 = vld [vmem:[#allocation6 + $0xc74] sm:$0xff]
    %v663 = vld [vmem:[#allocation6 + $0xc7c] sm:$0xf]
    %v704 = vunpack.c.l.b16 %v144
    %v705 = vunpack.c.h.b16 %v144
    %v706 = vunpack.c.l.b16 %v145
    %v707 = vunpack.c.h.b16 %v145
    %v708 = vunpack.c.l.b16 %v146
    %v709 = vunpack.c.h.b16 %v146
    %v710 = vunpack.c.l.b16 %v147
    %v711 = vunpack.c.h.b16 %v147
    %v712 = vunpack.c.l.b16 %v148
    %v713 = vunpack.c.h.b16 %v148
    %v714 = vunpack.c.l.b16 %v149
    %v715 = vunpack.c.h.b16 %v149
    %v716 = vunpack.c.l.b16 %v150
    %v717 = vunpack.c.h.b16 %v150
    %v718 = vunpack.c.l.b16 %v151
    %v719 = vunpack.c.h.b16 %v151
    %v720 = vunpack.c.l.b16 %v152
    %v721 = vunpack.c.h.b16 %v152
    %v722 = vunpack.c.l.b16 %v153
    %v723 = vunpack.c.h.b16 %v153
    %v724 = vunpack.c.l.b16 %v154
    %v725 = vunpack.c.h.b16 %v154
    %v726 = vunpack.c.l.b16 %v155
    %v727 = vunpack.c.h.b16 %v155
    %v728 = vunpack.c.l.b16 %v156
    %v729 = vunpack.c.h.b16 %v156
    %v730 = vunpack.c.l.b16 %v157
    %v731 = vunpack.c.h.b16 %v157
    %v732 = vunpack.c.l.b16 %v158
    %v733 = vunpack.c.h.b16 %v158
    %v734 = vunpack.c.l.b16 %v159
    %v735 = vunpack.c.h.b16 %v159
    %v736 = vunpack.c.l.b16 %v160
    %v737 = vunpack.c.h.b16 %v160
    %v738 = vunpack.c.l.b16 %v161
    %v739 = vunpack.c.h.b16 %v161
    %v740 = vunpack.c.l.b16 %v162
    %v741 = vunpack.c.h.b16 %v162
    %v742 = vunpack.c.l.b16 %v163
    %v743 = vunpack.c.h.b16 %v163
    %v744 = vunpack.c.l.b16 %v164
    %v745 = vunpack.c.h.b16 %v164
    %v746 = vunpack.c.l.b16 %v165
    %v747 = vunpack.c.h.b16 %v165
    %v748 = vunpack.c.l.b16 %v166
    %v749 = vunpack.c.h.b16 %v166
    %v750 = vunpack.c.l.b16 %v167
    %v751 = vunpack.c.h.b16 %v167
    %v752 = vunpack.c.l.b16 %v168
    %v753 = vunpack.c.h.b16 %v168
    %v754 = vunpack.c.l.b16 %v169
    %v755 = vunpack.c.h.b16 %v169
    %v756 = vunpack.c.l.b16 %v170
    %v757 = vunpack.c.h.b16 %v170
    %v758 = vunpack.c.l.b16 %v171
    %v759 = vunpack.c.h.b16 %v171
    %v760 = vunpack.c.l.b16 %v172
    %v761 = vunpack.c.h.b16 %v172
    %v762 = vunpack.c.l.b16 %v173
    %v763 = vunpack.c.h.b16 %v173
    %v764 = vunpack.c.l.b16 %v174
    %v765 = vunpack.c.h.b16 %v174
    %v766 = vunpack.c.l.b16 %v175
    %v767 = vunpack.c.h.b16 %v175
    %v768 = vunpack.c.l.b16 %v176
    %v769 = vunpack.c.h.b16 %v176
    %v770 = vunpack.c.l.b16 %v177
    %v771 = vunpack.c.h.b16 %v177
    %v772 = vunpack.c.l.b16 %v178
    %v773 = vunpack.c.h.b16 %v178
    %v774 = vunpack.c.l.b16 %v179
    %v775 = vunpack.c.h.b16 %v179
    %v776 = vunpack.c.l.b16 %v180
    %v777 = vunpack.c.h.b16 %v180
    %v778 = vunpack.c.l.b16 %v181
    %v779 = vunpack.c.h.b16 %v181
    %v780 = vunpack.c.l.b16 %v182
    %v781 = vunpack.c.h.b16 %v182
    %v782 = vunpack.c.l.b16 %v183
    %v783 = vunpack.c.h.b16 %v183
    %v784 = vpack.c.b16 %v714, %v704
    %v785 = vpack.c.b16 %v715, %v705
    %v786 = vpack.c.b16 %v716, %v706
    %v787 = vpack.c.b16 %v717, %v707
    %v788 = vpack.c.b16 %v718, %v708
    %v789 = vpack.c.b16 %v719, %v709
    %v790 = vpack.c.b16 %v720, %v710
    %v791 = vpack.c.b16 %v721, %v711
    %v792 = vpack.c.b16 %v722, %v712
    %v793 = vpack.c.b16 %v723, %v713
    %v794 = vpack.c.b16 %v734, %v724
    %v795 = vpack.c.b16 %v735, %v725
    %v796 = vpack.c.b16 %v736, %v726
    %v797 = vpack.c.b16 %v737, %v727
    %v798 = vpack.c.b16 %v738, %v728
    %v799 = vpack.c.b16 %v739, %v729
    %v800 = vpack.c.b16 %v740, %v730
    %v801 = vpack.c.b16 %v741, %v731
    %v802 = vpack.c.b16 %v742, %v732
    %v803 = vpack.c.b16 %v743, %v733
    %v804 = vpack.c.b16 %v754, %v744
    %v805 = vpack.c.b16 %v755, %v745
    %v806 = vpack.c.b16 %v756, %v746
    %v807 = vpack.c.b16 %v757, %v747
    %v808 = vpack.c.b16 %v758, %v748
    %v809 = vpack.c.b16 %v759, %v749
    %v810 = vpack.c.b16 %v760, %v750
    %v811 = vpack.c.b16 %v761, %v751
    %v812 = vpack.c.b16 %v762, %v752
    %v813 = vpack.c.b16 %v763, %v753
    %v814 = vpack.c.b16 %v774, %v764
    %v815 = vpack.c.b16 %v775, %v765
    %v816 = vpack.c.b16 %v776, %v766
    %v817 = vpack.c.b16 %v777, %v767
    %v818 = vpack.c.b16 %v778, %v768
    %v819 = vpack.c.b16 %v779, %v769
    %v820 = vpack.c.b16 %v780, %v770
    %v821 = vpack.c.b16 %v781, %v771
    %v822 = vpack.c.b16 %v782, %v772
    %v823 = vpack.c.b16 %v783, %v773
    %v1344 = vunpack.c.l.b16 %v184
    %v1345 = vunpack.c.h.b16 %v184
    %v1346 = vunpack.c.l.b16 %v185
    %v1347 = vunpack.c.h.b16 %v185
    %v1348 = vunpack.c.l.b16 %v186
    %v1349 = vunpack.c.l.b16 %v187
    %v1350 = vunpack.c.h.b16 %v187
    %v1351 = vunpack.c.l.b16 %v188
    %v1352 = vunpack.c.h.b16 %v188
    %v1353 = vunpack.c.l.b16 %v189
    %v1354 = vunpack.c.l.b16 %v190
    %v1355 = vunpack.c.h.b16 %v190
    %v1356 = vunpack.c.l.b16 %v191
    %v1357 = vunpack.c.h.b16 %v191
    %v1358 = vunpack.c.l.b16 %v192
    %v1359 = vunpack.c.l.b16 %v193
    %v1360 = vunpack.c.h.b16 %v193
    %v1361 = vunpack.c.l.b16 %v194
    %v1362 = vunpack.c.h.b16 %v194
    %v1363 = vunpack.c.l.b16 %v195
    %v1364 = vunpack.c.l.b16 %v196
    %v1365 = vunpack.c.h.b16 %v196
    %v1366 = vunpack.c.l.b16 %v197
    %v1367 = vunpack.c.h.b16 %v197
    %v1368 = vunpack.c.l.b16 %v198
    %v1369 = vunpack.c.l.b16 %v199
    %v1370 = vunpack.c.h.b16 %v199
    %v1371 = vunpack.c.l.b16 %v200
    %v1372 = vunpack.c.h.b16 %v200
    %v1373 = vunpack.c.l.b16 %v201
    %v1374 = vunpack.c.l.b16 %v202
    %v1375 = vunpack.c.h.b16 %v202
    %v1376 = vunpack.c.l.b16 %v203
    %v1377 = vunpack.c.h.b16 %v203
    %v1378 = vunpack.c.l.b16 %v204
    %v1379 = vunpack.c.l.b16 %v205
    %v1380 = vunpack.c.h.b16 %v205
    %v1381 = vunpack.c.l.b16 %v206
    %v1382 = vunpack.c.h.b16 %v206
    %v1383 = vunpack.c.l.b16 %v207
    %v1384 = vunpack.c.l.b16 %v208
    %v1385 = vunpack.c.h.b16 %v208
    %v1386 = vunpack.c.l.b16 %v209
    %v1387 = vunpack.c.h.b16 %v209
    %v1388 = vunpack.c.l.b16 %v210
    %v1389 = vunpack.c.l.b16 %v211
    %v1390 = vunpack.c.h.b16 %v211
    %v1391 = vunpack.c.l.b16 %v212
    %v1392 = vunpack.c.h.b16 %v212
    %v1393 = vunpack.c.l.b16 %v213
    %v1394 = vunpack.c.l.b16 %v214
    %v1395 = vunpack.c.h.b16 %v214
    %v1396 = vunpack.c.l.b16 %v215
    %v1397 = vunpack.c.h.b16 %v215
    %v1398 = vunpack.c.l.b16 %v216
    %v1399 = vunpack.c.l.b16 %v217
    %v1400 = vunpack.c.h.b16 %v217
    %v1401 = vunpack.c.l.b16 %v218
    %v1402 = vunpack.c.h.b16 %v218
    %v1403 = vunpack.c.l.b16 %v219
    %v1404 = vunpack.c.l.b16 %v220
    %v1405 = vunpack.c.h.b16 %v220
    %v1406 = vunpack.c.l.b16 %v221
    %v1407 = vunpack.c.h.b16 %v221
    %v1408 = vunpack.c.l.b16 %v222
    %v1409 = vunpack.c.l.b16 %v223
    %v1410 = vunpack.c.h.b16 %v223
    %v1411 = vunpack.c.l.b16 %v224
    %v1412 = vunpack.c.h.b16 %v224
    %v1413 = vunpack.c.l.b16 %v225
    %v1414 = vunpack.c.l.b16 %v226
    %v1415 = vunpack.c.h.b16 %v226
    %v1416 = vunpack.c.l.b16 %v227
    %v1417 = vunpack.c.h.b16 %v227
    %v1418 = vunpack.c.l.b16 %v228
    %v1419 = vunpack.c.l.b16 %v229
    %v1420 = vunpack.c.h.b16 %v229
    %v1421 = vunpack.c.l.b16 %v230
    %v1422 = vunpack.c.h.b16 %v230
    %v1423 = vunpack.c.l.b16 %v231
    %v1424 = vunpack.c.l.b16 %v232
    %v1425 = vunpack.c.h.b16 %v232
    %v1426 = vunpack.c.l.b16 %v233
    %v1427 = vunpack.c.h.b16 %v233
    %v1428 = vunpack.c.l.b16 %v234
    %v1429 = vunpack.c.l.b16 %v235
    %v1430 = vunpack.c.h.b16 %v235
    %v1431 = vunpack.c.l.b16 %v236
    %v1432 = vunpack.c.h.b16 %v236
    %v1433 = vunpack.c.l.b16 %v237
    %v1434 = vunpack.c.l.b16 %v238
    %v1435 = vunpack.c.h.b16 %v238
    %v1436 = vunpack.c.l.b16 %v239
    %v1437 = vunpack.c.h.b16 %v239
    %v1438 = vunpack.c.l.b16 %v240
    %v1439 = vunpack.c.l.b16 %v241
    %v1440 = vunpack.c.h.b16 %v241
    %v1441 = vunpack.c.l.b16 %v242
    %v1442 = vunpack.c.h.b16 %v242
    %v1443 = vunpack.c.l.b16 %v243
    %v1444 = vunpack.c.l.b16 %v244
    %v1445 = vunpack.c.h.b16 %v244
    %v1446 = vunpack.c.l.b16 %v245
    %v1447 = vunpack.c.h.b16 %v245
    %v1448 = vunpack.c.l.b16 %v246
    %v1449 = vunpack.c.l.b16 %v247
    %v1450 = vunpack.c.h.b16 %v247
    %v1451 = vunpack.c.l.b16 %v248
    %v1452 = vunpack.c.h.b16 %v248
    %v1453 = vunpack.c.l.b16 %v249
    %v1454 = vunpack.c.l.b16 %v250
    %v1455 = vunpack.c.h.b16 %v250
    %v1456 = vunpack.c.l.b16 %v251
    %v1457 = vunpack.c.h.b16 %v251
    %v1458 = vunpack.c.l.b16 %v252
    %v1459 = vunpack.c.l.b16 %v253
    %v1460 = vunpack.c.h.b16 %v253
    %v1461 = vunpack.c.l.b16 %v254
    %v1462 = vunpack.c.h.b16 %v254
    %v1463 = vunpack.c.l.b16 %v255
    %v1464 = vunpack.c.l.b16 %v256
    %v1465 = vunpack.c.h.b16 %v256
    %v1466 = vunpack.c.l.b16 %v257
    %v1467 = vunpack.c.h.b16 %v257
    %v1468 = vunpack.c.l.b16 %v258
    %v1469 = vunpack.c.l.b16 %v259
    %v1470 = vunpack.c.h.b16 %v259
    %v1471 = vunpack.c.l.b16 %v260
    %v1472 = vunpack.c.h.b16 %v260
    %v1473 = vunpack.c.l.b16 %v261
    %v1474 = vunpack.c.l.b16 %v262
    %v1475 = vunpack.c.h.b16 %v262
    %v1476 = vunpack.c.l.b16 %v263
    %v1477 = vunpack.c.h.b16 %v263
    %v1478 = vunpack.c.l.b16 %v264
    %v1479 = vunpack.c.l.b16 %v265
    %v1480 = vunpack.c.h.b16 %v265
    %v1481 = vunpack.c.l.b16 %v266
    %v1482 = vunpack.c.h.b16 %v266
    %v1483 = vunpack.c.l.b16 %v267
    %v1484 = vunpack.c.l.b16 %v268
    %v1485 = vunpack.c.h.b16 %v268
    %v1486 = vunpack.c.l.b16 %v269
    %v1487 = vunpack.c.h.b16 %v269
    %v1488 = vunpack.c.l.b16 %v270
    %v1489 = vunpack.c.l.b16 %v271
    %v1490 = vunpack.c.h.b16 %v271
    %v1491 = vunpack.c.l.b16 %v272
    %v1492 = vunpack.c.h.b16 %v272
    %v1493 = vunpack.c.l.b16 %v273
    %v1494 = vunpack.c.l.b16 %v274
    %v1495 = vunpack.c.h.b16 %v274
    %v1496 = vunpack.c.l.b16 %v275
    %v1497 = vunpack.c.h.b16 %v275
    %v1498 = vunpack.c.l.b16 %v276
    %v1499 = vunpack.c.l.b16 %v277
    %v1500 = vunpack.c.h.b16 %v277
    %v1501 = vunpack.c.l.b16 %v278
    %v1502 = vunpack.c.h.b16 %v278
    %v1503 = vunpack.c.l.b16 %v279
    %v1504 = vunpack.c.l.b16 %v280
    %v1505 = vunpack.c.h.b16 %v280
    %v1506 = vunpack.c.l.b16 %v281
    %v1507 = vunpack.c.h.b16 %v281
    %v1508 = vunpack.c.l.b16 %v282
    %v1509 = vunpack.c.l.b16 %v283
    %v1510 = vunpack.c.h.b16 %v283
    %v1511 = vunpack.c.l.b16 %v284
    %v1512 = vunpack.c.h.b16 %v284
    %v1513 = vunpack.c.l.b16 %v285
    %v1514 = vunpack.c.l.b16 %v286
    %v1515 = vunpack.c.h.b16 %v286
    %v1516 = vunpack.c.l.b16 %v287
    %v1517 = vunpack.c.h.b16 %v287
    %v1518 = vunpack.c.l.b16 %v288
    %v1519 = vunpack.c.l.b16 %v289
    %v1520 = vunpack.c.h.b16 %v289
    %v1521 = vunpack.c.l.b16 %v290
    %v1522 = vunpack.c.h.b16 %v290
    %v1523 = vunpack.c.l.b16 %v291
    %v1524 = vunpack.c.l.b16 %v292
    %v1525 = vunpack.c.h.b16 %v292
    %v1526 = vunpack.c.l.b16 %v293
    %v1527 = vunpack.c.h.b16 %v293
    %v1528 = vunpack.c.l.b16 %v294
    %v1529 = vunpack.c.l.b16 %v295
    %v1530 = vunpack.c.h.b16 %v295
    %v1531 = vunpack.c.l.b16 %v296
    %v1532 = vunpack.c.h.b16 %v296
    %v1533 = vunpack.c.l.b16 %v297
    %v1534 = vunpack.c.l.b16 %v298
    %v1535 = vunpack.c.h.b16 %v298
    %v1536 = vunpack.c.l.b16 %v299
    %v1537 = vunpack.c.h.b16 %v299
    %v1538 = vunpack.c.l.b16 %v300
    %v1539 = vunpack.c.l.b16 %v301
    %v1540 = vunpack.c.h.b16 %v301
    %v1541 = vunpack.c.l.b16 %v302
    %v1542 = vunpack.c.h.b16 %v302
    %v1543 = vunpack.c.l.b16 %v303
    %v1544 = vunpack.c.l.b16 %v304
    %v1545 = vunpack.c.h.b16 %v304
    %v1546 = vunpack.c.l.b16 %v305
    %v1547 = vunpack.c.h.b16 %v305
    %v1548 = vunpack.c.l.b16 %v306
    %v1549 = vunpack.c.l.b16 %v307
    %v1550 = vunpack.c.h.b16 %v307
    %v1551 = vunpack.c.l.b16 %v308
    %v1552 = vunpack.c.h.b16 %v308
    %v1553 = vunpack.c.l.b16 %v309
    %v1554 = vunpack.c.l.b16 %v310
    %v1555 = vunpack.c.h.b16 %v310
    %v1556 = vunpack.c.l.b16 %v311
    %v1557 = vunpack.c.h.b16 %v311
    %v1558 = vunpack.c.l.b16 %v312
    %v1559 = vunpack.c.l.b16 %v313
    %v1560 = vunpack.c.h.b16 %v313
    %v1561 = vunpack.c.l.b16 %v314
    %v1562 = vunpack.c.h.b16 %v314
    %v1563 = vunpack.c.l.b16 %v315
    %v1564 = vunpack.c.l.b16 %v316
    %v1565 = vunpack.c.h.b16 %v316
    %v1566 = vunpack.c.l.b16 %v317
    %v1567 = vunpack.c.h.b16 %v317
    %v1568 = vunpack.c.l.b16 %v318
    %v1569 = vunpack.c.l.b16 %v319
    %v1570 = vunpack.c.h.b16 %v319
    %v1571 = vunpack.c.l.b16 %v320
    %v1572 = vunpack.c.h.b16 %v320
    %v1573 = vunpack.c.l.b16 %v321
    %v1574 = vunpack.c.l.b16 %v322
    %v1575 = vunpack.c.h.b16 %v322
    %v1576 = vunpack.c.l.b16 %v323
    %v1577 = vunpack.c.h.b16 %v323
    %v1578 = vunpack.c.l.b16 %v324
    %v1579 = vunpack.c.l.b16 %v325
    %v1580 = vunpack.c.h.b16 %v325
    %v1581 = vunpack.c.l.b16 %v326
    %v1582 = vunpack.c.h.b16 %v326
    %v1583 = vunpack.c.l.b16 %v327
    %v1584 = vunpack.c.l.b16 %v328
    %v1585 = vunpack.c.h.b16 %v328
    %v1586 = vunpack.c.l.b16 %v329
    %v1587 = vunpack.c.h.b16 %v329
    %v1588 = vunpack.c.l.b16 %v330
    %v1589 = vunpack.c.l.b16 %v331
    %v1590 = vunpack.c.h.b16 %v331
    %v1591 = vunpack.c.l.b16 %v332
    %v1592 = vunpack.c.h.b16 %v332
    %v1593 = vunpack.c.l.b16 %v333
    %v1594 = vunpack.c.l.b16 %v334
    %v1595 = vunpack.c.h.b16 %v334
    %v1596 = vunpack.c.l.b16 %v335
    %v1597 = vunpack.c.h.b16 %v335
    %v1598 = vunpack.c.l.b16 %v336
    %v1599 = vunpack.c.l.b16 %v337
    %v1600 = vunpack.c.h.b16 %v337
    %v1601 = vunpack.c.l.b16 %v338
    %v1602 = vunpack.c.h.b16 %v338
    %v1603 = vunpack.c.l.b16 %v339
    %v1604 = vunpack.c.l.b16 %v340
    %v1605 = vunpack.c.h.b16 %v340
    %v1606 = vunpack.c.l.b16 %v341
    %v1607 = vunpack.c.h.b16 %v341
    %v1608 = vunpack.c.l.b16 %v342
    %v1609 = vunpack.c.l.b16 %v343
    %v1610 = vunpack.c.h.b16 %v343
    %v1611 = vunpack.c.l.b16 %v344
    %v1612 = vunpack.c.h.b16 %v344
    %v1613 = vunpack.c.l.b16 %v345
    %v1614 = vunpack.c.l.b16 %v346
    %v1615 = vunpack.c.h.b16 %v346
    %v1616 = vunpack.c.l.b16 %v347
    %v1617 = vunpack.c.h.b16 %v347
    %v1618 = vunpack.c.l.b16 %v348
    %v1619 = vunpack.c.l.b16 %v349
    %v1620 = vunpack.c.h.b16 %v349
    %v1621 = vunpack.c.l.b16 %v350
    %v1622 = vunpack.c.h.b16 %v350
    %v1623 = vunpack.c.l.b16 %v351
    %v1624 = vunpack.c.l.b16 %v352
    %v1625 = vunpack.c.h.b16 %v352
    %v1626 = vunpack.c.l.b16 %v353
    %v1627 = vunpack.c.h.b16 %v353
    %v1628 = vunpack.c.l.b16 %v354
    %v1629 = vunpack.c.l.b16 %v355
    %v1630 = vunpack.c.h.b16 %v355
    %v1631 = vunpack.c.l.b16 %v356
    %v1632 = vunpack.c.h.b16 %v356
    %v1633 = vunpack.c.l.b16 %v357
    %v1634 = vunpack.c.l.b16 %v358
    %v1635 = vunpack.c.h.b16 %v358
    %v1636 = vunpack.c.l.b16 %v359
    %v1637 = vunpack.c.h.b16 %v359
    %v1638 = vunpack.c.l.b16 %v360
    %v1639 = vunpack.c.l.b16 %v361
    %v1640 = vunpack.c.h.b16 %v361
    %v1641 = vunpack.c.l.b16 %v362
    %v1642 = vunpack.c.h.b16 %v362
    %v1643 = vunpack.c.l.b16 %v363
    %v1644 = vunpack.c.l.b16 %v364
    %v1645 = vunpack.c.h.b16 %v364
    %v1646 = vunpack.c.l.b16 %v365
    %v1647 = vunpack.c.h.b16 %v365
    %v1648 = vunpack.c.l.b16 %v366
    %v1649 = vunpack.c.l.b16 %v367
    %v1650 = vunpack.c.h.b16 %v367
    %v1651 = vunpack.c.l.b16 %v368
    %v1652 = vunpack.c.h.b16 %v368
    %v1653 = vunpack.c.l.b16 %v369
    %v1654 = vunpack.c.l.b16 %v370
    %v1655 = vunpack.c.h.b16 %v370
    %v1656 = vunpack.c.l.b16 %v371
    %v1657 = vunpack.c.h.b16 %v371
    %v1658 = vunpack.c.l.b16 %v372
    %v1659 = vunpack.c.l.b16 %v373
    %v1660 = vunpack.c.h.b16 %v373
    %v1661 = vunpack.c.l.b16 %v374
    %v1662 = vunpack.c.h.b16 %v374
    %v1663 = vunpack.c.l.b16 %v375
    %v1664 = vunpack.c.l.b16 %v376
    %v1665 = vunpack.c.h.b16 %v376
    %v1666 = vunpack.c.l.b16 %v377
    %v1667 = vunpack.c.h.b16 %v377
    %v1668 = vunpack.c.l.b16 %v378
    %v1669 = vunpack.c.l.b16 %v379
    %v1670 = vunpack.c.h.b16 %v379
    %v1671 = vunpack.c.l.b16 %v380
    %v1672 = vunpack.c.h.b16 %v380
    %v1673 = vunpack.c.l.b16 %v381
    %v1674 = vunpack.c.l.b16 %v382
    %v1675 = vunpack.c.h.b16 %v382
    %v1676 = vunpack.c.l.b16 %v383
    %v1677 = vunpack.c.h.b16 %v383
    %v1678 = vunpack.c.l.b16 %v384
    %v1679 = vunpack.c.l.b16 %v385
    %v1680 = vunpack.c.h.b16 %v385
    %v1681 = vunpack.c.l.b16 %v386
    %v1682 = vunpack.c.h.b16 %v386
    %v1683 = vunpack.c.l.b16 %v387
    %v1684 = vunpack.c.l.b16 %v388
    %v1685 = vunpack.c.h.b16 %v388
    %v1686 = vunpack.c.l.b16 %v389
    %v1687 = vunpack.c.h.b16 %v389
    %v1688 = vunpack.c.l.b16 %v390
    %v1689 = vunpack.c.l.b16 %v391
    %v1690 = vunpack.c.h.b16 %v391
    %v1691 = vunpack.c.l.b16 %v392
    %v1692 = vunpack.c.h.b16 %v392
    %v1693 = vunpack.c.l.b16 %v393
    %v1694 = vunpack.c.l.b16 %v394
    %v1695 = vunpack.c.h.b16 %v394
    %v1696 = vunpack.c.l.b16 %v395
    %v1697 = vunpack.c.h.b16 %v395
    %v1698 = vunpack.c.l.b16 %v396
    %v1699 = vunpack.c.l.b16 %v397
    %v1700 = vunpack.c.h.b16 %v397
    %v1701 = vunpack.c.l.b16 %v398
    %v1702 = vunpack.c.h.b16 %v398
    %v1703 = vunpack.c.l.b16 %v399
    %v1704 = vunpack.c.l.b16 %v400
    %v1705 = vunpack.c.h.b16 %v400
    %v1706 = vunpack.c.l.b16 %v401
    %v1707 = vunpack.c.h.b16 %v401
    %v1708 = vunpack.c.l.b16 %v402
    %v1709 = vunpack.c.l.b16 %v403
    %v1710 = vunpack.c.h.b16 %v403
    %v1711 = vunpack.c.l.b16 %v404
    %v1712 = vunpack.c.h.b16 %v404
    %v1713 = vunpack.c.l.b16 %v405
    %v1714 = vunpack.c.l.b16 %v406
    %v1715 = vunpack.c.h.b16 %v406
    %v1716 = vunpack.c.l.b16 %v407
    %v1717 = vunpack.c.h.b16 %v407
    %v1718 = vunpack.c.l.b16 %v408
    %v1719 = vunpack.c.l.b16 %v409
    %v1720 = vunpack.c.h.b16 %v409
    %v1721 = vunpack.c.l.b16 %v410
    %v1722 = vunpack.c.h.b16 %v410
    %v1723 = vunpack.c.l.b16 %v411
    %v1724 = vunpack.c.l.b16 %v412
    %v1725 = vunpack.c.h.b16 %v412
    %v1726 = vunpack.c.l.b16 %v413
    %v1727 = vunpack.c.h.b16 %v413
    %v1728 = vunpack.c.l.b16 %v414
    %v1729 = vunpack.c.l.b16 %v415
    %v1730 = vunpack.c.h.b16 %v415
    %v1731 = vunpack.c.l.b16 %v416
    %v1732 = vunpack.c.h.b16 %v416
    %v1733 = vunpack.c.l.b16 %v417
    %v1734 = vunpack.c.l.b16 %v418
    %v1735 = vunpack.c.h.b16 %v418
    %v1736 = vunpack.c.l.b16 %v419
    %v1737 = vunpack.c.h.b16 %v419
    %v1738 = vunpack.c.l.b16 %v420
    %v1739 = vunpack.c.l.b16 %v421
    %v1740 = vunpack.c.h.b16 %v421
    %v1741 = vunpack.c.l.b16 %v422
    %v1742 = vunpack.c.h.b16 %v422
    %v1743 = vunpack.c.l.b16 %v423
    %v1744 = vunpack.c.l.b16 %v424
    %v1745 = vunpack.c.h.b16 %v424
    %v1746 = vunpack.c.l.b16 %v425
    %v1747 = vunpack.c.h.b16 %v425
    %v1748 = vunpack.c.l.b16 %v426
    %v1749 = vunpack.c.l.b16 %v427
    %v1750 = vunpack.c.h.b16 %v427
    %v1751 = vunpack.c.l.b16 %v428
    %v1752 = vunpack.c.h.b16 %v428
    %v1753 = vunpack.c.l.b16 %v429
    %v1754 = vunpack.c.l.b16 %v430
    %v1755 = vunpack.c.h.b16 %v430
    %v1756 = vunpack.c.l.b16 %v431
    %v1757 = vunpack.c.h.b16 %v431
    %v1758 = vunpack.c.l.b16 %v432
    %v1759 = vunpack.c.l.b16 %v433
    %v1760 = vunpack.c.h.b16 %v433
    %v1761 = vunpack.c.l.b16 %v434
    %v1762 = vunpack.c.h.b16 %v434
    %v1763 = vunpack.c.l.b16 %v435
    %v1764 = vunpack.c.l.b16 %v436
    %v1765 = vunpack.c.h.b16 %v436
    %v1766 = vunpack.c.l.b16 %v437
    %v1767 = vunpack.c.h.b16 %v437
    %v1768 = vunpack.c.l.b16 %v438
    %v1769 = vunpack.c.l.b16 %v439
    %v1770 = vunpack.c.h.b16 %v439
    %v1771 = vunpack.c.l.b16 %v440
    %v1772 = vunpack.c.h.b16 %v440
    %v1773 = vunpack.c.l.b16 %v441
    %v1774 = vunpack.c.l.b16 %v442
    %v1775 = vunpack.c.h.b16 %v442
    %v1776 = vunpack.c.l.b16 %v443
    %v1777 = vunpack.c.h.b16 %v443
    %v1778 = vunpack.c.l.b16 %v444
    %v1779 = vunpack.c.l.b16 %v445
    %v1780 = vunpack.c.h.b16 %v445
    %v1781 = vunpack.c.l.b16 %v446
    %v1782 = vunpack.c.h.b16 %v446
    %v1783 = vunpack.c.l.b16 %v447
    %v1784 = vunpack.c.l.b16 %v448
    %v1785 = vunpack.c.h.b16 %v448
    %v1786 = vunpack.c.l.b16 %v449
    %v1787 = vunpack.c.h.b16 %v449
    %v1788 = vunpack.c.l.b16 %v450
    %v1789 = vunpack.c.l.b16 %v451
    %v1790 = vunpack.c.h.b16 %v451
    %v1791 = vunpack.c.l.b16 %v452
    %v1792 = vunpack.c.h.b16 %v452
    %v1793 = vunpack.c.l.b16 %v453
    %v1794 = vunpack.c.l.b16 %v454
    %v1795 = vunpack.c.h.b16 %v454
    %v1796 = vunpack.c.l.b16 %v455
    %v1797 = vunpack.c.h.b16 %v455
    %v1798 = vunpack.c.l.b16 %v456
    %v1799 = vunpack.c.l.b16 %v457
    %v1800 = vunpack.c.h.b16 %v457
    %v1801 = vunpack.c.l.b16 %v458
    %v1802 = vunpack.c.h.b16 %v458
    %v1803 = vunpack.c.l.b16 %v459
    %v1804 = vunpack.c.l.b16 %v460
    %v1805 = vunpack.c.h.b16 %v460
    %v1806 = vunpack.c.l.b16 %v461
    %v1807 = vunpack.c.h.b16 %v461
    %v1808 = vunpack.c.l.b16 %v462
    %v1809 = vunpack.c.l.b16 %v463
    %v1810 = vunpack.c.h.b16 %v463
    %v1811 = vunpack.c.l.b16 %v464
    %v1812 = vunpack.c.h.b16 %v464
    %v1813 = vunpack.c.l.b16 %v465
    %v1814 = vunpack.c.l.b16 %v466
    %v1815 = vunpack.c.h.b16 %v466
    %v1816 = vunpack.c.l.b16 %v467
    %v1817 = vunpack.c.h.b16 %v467
    %v1818 = vunpack.c.l.b16 %v468
    %v1819 = vunpack.c.l.b16 %v469
    %v1820 = vunpack.c.h.b16 %v469
    %v1821 = vunpack.c.l.b16 %v470
    %v1822 = vunpack.c.h.b16 %v470
    %v1823 = vunpack.c.l.b16 %v471
    %v1824 = vunpack.c.l.b16 %v472
    %v1825 = vunpack.c.h.b16 %v472
    %v1826 = vunpack.c.l.b16 %v473
    %v1827 = vunpack.c.h.b16 %v473
    %v1828 = vunpack.c.l.b16 %v474
    %v1829 = vunpack.c.l.b16 %v475
    %v1830 = vunpack.c.h.b16 %v475
    %v1831 = vunpack.c.l.b16 %v476
    %v1832 = vunpack.c.h.b16 %v476
    %v1833 = vunpack.c.l.b16 %v477
    %v1834 = vunpack.c.l.b16 %v478
    %v1835 = vunpack.c.h.b16 %v478
    %v1836 = vunpack.c.l.b16 %v479
    %v1837 = vunpack.c.h.b16 %v479
    %v1838 = vunpack.c.l.b16 %v480
    %v1839 = vunpack.c.l.b16 %v481
    %v1840 = vunpack.c.h.b16 %v481
    %v1841 = vunpack.c.l.b16 %v482
    %v1842 = vunpack.c.h.b16 %v482
    %v1843 = vunpack.c.l.b16 %v483
    %v1844 = vunpack.c.l.b16 %v484
    %v1845 = vunpack.c.h.b16 %v484
    %v1846 = vunpack.c.l.b16 %v485
    %v1847 = vunpack.c.h.b16 %v485
    %v1848 = vunpack.c.l.b16 %v486
    %v1849 = vunpack.c.l.b16 %v487
    %v1850 = vunpack.c.h.b16 %v487
    %v1851 = vunpack.c.l.b16 %v488
    %v1852 = vunpack.c.h.b16 %v488
    %v1853 = vunpack.c.l.b16 %v489
    %v1854 = vunpack.c.l.b16 %v490
    %v1855 = vunpack.c.h.b16 %v490
    %v1856 = vunpack.c.l.b16 %v491
    %v1857 = vunpack.c.h.b16 %v491
    %v1858 = vunpack.c.l.b16 %v492
    %v1859 = vunpack.c.l.b16 %v493
    %v1860 = vunpack.c.h.b16 %v493
    %v1861 = vunpack.c.l.b16 %v494
    %v1862 = vunpack.c.h.b16 %v494
    %v1863 = vunpack.c.l.b16 %v495
    %v1864 = vunpack.c.l.b16 %v496
    %v1865 = vunpack.c.h.b16 %v496
    %v1866 = vunpack.c.l.b16 %v497
    %v1867 = vunpack.c.h.b16 %v497
    %v1868 = vunpack.c.l.b16 %v498
    %v1869 = vunpack.c.l.b16 %v499
    %v1870 = vunpack.c.h.b16 %v499
    %v1871 = vunpack.c.l.b16 %v500
    %v1872 = vunpack.c.h.b16 %v500
    %v1873 = vunpack.c.l.b16 %v501
    %v1874 = vunpack.c.l.b16 %v502
    %v1875 = vunpack.c.h.b16 %v502
    %v1876 = vunpack.c.l.b16 %v503
    %v1877 = vunpack.c.h.b16 %v503
    %v1878 = vunpack.c.l.b16 %v504
    %v1879 = vunpack.c.l.b16 %v505
    %v1880 = vunpack.c.h.b16 %v505
    %v1881 = vunpack.c.l.b16 %v506
    %v1882 = vunpack.c.h.b16 %v506
    %v1883 = vunpack.c.l.b16 %v507
    %v1884 = vunpack.c.l.b16 %v508
    %v1885 = vunpack.c.h.b16 %v508
    %v1886 = vunpack.c.l.b16 %v509
    %v1887 = vunpack.c.h.b16 %v509
    %v1888 = vunpack.c.l.b16 %v510
    %v1889 = vunpack.c.l.b16 %v511
    %v1890 = vunpack.c.h.b16 %v511
    %v1891 = vunpack.c.l.b16 %v512
    %v1892 = vunpack.c.h.b16 %v512
    %v1893 = vunpack.c.l.b16 %v513
    %v1894 = vunpack.c.l.b16 %v514
    %v1895 = vunpack.c.h.b16 %v514
    %v1896 = vunpack.c.l.b16 %v515
    %v1897 = vunpack.c.h.b16 %v515
    %v1898 = vunpack.c.l.b16 %v516
    %v1899 = vunpack.c.l.b16 %v517
    %v1900 = vunpack.c.h.b16 %v517
    %v1901 = vunpack.c.l.b16 %v518
    %v1902 = vunpack.c.h.b16 %v518
    %v1903 = vunpack.c.l.b16 %v519
    %v1904 = vunpack.c.l.b16 %v520
    %v1905 = vunpack.c.h.b16 %v520
    %v1906 = vunpack.c.l.b16 %v521
    %v1907 = vunpack.c.h.b16 %v521
    %v1908 = vunpack.c.l.b16 %v522
    %v1909 = vunpack.c.l.b16 %v523
    %v1910 = vunpack.c.h.b16 %v523
    %v1911 = vunpack.c.l.b16 %v524
    %v1912 = vunpack.c.h.b16 %v524
    %v1913 = vunpack.c.l.b16 %v525
    %v1914 = vunpack.c.l.b16 %v526
    %v1915 = vunpack.c.h.b16 %v526
    %v1916 = vunpack.c.l.b16 %v527
    %v1917 = vunpack.c.h.b16 %v527
    %v1918 = vunpack.c.l.b16 %v528
    %v1919 = vunpack.c.l.b16 %v529
    %v1920 = vunpack.c.h.b16 %v529
    %v1921 = vunpack.c.l.b16 %v530
    %v1922 = vunpack.c.h.b16 %v530
    %v1923 = vunpack.c.l.b16 %v531
    %v1924 = vunpack.c.l.b16 %v532
    %v1925 = vunpack.c.h.b16 %v532
    %v1926 = vunpack.c.l.b16 %v533
    %v1927 = vunpack.c.h.b16 %v533
    %v1928 = vunpack.c.l.b16 %v534
    %v1929 = vunpack.c.l.b16 %v535
    %v1930 = vunpack.c.h.b16 %v535
    %v1931 = vunpack.c.l.b16 %v536
    %v1932 = vunpack.c.h.b16 %v536
    %v1933 = vunpack.c.l.b16 %v537
    %v1934 = vunpack.c.l.b16 %v538
    %v1935 = vunpack.c.h.b16 %v538
    %v1936 = vunpack.c.l.b16 %v539
    %v1937 = vunpack.c.h.b16 %v539
    %v1938 = vunpack.c.l.b16 %v540
    %v1939 = vunpack.c.l.b16 %v541
    %v1940 = vunpack.c.h.b16 %v541
    %v1941 = vunpack.c.l.b16 %v542
    %v1942 = vunpack.c.h.b16 %v542
    %v1943 = vunpack.c.l.b16 %v543
    %v1944 = vunpack.c.l.b16 %v544
    %v1945 = vunpack.c.h.b16 %v544
    %v1946 = vunpack.c.l.b16 %v545
    %v1947 = vunpack.c.h.b16 %v545
    %v1948 = vunpack.c.l.b16 %v546
    %v1949 = vunpack.c.l.b16 %v547
    %v1950 = vunpack.c.h.b16 %v547
    %v1951 = vunpack.c.l.b16 %v548
    %v1952 = vunpack.c.h.b16 %v548
    %v1953 = vunpack.c.l.b16 %v549
    %v1954 = vunpack.c.l.b16 %v550
    %v1955 = vunpack.c.h.b16 %v550
    %v1956 = vunpack.c.l.b16 %v551
    %v1957 = vunpack.c.h.b16 %v551
    %v1958 = vunpack.c.l.b16 %v552
    %v1959 = vunpack.c.l.b16 %v553
    %v1960 = vunpack.c.h.b16 %v553
    %v1961 = vunpack.c.l.b16 %v554
    %v1962 = vunpack.c.h.b16 %v554
    %v1963 = vunpack.c.l.b16 %v555
    %v1964 = vunpack.c.l.b16 %v556
    %v1965 = vunpack.c.h.b16 %v556
    %v1966 = vunpack.c.l.b16 %v557
    %v1967 = vunpack.c.h.b16 %v557
    %v1968 = vunpack.c.l.b16 %v558
    %v1969 = vunpack.c.l.b16 %v559
    %v1970 = vunpack.c.h.b16 %v559
    %v1971 = vunpack.c.l.b16 %v560
    %v1972 = vunpack.c.h.b16 %v560
    %v1973 = vunpack.c.l.b16 %v561
    %v1974 = vunpack.c.l.b16 %v562
    %v1975 = vunpack.c.h.b16 %v562
    %v1976 = vunpack.c.l.b16 %v563
    %v1977 = vunpack.c.h.b16 %v563
    %v1978 = vunpack.c.l.b16 %v564
    %v1979 = vunpack.c.l.b16 %v565
    %v1980 = vunpack.c.h.b16 %v565
    %v1981 = vunpack.c.l.b16 %v566
    %v1982 = vunpack.c.h.b16 %v566
    %v1983 = vunpack.c.l.b16 %v567
    %v1984 = vunpack.c.l.b16 %v568
    %v1985 = vunpack.c.h.b16 %v568
    %v1986 = vunpack.c.l.b16 %v569
    %v1987 = vunpack.c.h.b16 %v569
    %v1988 = vunpack.c.l.b16 %v570
    %v1989 = vunpack.c.l.b16 %v571
    %v1990 = vunpack.c.h.b16 %v571
    %v1991 = vunpack.c.l.b16 %v572
    %v1992 = vunpack.c.h.b16 %v572
    %v1993 = vunpack.c.l.b16 %v573
    %v1994 = vunpack.c.l.b16 %v574
    %v1995 = vunpack.c.h.b16 %v574
    %v1996 = vunpack.c.l.b16 %v575
    %v1997 = vunpack.c.h.b16 %v575
    %v1998 = vunpack.c.l.b16 %v576
    %v1999 = vunpack.c.l.b16 %v577
    %v2000 = vunpack.c.h.b16 %v577
    %v2001 = vunpack.c.l.b16 %v578
    %v2002 = vunpack.c.h.b16 %v578
    %v2003 = vunpack.c.l.b16 %v579
    %v2004 = vunpack.c.l.b16 %v580
    %v2005 = vunpack.c.h.b16 %v580
    %v2006 = vunpack.c.l.b16 %v581
    %v2007 = vunpack.c.h.b16 %v581
    %v2008 = vunpack.c.l.b16 %v582
    %v2009 = vunpack.c.l.b16 %v583
    %v2010 = vunpack.c.h.b16 %v583
    %v2011 = vunpack.c.l.b16 %v584
    %v2012 = vunpack.c.h.b16 %v584
    %v2013 = vunpack.c.l.b16 %v585
    %v2014 = vunpack.c.l.b16 %v586
    %v2015 = vunpack.c.h.b16 %v586
    %v2016 = vunpack.c.l.b16 %v587
    %v2017 = vunpack.c.h.b16 %v587
    %v2018 = vunpack.c.l.b16 %v588
    %v2019 = vunpack.c.l.b16 %v589
    %v2020 = vunpack.c.h.b16 %v589
    %v2021 = vunpack.c.l.b16 %v590
    %v2022 = vunpack.c.h.b16 %v590
    %v2023 = vunpack.c.l.b16 %v591
    %v2024 = vunpack.c.l.b16 %v592
    %v2025 = vunpack.c.h.b16 %v592
    %v2026 = vunpack.c.l.b16 %v593
    %v2027 = vunpack.c.h.b16 %v593
    %v2028 = vunpack.c.l.b16 %v594
    %v2029 = vunpack.c.l.b16 %v595
    %v2030 = vunpack.c.h.b16 %v595
    %v2031 = vunpack.c.l.b16 %v596
    %v2032 = vunpack.c.h.b16 %v596
    %v2033 = vunpack.c.l.b16 %v597
    %v2034 = vunpack.c.l.b16 %v598
    %v2035 = vunpack.c.h.b16 %v598
    %v2036 = vunpack.c.l.b16 %v599
    %v2037 = vunpack.c.h.b16 %v599
    %v2038 = vunpack.c.l.b16 %v600
    %v2039 = vunpack.c.l.b16 %v601
    %v2040 = vunpack.c.h.b16 %v601
    %v2041 = vunpack.c.l.b16 %v602
    %v2042 = vunpack.c.h.b16 %v602
    %v2043 = vunpack.c.l.b16 %v603
    %v2044 = vunpack.c.l.b16 %v604
    %v2045 = vunpack.c.h.b16 %v604
    %v2046 = vunpack.c.l.b16 %v605
    %v2047 = vunpack.c.h.b16 %v605
    %v2048 = vunpack.c.l.b16 %v606
    %v2049 = vunpack.c.l.b16 %v607
    %v2050 = vunpack.c.h.b16 %v607
    %v2051 = vunpack.c.l.b16 %v608
    %v2052 = vunpack.c.h.b16 %v608
    %v2053 = vunpack.c.l.b16 %v609
    %v2054 = vunpack.c.l.b16 %v610
    %v2055 = vunpack.c.h.b16 %v610
    %v2056 = vunpack.c.l.b16 %v611
    %v2057 = vunpack.c.h.b16 %v611
    %v2058 = vunpack.c.l.b16 %v612
    %v2059 = vunpack.c.l.b16 %v613
    %v2060 = vunpack.c.h.b16 %v613
    %v2061 = vunpack.c.l.b16 %v614
    %v2062 = vunpack.c.h.b16 %v614
    %v2063 = vunpack.c.l.b16 %v615
    %v2064 = vunpack.c.l.b16 %v616
    %v2065 = vunpack.c.h.b16 %v616
    %v2066 = vunpack.c.l.b16 %v617
    %v2067 = vunpack.c.h.b16 %v617
    %v2068 = vunpack.c.l.b16 %v618
    %v2069 = vunpack.c.l.b16 %v619
    %v2070 = vunpack.c.h.b16 %v619
    %v2071 = vunpack.c.l.b16 %v620
    %v2072 = vunpack.c.h.b16 %v620
    %v2073 = vunpack.c.l.b16 %v621
    %v2074 = vunpack.c.l.b16 %v622
    %v2075 = vunpack.c.h.b16 %v622
    %v2076 = vunpack.c.l.b16 %v623
    %v2077 = vunpack.c.h.b16 %v623
    %v2078 = vunpack.c.l.b16 %v624
    %v2079 = vunpack.c.l.b16 %v625
    %v2080 = vunpack.c.h.b16 %v625
    %v2081 = vunpack.c.l.b16 %v626
    %v2082 = vunpack.c.h.b16 %v626
    %v2083 = vunpack.c.l.b16 %v627
    %v2084 = vunpack.c.l.b16 %v628
    %v2085 = vunpack.c.h.b16 %v628
    %v2086 = vunpack.c.l.b16 %v629
    %v2087 = vunpack.c.h.b16 %v629
    %v2088 = vunpack.c.l.b16 %v630
    %v2089 = vunpack.c.l.b16 %v631
    %v2090 = vunpack.c.h.b16 %v631
    %v2091 = vunpack.c.l.b16 %v632
    %v2092 = vunpack.c.h.b16 %v632
    %v2093 = vunpack.c.l.b16 %v633
    %v2094 = vunpack.c.l.b16 %v634
    %v2095 = vunpack.c.h.b16 %v634
    %v2096 = vunpack.c.l.b16 %v635
    %v2097 = vunpack.c.h.b16 %v635
    %v2098 = vunpack.c.l.b16 %v636
    %v2099 = vunpack.c.l.b16 %v637
    %v2100 = vunpack.c.h.b16 %v637
    %v2101 = vunpack.c.l.b16 %v638
    %v2102 = vunpack.c.h.b16 %v638
    %v2103 = vunpack.c.l.b16 %v639
    %v2104 = vunpack.c.l.b16 %v640
    %v2105 = vunpack.c.h.b16 %v640
    %v2106 = vunpack.c.l.b16 %v641
    %v2107 = vunpack.c.h.b16 %v641
    %v2108 = vunpack.c.l.b16 %v642
    %v2109 = vunpack.c.l.b16 %v643
    %v2110 = vunpack.c.h.b16 %v643
    %v2111 = vunpack.c.l.b16 %v644
    %v2112 = vunpack.c.h.b16 %v644
    %v2113 = vunpack.c.l.b16 %v645
    %v2114 = vunpack.c.l.b16 %v646
    %v2115 = vunpack.c.h.b16 %v646
    %v2116 = vunpack.c.l.b16 %v647
    %v2117 = vunpack.c.h.b16 %v647
    %v2118 = vunpack.c.l.b16 %v648
    %v2119 = vunpack.c.l.b16 %v649
    %v2120 = vunpack.c.h.b16 %v649
    %v2121 = vunpack.c.l.b16 %v650
    %v2122 = vunpack.c.h.b16 %v650
    %v2123 = vunpack.c.l.b16 %v651
    %v2124 = vunpack.c.l.b16 %v652
    %v2125 = vunpack.c.h.b16 %v652
    %v2126 = vunpack.c.l.b16 %v653
    %v2127 = vunpack.c.h.b16 %v653
    %v2128 = vunpack.c.l.b16 %v654
    %v2129 = vunpack.c.l.b16 %v655
    %v2130 = vunpack.c.h.b16 %v655
    %v2131 = vunpack.c.l.b16 %v656
    %v2132 = vunpack.c.h.b16 %v656
    %v2133 = vunpack.c.l.b16 %v657
    %v2134 = vunpack.c.l.b16 %v658
    %v2135 = vunpack.c.h.b16 %v658
    %v2136 = vunpack.c.l.b16 %v659
    %v2137 = vunpack.c.h.b16 %v659
    %v2138 = vunpack.c.l.b16 %v660
    %v2139 = vunpack.c.l.b16 %v661
    %v2140 = vunpack.c.h.b16 %v661
    %v2141 = vunpack.c.l.b16 %v662
    %v2142 = vunpack.c.h.b16 %v662
    %v2143 = vunpack.c.l.b16 %v663
    %v2144 = vpack.c.b16 %v1349, %v1344
    %v2145 = vpack.c.b16 %v1350, %v1345
    %v2146 = vpack.c.b16 %v1351, %v1346
    %v2147 = vpack.c.b16 %v1352, %v1347
    %v2148 = vpack.c.b16 %v1353, %v1348
    %v2149 = vpack.c.b16 %v1359, %v1354
    %v2150 = vpack.c.b16 %v1360, %v1355
    %v2151 = vpack.c.b16 %v1361, %v1356
    %v2152 = vpack.c.b16 %v1362, %v1357
    %v2153 = vpack.c.b16 %v1363, %v1358
    %v2154 = vpack.c.b16 %v1369, %v1364
    %v2155 = vpack.c.b16 %v1370, %v1365
    %v2156 = vpack.c.b16 %v1371, %v1366
    %v2157 = vpack.c.b16 %v1372, %v1367
    %v2158 = vpack.c.b16 %v1373, %v1368
    %v2159 = vpack.c.b16 %v1379, %v1374
    %v2160 = vpack.c.b16 %v1380, %v1375
    %v2161 = vpack.c.b16 %v1381, %v1376
    %v2162 = vpack.c.b16 %v1382, %v1377
    %v2163 = vpack.c.b16 %v1383, %v1378
    %v2164 = vpack.c.b16 %v1389, %v1384
    %v2165 = vpack.c.b16 %v1390, %v1385
    %v2166 = vpack.c.b16 %v1391, %v1386
    %v2167 = vpack.c.b16 %v1392, %v1387
    %v2168 = vpack.c.b16 %v1393, %v1388
    %v2169 = vpack.c.b16 %v1399, %v1394
    %v2170 = vpack.c.b16 %v1400, %v1395
    %v2171 = vpack.c.b16 %v1401, %v1396
    %v2172 = vpack.c.b16 %v1402, %v1397
    %v2173 = vpack.c.b16 %v1403, %v1398
    %v2174 = vpack.c.b16 %v1409, %v1404
    %v2175 = vpack.c.b16 %v1410, %v1405
    %v2176 = vpack.c.b16 %v1411, %v1406
    %v2177 = vpack.c.b16 %v1412, %v1407
    %v2178 = vpack.c.b16 %v1413, %v1408
    %v2179 = vpack.c.b16 %v1419, %v1414
    %v2180 = vpack.c.b16 %v1420, %v1415
    %v2181 = vpack.c.b16 %v1421, %v1416
    %v2182 = vpack.c.b16 %v1422, %v1417
    %v2183 = vpack.c.b16 %v1423, %v1418
    %v2184 = vpack.c.b16 %v1429, %v1424
    %v2185 = vpack.c.b16 %v1430, %v1425
    %v2186 = vpack.c.b16 %v1431, %v1426
    %v2187 = vpack.c.b16 %v1432, %v1427
    %v2188 = vpack.c.b16 %v1433, %v1428
    %v2189 = vpack.c.b16 %v1439, %v1434
    %v2190 = vpack.c.b16 %v1440, %v1435
    %v2191 = vpack.c.b16 %v1441, %v1436
    %v2192 = vpack.c.b16 %v1442, %v1437
    %v2193 = vpack.c.b16 %v1443, %v1438
    %v2194 = vpack.c.b16 %v1449, %v1444
    %v2195 = vpack.c.b16 %v1450, %v1445
    %v2196 = vpack.c.b16 %v1451, %v1446
    %v2197 = vpack.c.b16 %v1452, %v1447
    %v2198 = vpack.c.b16 %v1453, %v1448
    %v2199 = vpack.c.b16 %v1459, %v1454
    %v2200 = vpack.c.b16 %v1460, %v1455
    %v2201 = vpack.c.b16 %v1461, %v1456
    %v2202 = vpack.c.b16 %v1462, %v1457
    %v2203 = vpack.c.b16 %v1463, %v1458
    %v2204 = vpack.c.b16 %v1469, %v1464
    %v2205 = vpack.c.b16 %v1470, %v1465
    %v2206 = vpack.c.b16 %v1471, %v1466
    %v2207 = vpack.c.b16 %v1472, %v1467
    %v2208 = vpack.c.b16 %v1473, %v1468
    %v2209 = vpack.c.b16 %v1479, %v1474
    %v2210 = vpack.c.b16 %v1480, %v1475
    %v2211 = vpack.c.b16 %v1481, %v1476
    %v2212 = vpack.c.b16 %v1482, %v1477
    %v2213 = vpack.c.b16 %v1483, %v1478
    %v2214 = vpack.c.b16 %v1489, %v1484
    %v2215 = vpack.c.b16 %v1490, %v1485
    %v2216 = vpack.c.b16 %v1491, %v1486
    %v2217 = vpack.c.b16 %v1492, %v1487
    %v2218 = vpack.c.b16 %v1493, %v1488
    %v2219 = vpack.c.b16 %v1499, %v1494
    %v2220 = vpack.c.b16 %v1500, %v1495
    %v2221 = vpack.c.b16 %v1501, %v1496
    %v2222 = vpack.c.b16 %v1502, %v1497
    %v2223 = vpack.c.b16 %v1503, %v1498
    %v2224 = vpack.c.b16 %v1509, %v1504
    %v2225 = vpack.c.b16 %v1510, %v1505
    %v2226 = vpack.c.b16 %v1511, %v1506
    %v2227 = vpack.c.b16 %v1512, %v1507
    %v2228 = vpack.c.b16 %v1513, %v1508
    %v2229 = vpack.c.b16 %v1519, %v1514
    %v2230 = vpack.c.b16 %v1520, %v1515
    %v2231 = vpack.c.b16 %v1521, %v1516
    %v2232 = vpack.c.b16 %v1522, %v1517
    %v2233 = vpack.c.b16 %v1523, %v1518
    %v2234 = vpack.c.b16 %v1529, %v1524
    %v2235 = vpack.c.b16 %v1530, %v1525
    %v2236 = vpack.c.b16 %v1531, %v1526
    %v2237 = vpack.c.b16 %v1532, %v1527
    %v2238 = vpack.c.b16 %v1533, %v1528
    %v2239 = vpack.c.b16 %v1539, %v1534
    %v2240 = vpack.c.b16 %v1540, %v1535
    %v2241 = vpack.c.b16 %v1541, %v1536
    %v2242 = vpack.c.b16 %v1542, %v1537
    %v2243 = vpack.c.b16 %v1543, %v1538
    %v2244 = vpack.c.b16 %v1549, %v1544
    %v2245 = vpack.c.b16 %v1550, %v1545
    %v2246 = vpack.c.b16 %v1551, %v1546
    %v2247 = vpack.c.b16 %v1552, %v1547
    %v2248 = vpack.c.b16 %v1553, %v1548
    %v2249 = vpack.c.b16 %v1559, %v1554
    %v2250 = vpack.c.b16 %v1560, %v1555
    %v2251 = vpack.c.b16 %v1561, %v1556
    %v2252 = vpack.c.b16 %v1562, %v1557
    %v2253 = vpack.c.b16 %v1563, %v1558
    %v2254 = vpack.c.b16 %v1569, %v1564
    %v2255 = vpack.c.b16 %v1570, %v1565
    %v2256 = vpack.c.b16 %v1571, %v1566
    %v2257 = vpack.c.b16 %v1572, %v1567
    %v2258 = vpack.c.b16 %v1573, %v1568
    %v2259 = vpack.c.b16 %v1579, %v1574
    %v2260 = vpack.c.b16 %v1580, %v1575
    %v2261 = vpack.c.b16 %v1581, %v1576
    %v2262 = vpack.c.b16 %v1582, %v1577
    %v2263 = vpack.c.b16 %v1583, %v1578
    %v2264 = vpack.c.b16 %v1589, %v1584
    %v2265 = vpack.c.b16 %v1590, %v1585
    %v2266 = vpack.c.b16 %v1591, %v1586
    %v2267 = vpack.c.b16 %v1592, %v1587
    %v2268 = vpack.c.b16 %v1593, %v1588
    %v2269 = vpack.c.b16 %v1599, %v1594
    %v2270 = vpack.c.b16 %v1600, %v1595
    %v2271 = vpack.c.b16 %v1601, %v1596
    %v2272 = vpack.c.b16 %v1602, %v1597
    %v2273 = vpack.c.b16 %v1603, %v1598
    %v2274 = vpack.c.b16 %v1609, %v1604
    %v2275 = vpack.c.b16 %v1610, %v1605
    %v2276 = vpack.c.b16 %v1611, %v1606
    %v2277 = vpack.c.b16 %v1612, %v1607
    %v2278 = vpack.c.b16 %v1613, %v1608
    %v2279 = vpack.c.b16 %v1619, %v1614
    %v2280 = vpack.c.b16 %v1620, %v1615
    %v2281 = vpack.c.b16 %v1621, %v1616
    %v2282 = vpack.c.b16 %v1622, %v1617
    %v2283 = vpack.c.b16 %v1623, %v1618
    %v2284 = vpack.c.b16 %v1629, %v1624
    %v2285 = vpack.c.b16 %v1630, %v1625
    %v2286 = vpack.c.b16 %v1631, %v1626
    %v2287 = vpack.c.b16 %v1632, %v1627
    %v2288 = vpack.c.b16 %v1633, %v1628
    %v2289 = vpack.c.b16 %v1639, %v1634
    %v2290 = vpack.c.b16 %v1640, %v1635
    %v2291 = vpack.c.b16 %v1641, %v1636
    %v2292 = vpack.c.b16 %v1642, %v1637
    %v2293 = vpack.c.b16 %v1643, %v1638
    %v2294 = vpack.c.b16 %v1649, %v1644
    %v2295 = vpack.c.b16 %v1650, %v1645
    %v2296 = vpack.c.b16 %v1651, %v1646
    %v2297 = vpack.c.b16 %v1652, %v1647
    %v2298 = vpack.c.b16 %v1653, %v1648
    %v2299 = vpack.c.b16 %v1659, %v1654
    %v2300 = vpack.c.b16 %v1660, %v1655
    %v2301 = vpack.c.b16 %v1661, %v1656
    %v2302 = vpack.c.b16 %v1662, %v1657
    %v2303 = vpack.c.b16 %v1663, %v1658
    %v2304 = vpack.c.b16 %v1669, %v1664
    %v2305 = vpack.c.b16 %v1670, %v1665
    %v2306 = vpack.c.b16 %v1671, %v1666
    %v2307 = vpack.c.b16 %v1672, %v1667
    %v2308 = vpack.c.b16 %v1673, %v1668
    %v2309 = vpack.c.b16 %v1679, %v1674
    %v2310 = vpack.c.b16 %v1680, %v1675
    %v2311 = vpack.c.b16 %v1681, %v1676
    %v2312 = vpack.c.b16 %v1682, %v1677
    %v2313 = vpack.c.b16 %v1683, %v1678
    %v2314 = vpack.c.b16 %v1689, %v1684
    %v2315 = vpack.c.b16 %v1690, %v1685
    %v2316 = vpack.c.b16 %v1691, %v1686
    %v2317 = vpack.c.b16 %v1692, %v1687
    %v2318 = vpack.c.b16 %v1693, %v1688
    %v2319 = vpack.c.b16 %v1699, %v1694
    %v2320 = vpack.c.b16 %v1700, %v1695
    %v2321 = vpack.c.b16 %v1701, %v1696
    %v2322 = vpack.c.b16 %v1702, %v1697
    %v2323 = vpack.c.b16 %v1703, %v1698
    %v2324 = vpack.c.b16 %v1709, %v1704
    %v2325 = vpack.c.b16 %v1710, %v1705
    %v2326 = vpack.c.b16 %v1711, %v1706
    %v2327 = vpack.c.b16 %v1712, %v1707
    %v2328 = vpack.c.b16 %v1713, %v1708
    %v2329 = vpack.c.b16 %v1719, %v1714
    %v2330 = vpack.c.b16 %v1720, %v1715
    %v2331 = vpack.c.b16 %v1721, %v1716
    %v2332 = vpack.c.b16 %v1722, %v1717
    %v2333 = vpack.c.b16 %v1723, %v1718
    %v2334 = vpack.c.b16 %v1729, %v1724
    %v2335 = vpack.c.b16 %v1730, %v1725
    %v2336 = vpack.c.b16 %v1731, %v1726
    %v2337 = vpack.c.b16 %v1732, %v1727
    %v2338 = vpack.c.b16 %v1733, %v1728
    %v2339 = vpack.c.b16 %v1739, %v1734
    %v2340 = vpack.c.b16 %v1740, %v1735
    %v2341 = vpack.c.b16 %v1741, %v1736
    %v2342 = vpack.c.b16 %v1742, %v1737
    %v2343 = vpack.c.b16 %v1743, %v1738
    %v2344 = vpack.c.b16 %v1749, %v1744
    %v2345 = vpack.c.b16 %v1750, %v1745
    %v2346 = vpack.c.b16 %v1751, %v1746
    %v2347 = vpack.c.b16 %v1752, %v1747
    %v2348 = vpack.c.b16 %v1753, %v1748
    %v2349 = vpack.c.b16 %v1759, %v1754
    %v2350 = vpack.c.b16 %v1760, %v1755
    %v2351 = vpack.c.b16 %v1761, %v1756
    %v2352 = vpack.c.b16 %v1762, %v1757
    %v2353 = vpack.c.b16 %v1763, %v1758
    %v2354 = vpack.c.b16 %v1769, %v1764
    %v2355 = vpack.c.b16 %v1770, %v1765
    %v2356 = vpack.c.b16 %v1771, %v1766
    %v2357 = vpack.c.b16 %v1772, %v1767
    %v2358 = vpack.c.b16 %v1773, %v1768
    %v2359 = vpack.c.b16 %v1779, %v1774
    %v2360 = vpack.c.b16 %v1780, %v1775
    %v2361 = vpack.c.b16 %v1781, %v1776
    %v2362 = vpack.c.b16 %v1782, %v1777
    %v2363 = vpack.c.b16 %v1783, %v1778
    %v2364 = vpack.c.b16 %v1789, %v1784
    %v2365 = vpack.c.b16 %v1790, %v1785
    %v2366 = vpack.c.b16 %v1791, %v1786
    %v2367 = vpack.c.b16 %v1792, %v1787
    %v2368 = vpack.c.b16 %v1793, %v1788
    %v2369 = vpack.c.b16 %v1799, %v1794
    %v2370 = vpack.c.b16 %v1800, %v1795
    %v2371 = vpack.c.b16 %v1801, %v1796
    %v2372 = vpack.c.b16 %v1802, %v1797
    %v2373 = vpack.c.b16 %v1803, %v1798
    %v2374 = vpack.c.b16 %v1809, %v1804
    %v2375 = vpack.c.b16 %v1810, %v1805
    %v2376 = vpack.c.b16 %v1811, %v1806
    %v2377 = vpack.c.b16 %v1812, %v1807
    %v2378 = vpack.c.b16 %v1813, %v1808
    %v2379 = vpack.c.b16 %v1819, %v1814
    %v2380 = vpack.c.b16 %v1820, %v1815
    %v2381 = vpack.c.b16 %v1821, %v1816
    %v2382 = vpack.c.b16 %v1822, %v1817
    %v2383 = vpack.c.b16 %v1823, %v1818
    %v2384 = vpack.c.b16 %v1829, %v1824
    %v2385 = vpack.c.b16 %v1830, %v1825
    %v2386 = vpack.c.b16 %v1831, %v1826
    %v2387 = vpack.c.b16 %v1832, %v1827
    %v2388 = vpack.c.b16 %v1833, %v1828
    %v2389 = vpack.c.b16 %v1839, %v1834
    %v2390 = vpack.c.b16 %v1840, %v1835
    %v2391 = vpack.c.b16 %v1841, %v1836
    %v2392 = vpack.c.b16 %v1842, %v1837
    %v2393 = vpack.c.b16 %v1843, %v1838
    %v2394 = vpack.c.b16 %v1849, %v1844
    %v2395 = vpack.c.b16 %v1850, %v1845
    %v2396 = vpack.c.b16 %v1851, %v1846
    %v2397 = vpack.c.b16 %v1852, %v1847
    %v2398 = vpack.c.b16 %v1853, %v1848
    %v2399 = vpack.c.b16 %v1859, %v1854
    %v2400 = vpack.c.b16 %v1860, %v1855
    %v2401 = vpack.c.b16 %v1861, %v1856
    %v2402 = vpack.c.b16 %v1862, %v1857
    %v2403 = vpack.c.b16 %v1863, %v1858
    %v2404 = vpack.c.b16 %v1869, %v1864
    %v2405 = vpack.c.b16 %v1870, %v1865
    %v2406 = vpack.c.b16 %v1871, %v1866
    %v2407 = vpack.c.b16 %v1872, %v1867
    %v2408 = vpack.c.b16 %v1873, %v1868
    %v2409 = vpack.c.b16 %v1879, %v1874
    %v2410 = vpack.c.b16 %v1880, %v1875
    %v2411 = vpack.c.b16 %v1881, %v1876
    %v2412 = vpack.c.b16 %v1882, %v1877
    %v2413 = vpack.c.b16 %v1883, %v1878
    %v2414 = vpack.c.b16 %v1889, %v1884
    %v2415 = vpack.c.b16 %v1890, %v1885
    %v2416 = vpack.c.b16 %v1891, %v1886
    %v2417 = vpack.c.b16 %v1892, %v1887
    %v2418 = vpack.c.b16 %v1893, %v1888
    %v2419 = vpack.c.b16 %v1899, %v1894
    %v2420 = vpack.c.b16 %v1900, %v1895
    %v2421 = vpack.c.b16 %v1901, %v1896
    %v2422 = vpack.c.b16 %v1902, %v1897
    %v2423 = vpack.c.b16 %v1903, %v1898
    %v2424 = vpack.c.b16 %v1909, %v1904
    %v2425 = vpack.c.b16 %v1910, %v1905
    %v2426 = vpack.c.b16 %v1911, %v1906
    %v2427 = vpack.c.b16 %v1912, %v1907
    %v2428 = vpack.c.b16 %v1913, %v1908
    %v2429 = vpack.c.b16 %v1919, %v1914
    %v2430 = vpack.c.b16 %v1920, %v1915
    %v2431 = vpack.c.b16 %v1921, %v1916
    %v2432 = vpack.c.b16 %v1922, %v1917
    %v2433 = vpack.c.b16 %v1923, %v1918
    %v2434 = vpack.c.b16 %v1929, %v1924
    %v2435 = vpack.c.b16 %v1930, %v1925
    %v2436 = vpack.c.b16 %v1931, %v1926
    %v2437 = vpack.c.b16 %v1932, %v1927
    %v2438 = vpack.c.b16 %v1933, %v1928
    %v2439 = vpack.c.b16 %v1939, %v1934
    %v2440 = vpack.c.b16 %v1940, %v1935
    %v2441 = vpack.c.b16 %v1941, %v1936
    %v2442 = vpack.c.b16 %v1942, %v1937
    %v2443 = vpack.c.b16 %v1943, %v1938
    %v2444 = vpack.c.b16 %v1949, %v1944
    %v2445 = vpack.c.b16 %v1950, %v1945
    %v2446 = vpack.c.b16 %v1951, %v1946
    %v2447 = vpack.c.b16 %v1952, %v1947
    %v2448 = vpack.c.b16 %v1953, %v1948
    %v2449 = vpack.c.b16 %v1959, %v1954
    %v2450 = vpack.c.b16 %v1960, %v1955
    %v2451 = vpack.c.b16 %v1961, %v1956
    %v2452 = vpack.c.b16 %v1962, %v1957
    %v2453 = vpack.c.b16 %v1963, %v1958
    %v2454 = vpack.c.b16 %v1969, %v1964
    %v2455 = vpack.c.b16 %v1970, %v1965
    %v2456 = vpack.c.b16 %v1971, %v1966
    %v2457 = vpack.c.b16 %v1972, %v1967
    %v2458 = vpack.c.b16 %v1973, %v1968
    %v2459 = vpack.c.b16 %v1979, %v1974
    %v2460 = vpack.c.b16 %v1980, %v1975
    %v2461 = vpack.c.b16 %v1981, %v1976
    %v2462 = vpack.c.b16 %v1982, %v1977
    %v2463 = vpack.c.b16 %v1983, %v1978
    %v2464 = vpack.c.b16 %v1989, %v1984
    %v2465 = vpack.c.b16 %v1990, %v1985
    %v2466 = vpack.c.b16 %v1991, %v1986
    %v2467 = vpack.c.b16 %v1992, %v1987
    %v2468 = vpack.c.b16 %v1993, %v1988
    %v2469 = vpack.c.b16 %v1999, %v1994
    %v2470 = vpack.c.b16 %v2000, %v1995
    %v2471 = vpack.c.b16 %v2001, %v1996
    %v2472 = vpack.c.b16 %v2002, %v1997
    %v2473 = vpack.c.b16 %v2003, %v1998
    %v2474 = vpack.c.b16 %v2009, %v2004
    %v2475 = vpack.c.b16 %v2010, %v2005
    %v2476 = vpack.c.b16 %v2011, %v2006
    %v2477 = vpack.c.b16 %v2012, %v2007
    %v2478 = vpack.c.b16 %v2013, %v2008
    %v2479 = vpack.c.b16 %v2019, %v2014
    %v2480 = vpack.c.b16 %v2020, %v2015
    %v2481 = vpack.c.b16 %v2021, %v2016
    %v2482 = vpack.c.b16 %v2022, %v2017
    %v2483 = vpack.c.b16 %v2023, %v2018
    %v2484 = vpack.c.b16 %v2029, %v2024
    %v2485 = vpack.c.b16 %v2030, %v2025
    %v2486 = vpack.c.b16 %v2031, %v2026
    %v2487 = vpack.c.b16 %v2032, %v2027
    %v2488 = vpack.c.b16 %v2033, %v2028
    %v2489 = vpack.c.b16 %v2039, %v2034
    %v2490 = vpack.c.b16 %v2040, %v2035
    %v2491 = vpack.c.b16 %v2041, %v2036
    %v2492 = vpack.c.b16 %v2042, %v2037
    %v2493 = vpack.c.b16 %v2043, %v2038
    %v2494 = vpack.c.b16 %v2049, %v2044
    %v2495 = vpack.c.b16 %v2050, %v2045
    %v2496 = vpack.c.b16 %v2051, %v2046
    %v2497 = vpack.c.b16 %v2052, %v2047
    %v2498 = vpack.c.b16 %v2053, %v2048
    %v2499 = vpack.c.b16 %v2059, %v2054
    %v2500 = vpack.c.b16 %v2060, %v2055
    %v2501 = vpack.c.b16 %v2061, %v2056
    %v2502 = vpack.c.b16 %v2062, %v2057
    %v2503 = vpack.c.b16 %v2063, %v2058
    %v2504 = vpack.c.b16 %v2069, %v2064
    %v2505 = vpack.c.b16 %v2070, %v2065
    %v2506 = vpack.c.b16 %v2071, %v2066
    %v2507 = vpack.c.b16 %v2072, %v2067
    %v2508 = vpack.c.b16 %v2073, %v2068
    %v2509 = vpack.c.b16 %v2079, %v2074
    %v2510 = vpack.c.b16 %v2080, %v2075
    %v2511 = vpack.c.b16 %v2081, %v2076
    %v2512 = vpack.c.b16 %v2082, %v2077
    %v2513 = vpack.c.b16 %v2083, %v2078
    %v2514 = vpack.c.b16 %v2089, %v2084
    %v2515 = vpack.c.b16 %v2090, %v2085
    %v2516 = vpack.c.b16 %v2091, %v2086
    %v2517 = vpack.c.b16 %v2092, %v2087
    %v2518 = vpack.c.b16 %v2093, %v2088
    %v2519 = vpack.c.b16 %v2099, %v2094
    %v2520 = vpack.c.b16 %v2100, %v2095
    %v2521 = vpack.c.b16 %v2101, %v2096
    %v2522 = vpack.c.b16 %v2102, %v2097
    %v2523 = vpack.c.b16 %v2103, %v2098
    %v2524 = vpack.c.b16 %v2109, %v2104
    %v2525 = vpack.c.b16 %v2110, %v2105
    %v2526 = vpack.c.b16 %v2111, %v2106
    %v2527 = vpack.c.b16 %v2112, %v2107
    %v2528 = vpack.c.b16 %v2113, %v2108
    %v2529 = vpack.c.b16 %v2119, %v2114
    %v2530 = vpack.c.b16 %v2120, %v2115
    %v2531 = vpack.c.b16 %v2121, %v2116
    %v2532 = vpack.c.b16 %v2122, %v2117
    %v2533 = vpack.c.b16 %v2123, %v2118
    %v2534 = vpack.c.b16 %v2129, %v2124
    %v2535 = vpack.c.b16 %v2130, %v2125
    %v2536 = vpack.c.b16 %v2131, %v2126
    %v2537 = vpack.c.b16 %v2132, %v2127
    %v2538 = vpack.c.b16 %v2133, %v2128
    %v2539 = vpack.c.b16 %v2139, %v2134
    %v2540 = vpack.c.b16 %v2140, %v2135
    %v2541 = vpack.c.b16 %v2141, %v2136
    %v2542 = vpack.c.b16 %v2142, %v2137
    %v2543 = vpack.c.b16 %v2143, %v2138
    %2944 = vmatpush.bf16.msra.mxu0 %v2179
    %2945 = vmatpush.bf16.msra.mxu0 %v2174
    %2946 = vmatpush.bf16.msra.mxu0 %v2169
    %2947 = vmatpush.bf16.msra.mxu0 %v2164
    %2948 = vmatpush.bf16.msra.mxu0 %v2159
    %2949 = vmatpush.bf16.msra.mxu0 %v2154
    %2950 = vmatpush.bf16.msra.mxu0 %v2149
    %2951 = vmatpush.bf16.msra.mxu0 %v2144
    %2952 = vmatmul.bf16.gmra.mxu0 %v784
    %v2953 = vpop.f32.mrf.mxu0
    %v2954 = vadd.f32 0.0, %v2953
    %v2955 = vpop.f32.mrf.mxu0
    %v2956 = vadd.f32 0.0, %v2955
    %2957 = vmatmul.bf16.gmra.mxu0 %v794
    %v2958 = vpop.f32.mrf.mxu0
    %v2959 = vadd.f32 0.0, %v2958
    %v2960 = vpop.f32.mrf.mxu0
    %v2961 = vadd.f32 0.0, %v2960
    %2962 = vmatmul.bf16.gmra.mxu0 %v804
    %v2963 = vpop.f32.mrf.mxu0
    %v2964 = vadd.f32 0.0, %v2963
    %v2965 = vpop.f32.mrf.mxu0
    %v2966 = vadd.f32 0.0, %v2965
    %2967 = vmatmul.bf16.gmra.mxu0 %v814
    %v2968 = vpop.f32.mrf.mxu0
    %v2969 = vadd.f32 0.0, %v2968
    %v2970 = vpop.f32.mrf.mxu0
    %v2971 = vadd.f32 0.0, %v2970
    %2972 = vdwg.mxu0
    %2973 = vmatpush.bf16.msra.mxu0 %v2219
    %2974 = vmatpush.bf16.msra.mxu0 %v2214
    %2975 = vmatpush.bf16.msra.mxu0 %v2209
    %2976 = vmatpush.bf16.msra.mxu0 %v2204
    %2977 = vmatpush.bf16.msra.mxu0 %v2199
    %2978 = vmatpush.bf16.msra.mxu0 %v2194
    %2979 = vmatpush.bf16.msra.mxu0 %v2189
    %2980 = vmatpush.bf16.msra.mxu0 %v2184
    %2981 = vmatmul.bf16.gmra.mxu0 %v785
    %v2982 = vpop.f32.mrf.mxu0
    %v2983 = vadd.f32 %v2954, %v2982
    %v2984 = vpop.f32.mrf.mxu0
    %v2985 = vadd.f32 %v2956, %v2984
    %2986 = vmatmul.bf16.gmra.mxu0 %v795
    %v2987 = vpop.f32.mrf.mxu0
    %v2988 = vadd.f32 %v2959, %v2987
    %v2989 = vpop.f32.mrf.mxu0
    %v2990 = vadd.f32 %v2961, %v2989
    %2991 = vmatmul.bf16.gmra.mxu0 %v805
    %v2992 = vpop.f32.mrf.mxu0
    %v2993 = vadd.f32 %v2964, %v2992
    %v2994 = vpop.f32.mrf.mxu0
    %v2995 = vadd.f32 %v2966, %v2994
    %2996 = vmatmul.bf16.gmra.mxu0 %v815
    %v2997 = vpop.f32.mrf.mxu0
    %v2998 = vadd.f32 %v2969, %v2997
    %v2999 = vpop.f32.mrf.mxu0
    %v3000 = vadd.f32 %v2971, %v2999
    %3001 = vdwg.mxu0
    %3002 = vmatpush.bf16.msra.mxu0 %v2259
    %3003 = vmatpush.bf16.msra.mxu0 %v2254
    %3004 = vmatpush.bf16.msra.mxu0 %v2249
    %3005 = vmatpush.bf16.msra.mxu0 %v2244
    %3006 = vmatpush.bf16.msra.mxu0 %v2239
    %3007 = vmatpush.bf16.msra.mxu0 %v2234
    %3008 = vmatpush.bf16.msra.mxu0 %v2229
    %3009 = vmatpush.bf16.msra.mxu0 %v2224
    %3010 = vmatmul.bf16.gmra.mxu0 %v786
    %v3011 = vpop.f32.mrf.mxu0
    %v3012 = vadd.f32 %v2983, %v3011
    %v3013 = vpop.f32.mrf.mxu0
    %v3014 = vadd.f32 %v2985, %v3013
    %3015 = vmatmul.bf16.gmra.mxu0 %v796
    %v3016 = vpop.f32.mrf.mxu0
    %v3017 = vadd.f32 %v2988, %v3016
    %v3018 = vpop.f32.mrf.mxu0
    %v3019 = vadd.f32 %v2990, %v3018
    %3020 = vmatmul.bf16.gmra.mxu0 %v806
    %v3021 = vpop.f32.mrf.mxu0
    %v3022 = vadd.f32 %v2993, %v3021
    %v3023 = vpop.f32.mrf.mxu0
    %v3024 = vadd.f32 %v2995, %v3023
    %3025 = vmatmul.bf16.gmra.mxu0 %v816
    %v3026 = vpop.f32.mrf.mxu0
    %v3027 = vadd.f32 %v2998, %v3026
    %v3028 = vpop.f32.mrf.mxu0
    %v3029 = vadd.f32 %v3000, %v3028
    %3030 = vdwg.mxu0
    %3031 = vmatpush.bf16.msra.mxu0 %v2299
    %3032 = vmatpush.bf16.msra.mxu0 %v2294
    %3033 = vmatpush.bf16.msra.mxu0 %v2289
    %3034 = vmatpush.bf16.msra.mxu0 %v2284
    %3035 = vmatpush.bf16.msra.mxu0 %v2279
    %3036 = vmatpush.bf16.msra.mxu0 %v2274
    %3037 = vmatpush.bf16.msra.mxu0 %v2269
    %3038 = vmatpush.bf16.msra.mxu0 %v2264
    %3039 = vmatmul.bf16.gmra.mxu0 %v787
    %v3040 = vpop.f32.mrf.mxu0
    %v3041 = vadd.f32 %v3012, %v3040
    %v3042 = vpop.f32.mrf.mxu0
    %v3043 = vadd.f32 %v3014, %v3042
    %3044 = vmatmul.bf16.gmra.mxu0 %v797
    %v3045 = vpop.f32.mrf.mxu0
    %v3046 = vadd.f32 %v3017, %v3045
    %v3047 = vpop.f32.mrf.mxu0
    %v3048 = vadd.f32 %v3019, %v3047
    %3049 = vmatmul.bf16.gmra.mxu0 %v807
    %v3050 = vpop.f32.mrf.mxu0
    %v3051 = vadd.f32 %v3022, %v3050
    %v3052 = vpop.f32.mrf.mxu0
    %v3053 = vadd.f32 %v3024, %v3052
    %3054 = vmatmul.bf16.gmra.mxu0 %v817
    %v3055 = vpop.f32.mrf.mxu0
    %v3056 = vadd.f32 %v3027, %v3055
    %v3057 = vpop.f32.mrf.mxu0
    %v3058 = vadd.f32 %v3029, %v3057
    %3059 = vdwg.mxu0
    %3060 = vmatpush.bf16.msra.mxu0 %v2339
    %3061 = vmatpush.bf16.msra.mxu0 %v2334
    %3062 = vmatpush.bf16.msra.mxu0 %v2329
    %3063 = vmatpush.bf16.msra.mxu0 %v2324
    %3064 = vmatpush.bf16.msra.mxu0 %v2319
    %3065 = vmatpush.bf16.msra.mxu0 %v2314
    %3066 = vmatpush.bf16.msra.mxu0 %v2309
    %3067 = vmatpush.bf16.msra.mxu0 %v2304
    %3068 = vmatmul.bf16.gmra.mxu0 %v788
    %v3069 = vpop.f32.mrf.mxu0
    %v3070 = vadd.f32 %v3041, %v3069
    %v3071 = vpop.f32.mrf.mxu0
    %v3072 = vadd.f32 %v3043, %v3071
    %3073 = vmatmul.bf16.gmra.mxu0 %v798
    %v3074 = vpop.f32.mrf.mxu0
    %v3075 = vadd.f32 %v3046, %v3074
    %v3076 = vpop.f32.mrf.mxu0
    %v3077 = vadd.f32 %v3048, %v3076
    %3078 = vmatmul.bf16.gmra.mxu0 %v808
    %v3079 = vpop.f32.mrf.mxu0
    %v3080 = vadd.f32 %v3051, %v3079
    %v3081 = vpop.f32.mrf.mxu0
    %v3082 = vadd.f32 %v3053, %v3081
    %3083 = vmatmul.bf16.gmra.mxu0 %v818
    %v3084 = vpop.f32.mrf.mxu0
    %v3085 = vadd.f32 %v3056, %v3084
    %v3086 = vpop.f32.mrf.mxu0
    %v3087 = vadd.f32 %v3058, %v3086
    %3088 = vdwg.mxu0
    %3089 = vmatpush.bf16.msra.mxu0 %v2379
    %3090 = vmatpush.bf16.msra.mxu0 %v2374
    %3091 = vmatpush.bf16.msra.mxu0 %v2369
    %3092 = vmatpush.bf16.msra.mxu0 %v2364
    %3093 = vmatpush.bf16.msra.mxu0 %v2359
    %3094 = vmatpush.bf16.msra.mxu0 %v2354
    %3095 = vmatpush.bf16.msra.mxu0 %v2349
    %3096 = vmatpush.bf16.msra.mxu0 %v2344
    %3097 = vmatmul.bf16.gmra.mxu0 %v789
    %v3098 = vpop.f32.mrf.mxu0
    %v3099 = vadd.f32 %v3070, %v3098
    %v3100 = vpop.f32.mrf.mxu0
    %v3101 = vadd.f32 %v3072, %v3100
    %3102 = vmatmul.bf16.gmra.mxu0 %v799
    %v3103 = vpop.f32.mrf.mxu0
    %v3104 = vadd.f32 %v3075, %v3103
    %v3105 = vpop.f32.mrf.mxu0
    %v3106 = vadd.f32 %v3077, %v3105
    %3107 = vmatmul.bf16.gmra.mxu0 %v809
    %v3108 = vpop.f32.mrf.mxu0
    %v3109 = vadd.f32 %v3080, %v3108
    %v3110 = vpop.f32.mrf.mxu0
    %v3111 = vadd.f32 %v3082, %v3110
    %3112 = vmatmul.bf16.gmra.mxu0 %v819
    %v3113 = vpop.f32.mrf.mxu0
    %v3114 = vadd.f32 %v3085, %v3113
    %v3115 = vpop.f32.mrf.mxu0
    %v3116 = vadd.f32 %v3087, %v3115
    %3117 = vdwg.mxu0
    %3118 = vmatpush.bf16.msra.mxu0 %v2419
    %3119 = vmatpush.bf16.msra.mxu0 %v2414
    %3120 = vmatpush.bf16.msra.mxu0 %v2409
    %3121 = vmatpush.bf16.msra.mxu0 %v2404
    %3122 = vmatpush.bf16.msra.mxu0 %v2399
    %3123 = vmatpush.bf16.msra.mxu0 %v2394
    %3124 = vmatpush.bf16.msra.mxu0 %v2389
    %3125 = vmatpush.bf16.msra.mxu0 %v2384
    %3126 = vmatmul.bf16.gmra.mxu0 %v790
    %v3127 = vpop.f32.mrf.mxu0
    %v3128 = vadd.f32 %v3099, %v3127
    %v3129 = vpop.f32.mrf.mxu0
    %v3130 = vadd.f32 %v3101, %v3129
    %3131 = vmatmul.bf16.gmra.mxu0 %v800
    %v3132 = vpop.f32.mrf.mxu0
    %v3133 = vadd.f32 %v3104, %v3132
    %v3134 = vpop.f32.mrf.mxu0
    %v3135 = vadd.f32 %v3106, %v3134
    %3136 = vmatmul.bf16.gmra.mxu0 %v810
    %v3137 = vpop.f32.mrf.mxu0
    %v3138 = vadd.f32 %v3109, %v3137
    %v3139 = vpop.f32.mrf.mxu0
    %v3140 = vadd.f32 %v3111, %v3139
    %3141 = vmatmul.bf16.gmra.mxu0 %v820
    %v3142 = vpop.f32.mrf.mxu0
    %v3143 = vadd.f32 %v3114, %v3142
    %v3144 = vpop.f32.mrf.mxu0
    %v3145 = vadd.f32 %v3116, %v3144
    %3146 = vdwg.mxu0
    %3147 = vmatpush.bf16.msra.mxu0 %v2459
    %3148 = vmatpush.bf16.msra.mxu0 %v2454
    %3149 = vmatpush.bf16.msra.mxu0 %v2449
    %3150 = vmatpush.bf16.msra.mxu0 %v2444
    %3151 = vmatpush.bf16.msra.mxu0 %v2439
    %3152 = vmatpush.bf16.msra.mxu0 %v2434
    %3153 = vmatpush.bf16.msra.mxu0 %v2429
    %3154 = vmatpush.bf16.msra.mxu0 %v2424
    %3155 = vmatmul.bf16.gmra.mxu0 %v791
    %v3156 = vpop.f32.mrf.mxu0
    %v3157 = vadd.f32 %v3128, %v3156
    %v3158 = vpop.f32.mrf.mxu0
    %v3159 = vadd.f32 %v3130, %v3158
    %3160 = vmatmul.bf16.gmra.mxu0 %v801
    %v3161 = vpop.f32.mrf.mxu0
    %v3162 = vadd.f32 %v3133, %v3161
    %v3163 = vpop.f32.mrf.mxu0
    %v3164 = vadd.f32 %v3135, %v3163
    %3165 = vmatmul.bf16.gmra.mxu0 %v811
    %v3166 = vpop.f32.mrf.mxu0
    %v3167 = vadd.f32 %v3138, %v3166
    %v3168 = vpop.f32.mrf.mxu0
    %v3169 = vadd.f32 %v3140, %v3168
    %3170 = vmatmul.bf16.gmra.mxu0 %v821
    %v3171 = vpop.f32.mrf.mxu0
    %v3172 = vadd.f32 %v3143, %v3171
    %v3173 = vpop.f32.mrf.mxu0
    %v3174 = vadd.f32 %v3145, %v3173
    %3175 = vdwg.mxu0
    %3176 = vmatpush.bf16.msra.mxu0 %v2499
    %3177 = vmatpush.bf16.msra.mxu0 %v2494
    %3178 = vmatpush.bf16.msra.mxu0 %v2489
    %3179 = vmatpush.bf16.msra.mxu0 %v2484
    %3180 = vmatpush.bf16.msra.mxu0 %v2479
    %3181 = vmatpush.bf16.msra.mxu0 %v2474
    %3182 = vmatpush.bf16.msra.mxu0 %v2469
    %3183 = vmatpush.bf16.msra.mxu0 %v2464
    %3184 = vmatmul.bf16.gmra.mxu0 %v792
    %v3185 = vpop.f32.mrf.mxu0
    %v3186 = vadd.f32 %v3157, %v3185
    %v3187 = vpop.f32.mrf.mxu0
    %v3188 = vadd.f32 %v3159, %v3187
    %3189 = vmatmul.bf16.gmra.mxu0 %v802
    %v3190 = vpop.f32.mrf.mxu0
    %v3191 = vadd.f32 %v3162, %v3190
    %v3192 = vpop.f32.mrf.mxu0
    %v3193 = vadd.f32 %v3164, %v3192
    %3194 = vmatmul.bf16.gmra.mxu0 %v812
    %v3195 = vpop.f32.mrf.mxu0
    %v3196 = vadd.f32 %v3167, %v3195
    %v3197 = vpop.f32.mrf.mxu0
    %v3198 = vadd.f32 %v3169, %v3197
    %3199 = vmatmul.bf16.gmra.mxu0 %v822
    %v3200 = vpop.f32.mrf.mxu0
    %v3201 = vadd.f32 %v3172, %v3200
    %v3202 = vpop.f32.mrf.mxu0
    %v3203 = vadd.f32 %v3174, %v3202
    %3204 = vdwg.mxu0
    %3205 = vmatpush.bf16.msra.mxu0 %v2539
    %3206 = vmatpush.bf16.msra.mxu0 %v2534
    %3207 = vmatpush.bf16.msra.mxu0 %v2529
    %3208 = vmatpush.bf16.msra.mxu0 %v2524
    %3209 = vmatpush.bf16.msra.mxu0 %v2519
    %3210 = vmatpush.bf16.msra.mxu0 %v2514
    %3211 = vmatpush.bf16.msra.mxu0 %v2509
    %3212 = vmatpush.bf16.msra.mxu0 %v2504
    %3213 = vmatmul.bf16.gmra.mxu0 %v793
    %v3214 = vpop.f32.mrf.mxu0
    %v3215 = vadd.f32 %v3186, %v3214
    %v3216 = vpop.f32.mrf.mxu0
    %v3217 = vadd.f32 %v3188, %v3216
    %3218 = vmatmul.bf16.gmra.mxu0 %v803
    %v3219 = vpop.f32.mrf.mxu0
    %v3220 = vadd.f32 %v3191, %v3219
    %v3221 = vpop.f32.mrf.mxu0
    %v3222 = vadd.f32 %v3193, %v3221
    %3223 = vmatmul.bf16.gmra.mxu0 %v813
    %v3224 = vpop.f32.mrf.mxu0
    %v3225 = vadd.f32 %v3196, %v3224
    %v3226 = vpop.f32.mrf.mxu0
    %v3227 = vadd.f32 %v3198, %v3226
    %3228 = vmatmul.bf16.gmra.mxu0 %v823
    %v3229 = vpop.f32.mrf.mxu0
    %v3230 = vadd.f32 %v3201, %v3229
    %v3231 = vpop.f32.mrf.mxu0
    %v3232 = vadd.f32 %v3203, %v3231
    %3233 = vdwg.mxu0
    %3234 = vmatpush.bf16.msra.mxu0 %v2180
    %3235 = vmatpush.bf16.msra.mxu0 %v2175
    %3236 = vmatpush.bf16.msra.mxu0 %v2170
    %3237 = vmatpush.bf16.msra.mxu0 %v2165
    %3238 = vmatpush.bf16.msra.mxu0 %v2160
    %3239 = vmatpush.bf16.msra.mxu0 %v2155
    %3240 = vmatpush.bf16.msra.mxu0 %v2150
    %3241 = vmatpush.bf16.msra.mxu0 %v2145
    %3242 = vmatmul.bf16.gmra.mxu0 %v784
    %v3243 = vpop.f32.mrf.mxu0
    %v3244 = vadd.f32 0.0, %v3243
    %v3245 = vpop.f32.mrf.mxu0
    %v3246 = vadd.f32 0.0, %v3245
    %3247 = vmatmul.bf16.gmra.mxu0 %v794
    %v3248 = vpop.f32.mrf.mxu0
    %v3249 = vadd.f32 0.0, %v3248
    %v3250 = vpop.f32.mrf.mxu0
    %v3251 = vadd.f32 0.0, %v3250
    %3252 = vmatmul.bf16.gmra.mxu0 %v804
    %v3253 = vpop.f32.mrf.mxu0
    %v3254 = vadd.f32 0.0, %v3253
    %v3255 = vpop.f32.mrf.mxu0
    %v3256 = vadd.f32 0.0, %v3255
    %3257 = vmatmul.bf16.gmra.mxu0 %v814
    %v3258 = vpop.f32.mrf.mxu0
    %v3259 = vadd.f32 0.0, %v3258
    %v3260 = vpop.f32.mrf.mxu0
    %v3261 = vadd.f32 0.0, %v3260
    %3262 = vdwg.mxu0
    %3263 = vmatpush.bf16.msra.mxu0 %v2220
    %3264 = vmatpush.bf16.msra.mxu0 %v2215
    %3265 = vmatpush.bf16.msra.mxu0 %v2210
    %3266 = vmatpush.bf16.msra.mxu0 %v2205
    %3267 = vmatpush.bf16.msra.mxu0 %v2200
    %3268 = vmatpush.bf16.msra.mxu0 %v2195
    %3269 = vmatpush.bf16.msra.mxu0 %v2190
    %3270 = vmatpush.bf16.msra.mxu0 %v2185
    %3271 = vmatmul.bf16.gmra.mxu0 %v785
    %v3272 = vpop.f32.mrf.mxu0
    %v3273 = vadd.f32 %v3244, %v3272
    %v3274 = vpop.f32.mrf.mxu0
    %v3275 = vadd.f32 %v3246, %v3274
    %3276 = vmatmul.bf16.gmra.mxu0 %v795
    %v3277 = vpop.f32.mrf.mxu0
    %v3278 = vadd.f32 %v3249, %v3277
    %v3279 = vpop.f32.mrf.mxu0
    %v3280 = vadd.f32 %v3251, %v3279
    %3281 = vmatmul.bf16.gmra.mxu0 %v805
    %v3282 = vpop.f32.mrf.mxu0
    %v3283 = vadd.f32 %v3254, %v3282
    %v3284 = vpop.f32.mrf.mxu0
    %v3285 = vadd.f32 %v3256, %v3284
    %3286 = vmatmul.bf16.gmra.mxu0 %v815
    %v3287 = vpop.f32.mrf.mxu0
    %v3288 = vadd.f32 %v3259, %v3287
    %v3289 = vpop.f32.mrf.mxu0
    %v3290 = vadd.f32 %v3261, %v3289
    %3291 = vdwg.mxu0
    %3292 = vmatpush.bf16.msra.mxu0 %v2260
    %3293 = vmatpush.bf16.msra.mxu0 %v2255
    %3294 = vmatpush.bf16.msra.mxu0 %v2250
    %3295 = vmatpush.bf16.msra.mxu0 %v2245
    %3296 = vmatpush.bf16.msra.mxu0 %v2240
    %3297 = vmatpush.bf16.msra.mxu0 %v2235
    %3298 = vmatpush.bf16.msra.mxu0 %v2230
    %3299 = vmatpush.bf16.msra.mxu0 %v2225
    %3300 = vmatmul.bf16.gmra.mxu0 %v786
    %v3301 = vpop.f32.mrf.mxu0
    %v3302 = vadd.f32 %v3273, %v3301
    %v3303 = vpop.f32.mrf.mxu0
    %v3304 = vadd.f32 %v3275, %v3303
    %3305 = vmatmul.bf16.gmra.mxu0 %v796
    %v3306 = vpop.f32.mrf.mxu0
    %v3307 = vadd.f32 %v3278, %v3306
    %v3308 = vpop.f32.mrf.mxu0
    %v3309 = vadd.f32 %v3280, %v3308
    %3310 = vmatmul.bf16.gmra.mxu0 %v806
    %v3311 = vpop.f32.mrf.mxu0
    %v3312 = vadd.f32 %v3283, %v3311
    %v3313 = vpop.f32.mrf.mxu0
    %v3314 = vadd.f32 %v3285, %v3313
    %3315 = vmatmul.bf16.gmra.mxu0 %v816
    %v3316 = vpop.f32.mrf.mxu0
    %v3317 = vadd.f32 %v3288, %v3316
    %v3318 = vpop.f32.mrf.mxu0
    %v3319 = vadd.f32 %v3290, %v3318
    %3320 = vdwg.mxu0
    %3321 = vmatpush.bf16.msra.mxu0 %v2300
    %3322 = vmatpush.bf16.msra.mxu0 %v2295
    %3323 = vmatpush.bf16.msra.mxu0 %v2290
    %3324 = vmatpush.bf16.msra.mxu0 %v2285
    %3325 = vmatpush.bf16.msra.mxu0 %v2280
    %3326 = vmatpush.bf16.msra.mxu0 %v2275
    %3327 = vmatpush.bf16.msra.mxu0 %v2270
    %3328 = vmatpush.bf16.msra.mxu0 %v2265
    %3329 = vmatmul.bf16.gmra.mxu0 %v787
    %v3330 = vpop.f32.mrf.mxu0
    %v3331 = vadd.f32 %v3302, %v3330
    %v3332 = vpop.f32.mrf.mxu0
    %v3333 = vadd.f32 %v3304, %v3332
    %3334 = vmatmul.bf16.gmra.mxu0 %v797
    %v3335 = vpop.f32.mrf.mxu0
    %v3336 = vadd.f32 %v3307, %v3335
    %v3337 = vpop.f32.mrf.mxu0
    %v3338 = vadd.f32 %v3309, %v3337
    %3339 = vmatmul.bf16.gmra.mxu0 %v807
    %v3340 = vpop.f32.mrf.mxu0
    %v3341 = vadd.f32 %v3312, %v3340
    %v3342 = vpop.f32.mrf.mxu0
    %v3343 = vadd.f32 %v3314, %v3342
    %3344 = vmatmul.bf16.gmra.mxu0 %v817
    %v3345 = vpop.f32.mrf.mxu0
    %v3346 = vadd.f32 %v3317, %v3345
    %v3347 = vpop.f32.mrf.mxu0
    %v3348 = vadd.f32 %v3319, %v3347
    %3349 = vdwg.mxu0
    %3350 = vmatpush.bf16.msra.mxu0 %v2340
    %3351 = vmatpush.bf16.msra.mxu0 %v2335
    %3352 = vmatpush.bf16.msra.mxu0 %v2330
    %3353 = vmatpush.bf16.msra.mxu0 %v2325
    %3354 = vmatpush.bf16.msra.mxu0 %v2320
    %3355 = vmatpush.bf16.msra.mxu0 %v2315
    %3356 = vmatpush.bf16.msra.mxu0 %v2310
    %3357 = vmatpush.bf16.msra.mxu0 %v2305
    %3358 = vmatmul.bf16.gmra.mxu0 %v788
    %v3359 = vpop.f32.mrf.mxu0
    %v3360 = vadd.f32 %v3331, %v3359
    %v3361 = vpop.f32.mrf.mxu0
    %v3362 = vadd.f32 %v3333, %v3361
    %3363 = vmatmul.bf16.gmra.mxu0 %v798
    %v3364 = vpop.f32.mrf.mxu0
    %v3365 = vadd.f32 %v3336, %v3364
    %v3366 = vpop.f32.mrf.mxu0
    %v3367 = vadd.f32 %v3338, %v3366
    %3368 = vmatmul.bf16.gmra.mxu0 %v808
    %v3369 = vpop.f32.mrf.mxu0
    %v3370 = vadd.f32 %v3341, %v3369
    %v3371 = vpop.f32.mrf.mxu0
    %v3372 = vadd.f32 %v3343, %v3371
    %3373 = vmatmul.bf16.gmra.mxu0 %v818
    %v3374 = vpop.f32.mrf.mxu0
    %v3375 = vadd.f32 %v3346, %v3374
    %v3376 = vpop.f32.mrf.mxu0
    %v3377 = vadd.f32 %v3348, %v3376
    %3378 = vdwg.mxu0
    %3379 = vmatpush.bf16.msra.mxu0 %v2380
    %3380 = vmatpush.bf16.msra.mxu0 %v2375
    %3381 = vmatpush.bf16.msra.mxu0 %v2370
    %3382 = vmatpush.bf16.msra.mxu0 %v2365
    %3383 = vmatpush.bf16.msra.mxu0 %v2360
    %3384 = vmatpush.bf16.msra.mxu0 %v2355
    %3385 = vmatpush.bf16.msra.mxu0 %v2350
    %3386 = vmatpush.bf16.msra.mxu0 %v2345
    %3387 = vmatmul.bf16.gmra.mxu0 %v789
    %v3388 = vpop.f32.mrf.mxu0
    %v3389 = vadd.f32 %v3360, %v3388
    %v3390 = vpop.f32.mrf.mxu0
    %v3391 = vadd.f32 %v3362, %v3390
    %3392 = vmatmul.bf16.gmra.mxu0 %v799
    %v3393 = vpop.f32.mrf.mxu0
    %v3394 = vadd.f32 %v3365, %v3393
    %v3395 = vpop.f32.mrf.mxu0
    %v3396 = vadd.f32 %v3367, %v3395
    %3397 = vmatmul.bf16.gmra.mxu0 %v809
    %v3398 = vpop.f32.mrf.mxu0
    %v3399 = vadd.f32 %v3370, %v3398
    %v3400 = vpop.f32.mrf.mxu0
    %v3401 = vadd.f32 %v3372, %v3400
    %3402 = vmatmul.bf16.gmra.mxu0 %v819
    %v3403 = vpop.f32.mrf.mxu0
    %v3404 = vadd.f32 %v3375, %v3403
    %v3405 = vpop.f32.mrf.mxu0
    %v3406 = vadd.f32 %v3377, %v3405
    %3407 = vdwg.mxu0
    %3408 = vmatpush.bf16.msra.mxu0 %v2420
    %3409 = vmatpush.bf16.msra.mxu0 %v2415
    %3410 = vmatpush.bf16.msra.mxu0 %v2410
    %3411 = vmatpush.bf16.msra.mxu0 %v2405
    %3412 = vmatpush.bf16.msra.mxu0 %v2400
    %3413 = vmatpush.bf16.msra.mxu0 %v2395
    %3414 = vmatpush.bf16.msra.mxu0 %v2390
    %3415 = vmatpush.bf16.msra.mxu0 %v2385
    %3416 = vmatmul.bf16.gmra.mxu0 %v790
    %v3417 = vpop.f32.mrf.mxu0
    %v3418 = vadd.f32 %v3389, %v3417
    %v3419 = vpop.f32.mrf.mxu0
    %v3420 = vadd.f32 %v3391, %v3419
    %3421 = vmatmul.bf16.gmra.mxu0 %v800
    %v3422 = vpop.f32.mrf.mxu0
    %v3423 = vadd.f32 %v3394, %v3422
    %v3424 = vpop.f32.mrf.mxu0
    %v3425 = vadd.f32 %v3396, %v3424
    %3426 = vmatmul.bf16.gmra.mxu0 %v810
    %v3427 = vpop.f32.mrf.mxu0
    %v3428 = vadd.f32 %v3399, %v3427
    %v3429 = vpop.f32.mrf.mxu0
    %v3430 = vadd.f32 %v3401, %v3429
    %3431 = vmatmul.bf16.gmra.mxu0 %v820
    %v3432 = vpop.f32.mrf.mxu0
    %v3433 = vadd.f32 %v3404, %v3432
    %v3434 = vpop.f32.mrf.mxu0
    %v3435 = vadd.f32 %v3406, %v3434
    %3436 = vdwg.mxu0
    %3437 = vmatpush.bf16.msra.mxu0 %v2460
    %3438 = vmatpush.bf16.msra.mxu0 %v2455
    %3439 = vmatpush.bf16.msra.mxu0 %v2450
    %3440 = vmatpush.bf16.msra.mxu0 %v2445
    %3441 = vmatpush.bf16.msra.mxu0 %v2440
    %3442 = vmatpush.bf16.msra.mxu0 %v2435
    %3443 = vmatpush.bf16.msra.mxu0 %v2430
    %3444 = vmatpush.bf16.msra.mxu0 %v2425
    %3445 = vmatmul.bf16.gmra.mxu0 %v791
    %v3446 = vpop.f32.mrf.mxu0
    %v3447 = vadd.f32 %v3418, %v3446
    %v3448 = vpop.f32.mrf.mxu0
    %v3449 = vadd.f32 %v3420, %v3448
    %3450 = vmatmul.bf16.gmra.mxu0 %v801
    %v3451 = vpop.f32.mrf.mxu0
    %v3452 = vadd.f32 %v3423, %v3451
    %v3453 = vpop.f32.mrf.mxu0
    %v3454 = vadd.f32 %v3425, %v3453
    %3455 = vmatmul.bf16.gmra.mxu0 %v811
    %v3456 = vpop.f32.mrf.mxu0
    %v3457 = vadd.f32 %v3428, %v3456
    %v3458 = vpop.f32.mrf.mxu0
    %v3459 = vadd.f32 %v3430, %v3458
    %3460 = vmatmul.bf16.gmra.mxu0 %v821
    %v3461 = vpop.f32.mrf.mxu0
    %v3462 = vadd.f32 %v3433, %v3461
    %v3463 = vpop.f32.mrf.mxu0
    %v3464 = vadd.f32 %v3435, %v3463
    %3465 = vdwg.mxu0
    %3466 = vmatpush.bf16.msra.mxu0 %v2500
    %3467 = vmatpush.bf16.msra.mxu0 %v2495
    %3468 = vmatpush.bf16.msra.mxu0 %v2490
    %3469 = vmatpush.bf16.msra.mxu0 %v2485
    %3470 = vmatpush.bf16.msra.mxu0 %v2480
    %3471 = vmatpush.bf16.msra.mxu0 %v2475
    %3472 = vmatpush.bf16.msra.mxu0 %v2470
    %3473 = vmatpush.bf16.msra.mxu0 %v2465
    %3474 = vmatmul.bf16.gmra.mxu0 %v792
    %v3475 = vpop.f32.mrf.mxu0
    %v3476 = vadd.f32 %v3447, %v3475
    %v3477 = vpop.f32.mrf.mxu0
    %v3478 = vadd.f32 %v3449, %v3477
    %3479 = vmatmul.bf16.gmra.mxu0 %v802
    %v3480 = vpop.f32.mrf.mxu0
    %v3481 = vadd.f32 %v3452, %v3480
    %v3482 = vpop.f32.mrf.mxu0
    %v3483 = vadd.f32 %v3454, %v3482
    %3484 = vmatmul.bf16.gmra.mxu0 %v812
    %v3485 = vpop.f32.mrf.mxu0
    %v3486 = vadd.f32 %v3457, %v3485
    %v3487 = vpop.f32.mrf.mxu0
    %v3488 = vadd.f32 %v3459, %v3487
    %3489 = vmatmul.bf16.gmra.mxu0 %v822
    %v3490 = vpop.f32.mrf.mxu0
    %v3491 = vadd.f32 %v3462, %v3490
    %v3492 = vpop.f32.mrf.mxu0
    %v3493 = vadd.f32 %v3464, %v3492
    %3494 = vdwg.mxu0
    %3495 = vmatpush.bf16.msra.mxu0 %v2540
    %3496 = vmatpush.bf16.msra.mxu0 %v2535
    %3497 = vmatpush.bf16.msra.mxu0 %v2530
    %3498 = vmatpush.bf16.msra.mxu0 %v2525
    %3499 = vmatpush.bf16.msra.mxu0 %v2520
    %3500 = vmatpush.bf16.msra.mxu0 %v2515
    %3501 = vmatpush.bf16.msra.mxu0 %v2510
    %3502 = vmatpush.bf16.msra.mxu0 %v2505
    %3503 = vmatmul.bf16.gmra.mxu0 %v793
    %v3504 = vpop.f32.mrf.mxu0
    %v3505 = vadd.f32 %v3476, %v3504
    %v3506 = vpop.f32.mrf.mxu0
    %v3507 = vadd.f32 %v3478, %v3506
    %3508 = vmatmul.bf16.gmra.mxu0 %v803
    %v3509 = vpop.f32.mrf.mxu0
    %v3510 = vadd.f32 %v3481, %v3509
    %v3511 = vpop.f32.mrf.mxu0
    %v3512 = vadd.f32 %v3483, %v3511
    %3513 = vmatmul.bf16.gmra.mxu0 %v813
    %v3514 = vpop.f32.mrf.mxu0
    %v3515 = vadd.f32 %v3486, %v3514
    %v3516 = vpop.f32.mrf.mxu0
    %v3517 = vadd.f32 %v3488, %v3516
    %3518 = vmatmul.bf16.gmra.mxu0 %v823
    %v3519 = vpop.f32.mrf.mxu0
    %v3520 = vadd.f32 %v3491, %v3519
    %v3521 = vpop.f32.mrf.mxu0
    %v3522 = vadd.f32 %v3493, %v3521
    %3523 = vdwg.mxu0
    %3524 = vmatpush.bf16.msra.mxu0 %v2181
    %3525 = vmatpush.bf16.msra.mxu0 %v2176
    %3526 = vmatpush.bf16.msra.mxu0 %v2171
    %3527 = vmatpush.bf16.msra.mxu0 %v2166
    %3528 = vmatpush.bf16.msra.mxu0 %v2161
    %3529 = vmatpush.bf16.msra.mxu0 %v2156
    %3530 = vmatpush.bf16.msra.mxu0 %v2151
    %3531 = vmatpush.bf16.msra.mxu0 %v2146
    %3532 = vmatmul.bf16.gmra.mxu0 %v784
    %v3533 = vpop.f32.mrf.mxu0
    %v3534 = vadd.f32 0.0, %v3533
    %v3535 = vpop.f32.mrf.mxu0
    %v3536 = vadd.f32 0.0, %v3535
    %3537 = vmatmul.bf16.gmra.mxu0 %v794
    %v3538 = vpop.f32.mrf.mxu0
    %v3539 = vadd.f32 0.0, %v3538
    %v3540 = vpop.f32.mrf.mxu0
    %v3541 = vadd.f32 0.0, %v3540
    %3542 = vmatmul.bf16.gmra.mxu0 %v804
    %v3543 = vpop.f32.mrf.mxu0
    %v3544 = vadd.f32 0.0, %v3543
    %v3545 = vpop.f32.mrf.mxu0
    %v3546 = vadd.f32 0.0, %v3545
    %3547 = vmatmul.bf16.gmra.mxu0 %v814
    %v3548 = vpop.f32.mrf.mxu0
    %v3549 = vadd.f32 0.0, %v3548
    %v3550 = vpop.f32.mrf.mxu0
    %v3551 = vadd.f32 0.0, %v3550
    %3552 = vdwg.mxu0
    %3553 = vmatpush.bf16.msra.mxu0 %v2221
    %3554 = vmatpush.bf16.msra.mxu0 %v2216
    %3555 = vmatpush.bf16.msra.mxu0 %v2211
    %3556 = vmatpush.bf16.msra.mxu0 %v2206
    %3557 = vmatpush.bf16.msra.mxu0 %v2201
    %3558 = vmatpush.bf16.msra.mxu0 %v2196
    %3559 = vmatpush.bf16.msra.mxu0 %v2191
    %3560 = vmatpush.bf16.msra.mxu0 %v2186
    %3561 = vmatmul.bf16.gmra.mxu0 %v785
    %v3562 = vpop.f32.mrf.mxu0
    %v3563 = vadd.f32 %v3534, %v3562
    %v3564 = vpop.f32.mrf.mxu0
    %v3565 = vadd.f32 %v3536, %v3564
    %3566 = vmatmul.bf16.gmra.mxu0 %v795
    %v3567 = vpop.f32.mrf.mxu0
    %v3568 = vadd.f32 %v3539, %v3567
    %v3569 = vpop.f32.mrf.mxu0
    %v3570 = vadd.f32 %v3541, %v3569
    %3571 = vmatmul.bf16.gmra.mxu0 %v805
    %v3572 = vpop.f32.mrf.mxu0
    %v3573 = vadd.f32 %v3544, %v3572
    %v3574 = vpop.f32.mrf.mxu0
    %v3575 = vadd.f32 %v3546, %v3574
    %3576 = vmatmul.bf16.gmra.mxu0 %v815
    %v3577 = vpop.f32.mrf.mxu0
    %v3578 = vadd.f32 %v3549, %v3577
    %v3579 = vpop.f32.mrf.mxu0
    %v3580 = vadd.f32 %v3551, %v3579
    %3581 = vdwg.mxu0
    %3582 = vmatpush.bf16.msra.mxu0 %v2261
    %3583 = vmatpush.bf16.msra.mxu0 %v2256
    %3584 = vmatpush.bf16.msra.mxu0 %v2251
    %3585 = vmatpush.bf16.msra.mxu0 %v2246
    %3586 = vmatpush.bf16.msra.mxu0 %v2241
    %3587 = vmatpush.bf16.msra.mxu0 %v2236
    %3588 = vmatpush.bf16.msra.mxu0 %v2231
    %3589 = vmatpush.bf16.msra.mxu0 %v2226
    %3590 = vmatmul.bf16.gmra.mxu0 %v786
    %v3591 = vpop.f32.mrf.mxu0
    %v3592 = vadd.f32 %v3563, %v3591
    %v3593 = vpop.f32.mrf.mxu0
    %v3594 = vadd.f32 %v3565, %v3593
    %3595 = vmatmul.bf16.gmra.mxu0 %v796
    %v3596 = vpop.f32.mrf.mxu0
    %v3597 = vadd.f32 %v3568, %v3596
    %v3598 = vpop.f32.mrf.mxu0
    %v3599 = vadd.f32 %v3570, %v3598
    %3600 = vmatmul.bf16.gmra.mxu0 %v806
    %v3601 = vpop.f32.mrf.mxu0
    %v3602 = vadd.f32 %v3573, %v3601
    %v3603 = vpop.f32.mrf.mxu0
    %v3604 = vadd.f32 %v3575, %v3603
    %3605 = vmatmul.bf16.gmra.mxu0 %v816
    %v3606 = vpop.f32.mrf.mxu0
    %v3607 = vadd.f32 %v3578, %v3606
    %v3608 = vpop.f32.mrf.mxu0
    %v3609 = vadd.f32 %v3580, %v3608
    %3610 = vdwg.mxu0
    %3611 = vmatpush.bf16.msra.mxu0 %v2301
    %3612 = vmatpush.bf16.msra.mxu0 %v2296
    %3613 = vmatpush.bf16.msra.mxu0 %v2291
    %3614 = vmatpush.bf16.msra.mxu0 %v2286
    %3615 = vmatpush.bf16.msra.mxu0 %v2281
    %3616 = vmatpush.bf16.msra.mxu0 %v2276
    %3617 = vmatpush.bf16.msra.mxu0 %v2271
    %3618 = vmatpush.bf16.msra.mxu0 %v2266
    %3619 = vmatmul.bf16.gmra.mxu0 %v787
    %v3620 = vpop.f32.mrf.mxu0
    %v3621 = vadd.f32 %v3592, %v3620
    %v3622 = vpop.f32.mrf.mxu0
    %v3623 = vadd.f32 %v3594, %v3622
    %3624 = vmatmul.bf16.gmra.mxu0 %v797
    %v3625 = vpop.f32.mrf.mxu0
    %v3626 = vadd.f32 %v3597, %v3625
    %v3627 = vpop.f32.mrf.mxu0
    %v3628 = vadd.f32 %v3599, %v3627
    %3629 = vmatmul.bf16.gmra.mxu0 %v807
    %v3630 = vpop.f32.mrf.mxu0
    %v3631 = vadd.f32 %v3602, %v3630
    %v3632 = vpop.f32.mrf.mxu0
    %v3633 = vadd.f32 %v3604, %v3632
    %3634 = vmatmul.bf16.gmra.mxu0 %v817
    %v3635 = vpop.f32.mrf.mxu0
    %v3636 = vadd.f32 %v3607, %v3635
    %v3637 = vpop.f32.mrf.mxu0
    %v3638 = vadd.f32 %v3609, %v3637
    %3639 = vdwg.mxu0
    %3640 = vmatpush.bf16.msra.mxu0 %v2341
    %3641 = vmatpush.bf16.msra.mxu0 %v2336
    %3642 = vmatpush.bf16.msra.mxu0 %v2331
    %3643 = vmatpush.bf16.msra.mxu0 %v2326
    %3644 = vmatpush.bf16.msra.mxu0 %v2321
    %3645 = vmatpush.bf16.msra.mxu0 %v2316
    %3646 = vmatpush.bf16.msra.mxu0 %v2311
    %3647 = vmatpush.bf16.msra.mxu0 %v2306
    %3648 = vmatmul.bf16.gmra.mxu0 %v788
    %v3649 = vpop.f32.mrf.mxu0
    %v3650 = vadd.f32 %v3621, %v3649
    %v3651 = vpop.f32.mrf.mxu0
    %v3652 = vadd.f32 %v3623, %v3651
    %3653 = vmatmul.bf16.gmra.mxu0 %v798
    %v3654 = vpop.f32.mrf.mxu0
    %v3655 = vadd.f32 %v3626, %v3654
    %v3656 = vpop.f32.mrf.mxu0
    %v3657 = vadd.f32 %v3628, %v3656
    %3658 = vmatmul.bf16.gmra.mxu0 %v808
    %v3659 = vpop.f32.mrf.mxu0
    %v3660 = vadd.f32 %v3631, %v3659
    %v3661 = vpop.f32.mrf.mxu0
    %v3662 = vadd.f32 %v3633, %v3661
    %3663 = vmatmul.bf16.gmra.mxu0 %v818
    %v3664 = vpop.f32.mrf.mxu0
    %v3665 = vadd.f32 %v3636, %v3664
    %v3666 = vpop.f32.mrf.mxu0
    %v3667 = vadd.f32 %v3638, %v3666
    %3668 = vdwg.mxu0
    %3669 = vmatpush.bf16.msra.mxu0 %v2381
    %3670 = vmatpush.bf16.msra.mxu0 %v2376
    %3671 = vmatpush.bf16.msra.mxu0 %v2371
    %3672 = vmatpush.bf16.msra.mxu0 %v2366
    %3673 = vmatpush.bf16.msra.mxu0 %v2361
    %3674 = vmatpush.bf16.msra.mxu0 %v2356
    %3675 = vmatpush.bf16.msra.mxu0 %v2351
    %3676 = vmatpush.bf16.msra.mxu0 %v2346
    %3677 = vmatmul.bf16.gmra.mxu0 %v789
    %v3678 = vpop.f32.mrf.mxu0
    %v3679 = vadd.f32 %v3650, %v3678
    %v3680 = vpop.f32.mrf.mxu0
    %v3681 = vadd.f32 %v3652, %v3680
    %3682 = vmatmul.bf16.gmra.mxu0 %v799
    %v3683 = vpop.f32.mrf.mxu0
    %v3684 = vadd.f32 %v3655, %v3683
    %v3685 = vpop.f32.mrf.mxu0
    %v3686 = vadd.f32 %v3657, %v3685
    %3687 = vmatmul.bf16.gmra.mxu0 %v809
    %v3688 = vpop.f32.mrf.mxu0
    %v3689 = vadd.f32 %v3660, %v3688
    %v3690 = vpop.f32.mrf.mxu0
    %v3691 = vadd.f32 %v3662, %v3690
    %3692 = vmatmul.bf16.gmra.mxu0 %v819
    %v3693 = vpop.f32.mrf.mxu0
    %v3694 = vadd.f32 %v3665, %v3693
    %v3695 = vpop.f32.mrf.mxu0
    %v3696 = vadd.f32 %v3667, %v3695
    %3697 = vdwg.mxu0
    %3698 = vmatpush.bf16.msra.mxu0 %v2421
    %3699 = vmatpush.bf16.msra.mxu0 %v2416
    %3700 = vmatpush.bf16.msra.mxu0 %v2411
    %3701 = vmatpush.bf16.msra.mxu0 %v2406
    %3702 = vmatpush.bf16.msra.mxu0 %v2401
    %3703 = vmatpush.bf16.msra.mxu0 %v2396
    %3704 = vmatpush.bf16.msra.mxu0 %v2391
    %3705 = vmatpush.bf16.msra.mxu0 %v2386
    %3706 = vmatmul.bf16.gmra.mxu0 %v790
    %v3707 = vpop.f32.mrf.mxu0
    %v3708 = vadd.f32 %v3679, %v3707
    %v3709 = vpop.f32.mrf.mxu0
    %v3710 = vadd.f32 %v3681, %v3709
    %3711 = vmatmul.bf16.gmra.mxu0 %v800
    %v3712 = vpop.f32.mrf.mxu0
    %v3713 = vadd.f32 %v3684, %v3712
    %v3714 = vpop.f32.mrf.mxu0
    %v3715 = vadd.f32 %v3686, %v3714
    %3716 = vmatmul.bf16.gmra.mxu0 %v810
    %v3717 = vpop.f32.mrf.mxu0
    %v3718 = vadd.f32 %v3689, %v3717
    %v3719 = vpop.f32.mrf.mxu0
    %v3720 = vadd.f32 %v3691, %v3719
    %3721 = vmatmul.bf16.gmra.mxu0 %v820
    %v3722 = vpop.f32.mrf.mxu0
    %v3723 = vadd.f32 %v3694, %v3722
    %v3724 = vpop.f32.mrf.mxu0
    %v3725 = vadd.f32 %v3696, %v3724
    %3726 = vdwg.mxu0
    %3727 = vmatpush.bf16.msra.mxu0 %v2461
    %3728 = vmatpush.bf16.msra.mxu0 %v2456
    %3729 = vmatpush.bf16.msra.mxu0 %v2451
    %3730 = vmatpush.bf16.msra.mxu0 %v2446
    %3731 = vmatpush.bf16.msra.mxu0 %v2441
    %3732 = vmatpush.bf16.msra.mxu0 %v2436
    %3733 = vmatpush.bf16.msra.mxu0 %v2431
    %3734 = vmatpush.bf16.msra.mxu0 %v2426
    %3735 = vmatmul.bf16.gmra.mxu0 %v791
    %v3736 = vpop.f32.mrf.mxu0
    %v3737 = vadd.f32 %v3708, %v3736
    %v3738 = vpop.f32.mrf.mxu0
    %v3739 = vadd.f32 %v3710, %v3738
    %3740 = vmatmul.bf16.gmra.mxu0 %v801
    %v3741 = vpop.f32.mrf.mxu0
    %v3742 = vadd.f32 %v3713, %v3741
    %v3743 = vpop.f32.mrf.mxu0
    %v3744 = vadd.f32 %v3715, %v3743
    %3745 = vmatmul.bf16.gmra.mxu0 %v811
    %v3746 = vpop.f32.mrf.mxu0
    %v3747 = vadd.f32 %v3718, %v3746
    %v3748 = vpop.f32.mrf.mxu0
    %v3749 = vadd.f32 %v3720, %v3748
    %3750 = vmatmul.bf16.gmra.mxu0 %v821
    %v3751 = vpop.f32.mrf.mxu0
    %v3752 = vadd.f32 %v3723, %v3751
    %v3753 = vpop.f32.mrf.mxu0
    %v3754 = vadd.f32 %v3725, %v3753
    %3755 = vdwg.mxu0
    %3756 = vmatpush.bf16.msra.mxu0 %v2501
    %3757 = vmatpush.bf16.msra.mxu0 %v2496
    %3758 = vmatpush.bf16.msra.mxu0 %v2491
    %3759 = vmatpush.bf16.msra.mxu0 %v2486
    %3760 = vmatpush.bf16.msra.mxu0 %v2481
    %3761 = vmatpush.bf16.msra.mxu0 %v2476
    %3762 = vmatpush.bf16.msra.mxu0 %v2471
    %3763 = vmatpush.bf16.msra.mxu0 %v2466
    %3764 = vmatmul.bf16.gmra.mxu0 %v792
    %v3765 = vpop.f32.mrf.mxu0
    %v3766 = vadd.f32 %v3737, %v3765
    %v3767 = vpop.f32.mrf.mxu0
    %v3768 = vadd.f32 %v3739, %v3767
    %3769 = vmatmul.bf16.gmra.mxu0 %v802
    %v3770 = vpop.f32.mrf.mxu0
    %v3771 = vadd.f32 %v3742, %v3770
    %v3772 = vpop.f32.mrf.mxu0
    %v3773 = vadd.f32 %v3744, %v3772
    %3774 = vmatmul.bf16.gmra.mxu0 %v812
    %v3775 = vpop.f32.mrf.mxu0
    %v3776 = vadd.f32 %v3747, %v3775
    %v3777 = vpop.f32.mrf.mxu0
    %v3778 = vadd.f32 %v3749, %v3777
    %3779 = vmatmul.bf16.gmra.mxu0 %v822
    %v3780 = vpop.f32.mrf.mxu0
    %v3781 = vadd.f32 %v3752, %v3780
    %v3782 = vpop.f32.mrf.mxu0
    %v3783 = vadd.f32 %v3754, %v3782
    %3784 = vdwg.mxu0
    %3785 = vmatpush.bf16.msra.mxu0 %v2541
    %3786 = vmatpush.bf16.msra.mxu0 %v2536
    %3787 = vmatpush.bf16.msra.mxu0 %v2531
    %3788 = vmatpush.bf16.msra.mxu0 %v2526
    %3789 = vmatpush.bf16.msra.mxu0 %v2521
    %3790 = vmatpush.bf16.msra.mxu0 %v2516
    %3791 = vmatpush.bf16.msra.mxu0 %v2511
    %3792 = vmatpush.bf16.msra.mxu0 %v2506
    %3793 = vmatmul.bf16.gmra.mxu0 %v793
    %v3794 = vpop.f32.mrf.mxu0
    %v3795 = vadd.f32 %v3766, %v3794
    %v3796 = vpop.f32.mrf.mxu0
    %v3797 = vadd.f32 %v3768, %v3796
    %3798 = vmatmul.bf16.gmra.mxu0 %v803
    %v3799 = vpop.f32.mrf.mxu0
    %v3800 = vadd.f32 %v3771, %v3799
    %v3801 = vpop.f32.mrf.mxu0
    %v3802 = vadd.f32 %v3773, %v3801
    %3803 = vmatmul.bf16.gmra.mxu0 %v813
    %v3804 = vpop.f32.mrf.mxu0
    %v3805 = vadd.f32 %v3776, %v3804
    %v3806 = vpop.f32.mrf.mxu0
    %v3807 = vadd.f32 %v3778, %v3806
    %3808 = vmatmul.bf16.gmra.mxu0 %v823
    %v3809 = vpop.f32.mrf.mxu0
    %v3810 = vadd.f32 %v3781, %v3809
    %v3811 = vpop.f32.mrf.mxu0
    %v3812 = vadd.f32 %v3783, %v3811
    %3813 = vdwg.mxu0
    %3814 = vmatpush.bf16.msra.mxu0 %v2182
    %3815 = vmatpush.bf16.msra.mxu0 %v2177
    %3816 = vmatpush.bf16.msra.mxu0 %v2172
    %3817 = vmatpush.bf16.msra.mxu0 %v2167
    %3818 = vmatpush.bf16.msra.mxu0 %v2162
    %3819 = vmatpush.bf16.msra.mxu0 %v2157
    %3820 = vmatpush.bf16.msra.mxu0 %v2152
    %3821 = vmatpush.bf16.msra.mxu0 %v2147
    %3822 = vmatmul.bf16.gmra.mxu0 %v784
    %v3823 = vpop.f32.mrf.mxu0
    %v3824 = vadd.f32 0.0, %v3823
    %v3825 = vpop.f32.mrf.mxu0
    %v3826 = vadd.f32 0.0, %v3825
    %3827 = vmatmul.bf16.gmra.mxu0 %v794
    %v3828 = vpop.f32.mrf.mxu0
    %v3829 = vadd.f32 0.0, %v3828
    %v3830 = vpop.f32.mrf.mxu0
    %v3831 = vadd.f32 0.0, %v3830
    %3832 = vmatmul.bf16.gmra.mxu0 %v804
    %v3833 = vpop.f32.mrf.mxu0
    %v3834 = vadd.f32 0.0, %v3833
    %v3835 = vpop.f32.mrf.mxu0
    %v3836 = vadd.f32 0.0, %v3835
    %3837 = vmatmul.bf16.gmra.mxu0 %v814
    %v3838 = vpop.f32.mrf.mxu0
    %v3839 = vadd.f32 0.0, %v3838
    %v3840 = vpop.f32.mrf.mxu0
    %v3841 = vadd.f32 0.0, %v3840
    %3842 = vdwg.mxu0
    %3843 = vmatpush.bf16.msra.mxu0 %v2222
    %3844 = vmatpush.bf16.msra.mxu0 %v2217
    %3845 = vmatpush.bf16.msra.mxu0 %v2212
    %3846 = vmatpush.bf16.msra.mxu0 %v2207
    %3847 = vmatpush.bf16.msra.mxu0 %v2202
    %3848 = vmatpush.bf16.msra.mxu0 %v2197
    %3849 = vmatpush.bf16.msra.mxu0 %v2192
    %3850 = vmatpush.bf16.msra.mxu0 %v2187
    %3851 = vmatmul.bf16.gmra.mxu0 %v785
    %v3852 = vpop.f32.mrf.mxu0
    %v3853 = vadd.f32 %v3824, %v3852
    %v3854 = vpop.f32.mrf.mxu0
    %v3855 = vadd.f32 %v3826, %v3854
    %3856 = vmatmul.bf16.gmra.mxu0 %v795
    %v3857 = vpop.f32.mrf.mxu0
    %v3858 = vadd.f32 %v3829, %v3857
    %v3859 = vpop.f32.mrf.mxu0
    %v3860 = vadd.f32 %v3831, %v3859
    %3861 = vmatmul.bf16.gmra.mxu0 %v805
    %v3862 = vpop.f32.mrf.mxu0
    %v3863 = vadd.f32 %v3834, %v3862
    %v3864 = vpop.f32.mrf.mxu0
    %v3865 = vadd.f32 %v3836, %v3864
    %3866 = vmatmul.bf16.gmra.mxu0 %v815
    %v3867 = vpop.f32.mrf.mxu0
    %v3868 = vadd.f32 %v3839, %v3867
    %v3869 = vpop.f32.mrf.mxu0
    %v3870 = vadd.f32 %v3841, %v3869
    %3871 = vdwg.mxu0
    %3872 = vmatpush.bf16.msra.mxu0 %v2262
    %3873 = vmatpush.bf16.msra.mxu0 %v2257
    %3874 = vmatpush.bf16.msra.mxu0 %v2252
    %3875 = vmatpush.bf16.msra.mxu0 %v2247
    %3876 = vmatpush.bf16.msra.mxu0 %v2242
    %3877 = vmatpush.bf16.msra.mxu0 %v2237
    %3878 = vmatpush.bf16.msra.mxu0 %v2232
    %3879 = vmatpush.bf16.msra.mxu0 %v2227
    %3880 = vmatmul.bf16.gmra.mxu0 %v786
    %v3881 = vpop.f32.mrf.mxu0
    %v3882 = vadd.f32 %v3853, %v3881
    %v3883 = vpop.f32.mrf.mxu0
    %v3884 = vadd.f32 %v3855, %v3883
    %3885 = vmatmul.bf16.gmra.mxu0 %v796
    %v3886 = vpop.f32.mrf.mxu0
    %v3887 = vadd.f32 %v3858, %v3886
    %v3888 = vpop.f32.mrf.mxu0
    %v3889 = vadd.f32 %v3860, %v3888
    %3890 = vmatmul.bf16.gmra.mxu0 %v806
    %v3891 = vpop.f32.mrf.mxu0
    %v3892 = vadd.f32 %v3863, %v3891
    %v3893 = vpop.f32.mrf.mxu0
    %v3894 = vadd.f32 %v3865, %v3893
    %3895 = vmatmul.bf16.gmra.mxu0 %v816
    %v3896 = vpop.f32.mrf.mxu0
    %v3897 = vadd.f32 %v3868, %v3896
    %v3898 = vpop.f32.mrf.mxu0
    %v3899 = vadd.f32 %v3870, %v3898
    %3900 = vdwg.mxu0
    %3901 = vmatpush.bf16.msra.mxu0 %v2302
    %3902 = vmatpush.bf16.msra.mxu0 %v2297
    %3903 = vmatpush.bf16.msra.mxu0 %v2292
    %3904 = vmatpush.bf16.msra.mxu0 %v2287
    %3905 = vmatpush.bf16.msra.mxu0 %v2282
    %3906 = vmatpush.bf16.msra.mxu0 %v2277
    %3907 = vmatpush.bf16.msra.mxu0 %v2272
    %3908 = vmatpush.bf16.msra.mxu0 %v2267
    %3909 = vmatmul.bf16.gmra.mxu0 %v787
    %v3910 = vpop.f32.mrf.mxu0
    %v3911 = vadd.f32 %v3882, %v3910
    %v3912 = vpop.f32.mrf.mxu0
    %v3913 = vadd.f32 %v3884, %v3912
    %3914 = vmatmul.bf16.gmra.mxu0 %v797
    %v3915 = vpop.f32.mrf.mxu0
    %v3916 = vadd.f32 %v3887, %v3915
    %v3917 = vpop.f32.mrf.mxu0
    %v3918 = vadd.f32 %v3889, %v3917
    %3919 = vmatmul.bf16.gmra.mxu0 %v807
    %v3920 = vpop.f32.mrf.mxu0
    %v3921 = vadd.f32 %v3892, %v3920
    %v3922 = vpop.f32.mrf.mxu0
    %v3923 = vadd.f32 %v3894, %v3922
    %3924 = vmatmul.bf16.gmra.mxu0 %v817
    %v3925 = vpop.f32.mrf.mxu0
    %v3926 = vadd.f32 %v3897, %v3925
    %v3927 = vpop.f32.mrf.mxu0
    %v3928 = vadd.f32 %v3899, %v3927
    %3929 = vdwg.mxu0
    %3930 = vmatpush.bf16.msra.mxu0 %v2342
    %3931 = vmatpush.bf16.msra.mxu0 %v2337
    %3932 = vmatpush.bf16.msra.mxu0 %v2332
    %3933 = vmatpush.bf16.msra.mxu0 %v2327
    %3934 = vmatpush.bf16.msra.mxu0 %v2322
    %3935 = vmatpush.bf16.msra.mxu0 %v2317
    %3936 = vmatpush.bf16.msra.mxu0 %v2312
    %3937 = vmatpush.bf16.msra.mxu0 %v2307
    %3938 = vmatmul.bf16.gmra.mxu0 %v788
    %v3939 = vpop.f32.mrf.mxu0
    %v3940 = vadd.f32 %v3911, %v3939
    %v3941 = vpop.f32.mrf.mxu0
    %v3942 = vadd.f32 %v3913, %v3941
    %3943 = vmatmul.bf16.gmra.mxu0 %v798
    %v3944 = vpop.f32.mrf.mxu0
    %v3945 = vadd.f32 %v3916, %v3944
    %v3946 = vpop.f32.mrf.mxu0
    %v3947 = vadd.f32 %v3918, %v3946
    %3948 = vmatmul.bf16.gmra.mxu0 %v808
    %v3949 = vpop.f32.mrf.mxu0
    %v3950 = vadd.f32 %v3921, %v3949
    %v3951 = vpop.f32.mrf.mxu0
    %v3952 = vadd.f32 %v3923, %v3951
    %3953 = vmatmul.bf16.gmra.mxu0 %v818
    %v3954 = vpop.f32.mrf.mxu0
    %v3955 = vadd.f32 %v3926, %v3954
    %v3956 = vpop.f32.mrf.mxu0
    %v3957 = vadd.f32 %v3928, %v3956
    %3958 = vdwg.mxu0
    %3959 = vmatpush.bf16.msra.mxu0 %v2382
    %3960 = vmatpush.bf16.msra.mxu0 %v2377
    %3961 = vmatpush.bf16.msra.mxu0 %v2372
    %3962 = vmatpush.bf16.msra.mxu0 %v2367
    %3963 = vmatpush.bf16.msra.mxu0 %v2362
    %3964 = vmatpush.bf16.msra.mxu0 %v2357
    %3965 = vmatpush.bf16.msra.mxu0 %v2352
    %3966 = vmatpush.bf16.msra.mxu0 %v2347
    %3967 = vmatmul.bf16.gmra.mxu0 %v789
    %v3968 = vpop.f32.mrf.mxu0
    %v3969 = vadd.f32 %v3940, %v3968
    %v3970 = vpop.f32.mrf.mxu0
    %v3971 = vadd.f32 %v3942, %v3970
    %3972 = vmatmul.bf16.gmra.mxu0 %v799
    %v3973 = vpop.f32.mrf.mxu0
    %v3974 = vadd.f32 %v3945, %v3973
    %v3975 = vpop.f32.mrf.mxu0
    %v3976 = vadd.f32 %v3947, %v3975
    %3977 = vmatmul.bf16.gmra.mxu0 %v809
    %v3978 = vpop.f32.mrf.mxu0
    %v3979 = vadd.f32 %v3950, %v3978
    %v3980 = vpop.f32.mrf.mxu0
    %v3981 = vadd.f32 %v3952, %v3980
    %3982 = vmatmul.bf16.gmra.mxu0 %v819
    %v3983 = vpop.f32.mrf.mxu0
    %v3984 = vadd.f32 %v3955, %v3983
    %v3985 = vpop.f32.mrf.mxu0
    %v3986 = vadd.f32 %v3957, %v3985
    %3987 = vdwg.mxu0
    %3988 = vmatpush.bf16.msra.mxu0 %v2422
    %3989 = vmatpush.bf16.msra.mxu0 %v2417
    %3990 = vmatpush.bf16.msra.mxu0 %v2412
    %3991 = vmatpush.bf16.msra.mxu0 %v2407
    %3992 = vmatpush.bf16.msra.mxu0 %v2402
    %3993 = vmatpush.bf16.msra.mxu0 %v2397
    %3994 = vmatpush.bf16.msra.mxu0 %v2392
    %3995 = vmatpush.bf16.msra.mxu0 %v2387
    %3996 = vmatmul.bf16.gmra.mxu0 %v790
    %v3997 = vpop.f32.mrf.mxu0
    %v3998 = vadd.f32 %v3969, %v3997
    %v3999 = vpop.f32.mrf.mxu0
    %v4000 = vadd.f32 %v3971, %v3999
    %4001 = vmatmul.bf16.gmra.mxu0 %v800
    %v4002 = vpop.f32.mrf.mxu0
    %v4003 = vadd.f32 %v3974, %v4002
    %v4004 = vpop.f32.mrf.mxu0
    %v4005 = vadd.f32 %v3976, %v4004
    %4006 = vmatmul.bf16.gmra.mxu0 %v810
    %v4007 = vpop.f32.mrf.mxu0
    %v4008 = vadd.f32 %v3979, %v4007
    %v4009 = vpop.f32.mrf.mxu0
    %v4010 = vadd.f32 %v3981, %v4009
    %4011 = vmatmul.bf16.gmra.mxu0 %v820
    %v4012 = vpop.f32.mrf.mxu0
    %v4013 = vadd.f32 %v3984, %v4012
    %v4014 = vpop.f32.mrf.mxu0
    %v4015 = vadd.f32 %v3986, %v4014
    %4016 = vdwg.mxu0
    %4017 = vmatpush.bf16.msra.mxu0 %v2462
    %4018 = vmatpush.bf16.msra.mxu0 %v2457
    %4019 = vmatpush.bf16.msra.mxu0 %v2452
    %4020 = vmatpush.bf16.msra.mxu0 %v2447
    %4021 = vmatpush.bf16.msra.mxu0 %v2442
    %4022 = vmatpush.bf16.msra.mxu0 %v2437
    %4023 = vmatpush.bf16.msra.mxu0 %v2432
    %4024 = vmatpush.bf16.msra.mxu0 %v2427
    %4025 = vmatmul.bf16.gmra.mxu0 %v791
    %v4026 = vpop.f32.mrf.mxu0
    %v4027 = vadd.f32 %v3998, %v4026
    %v4028 = vpop.f32.mrf.mxu0
    %v4029 = vadd.f32 %v4000, %v4028
    %4030 = vmatmul.bf16.gmra.mxu0 %v801
    %v4031 = vpop.f32.mrf.mxu0
    %v4032 = vadd.f32 %v4003, %v4031
    %v4033 = vpop.f32.mrf.mxu0
    %v4034 = vadd.f32 %v4005, %v4033
    %4035 = vmatmul.bf16.gmra.mxu0 %v811
    %v4036 = vpop.f32.mrf.mxu0
    %v4037 = vadd.f32 %v4008, %v4036
    %v4038 = vpop.f32.mrf.mxu0
    %v4039 = vadd.f32 %v4010, %v4038
    %4040 = vmatmul.bf16.gmra.mxu0 %v821
    %v4041 = vpop.f32.mrf.mxu0
    %v4042 = vadd.f32 %v4013, %v4041
    %v4043 = vpop.f32.mrf.mxu0
    %v4044 = vadd.f32 %v4015, %v4043
    %4045 = vdwg.mxu0
    %4046 = vmatpush.bf16.msra.mxu0 %v2502
    %4047 = vmatpush.bf16.msra.mxu0 %v2497
    %4048 = vmatpush.bf16.msra.mxu0 %v2492
    %4049 = vmatpush.bf16.msra.mxu0 %v2487
    %4050 = vmatpush.bf16.msra.mxu0 %v2482
    %4051 = vmatpush.bf16.msra.mxu0 %v2477
    %4052 = vmatpush.bf16.msra.mxu0 %v2472
    %4053 = vmatpush.bf16.msra.mxu0 %v2467
    %4054 = vmatmul.bf16.gmra.mxu0 %v792
    %v4055 = vpop.f32.mrf.mxu0
    %v4056 = vadd.f32 %v4027, %v4055
    %v4057 = vpop.f32.mrf.mxu0
    %v4058 = vadd.f32 %v4029, %v4057
    %4059 = vmatmul.bf16.gmra.mxu0 %v802
    %v4060 = vpop.f32.mrf.mxu0
    %v4061 = vadd.f32 %v4032, %v4060
    %v4062 = vpop.f32.mrf.mxu0
    %v4063 = vadd.f32 %v4034, %v4062
    %4064 = vmatmul.bf16.gmra.mxu0 %v812
    %v4065 = vpop.f32.mrf.mxu0
    %v4066 = vadd.f32 %v4037, %v4065
    %v4067 = vpop.f32.mrf.mxu0
    %v4068 = vadd.f32 %v4039, %v4067
    %4069 = vmatmul.bf16.gmra.mxu0 %v822
    %v4070 = vpop.f32.mrf.mxu0
    %v4071 = vadd.f32 %v4042, %v4070
    %v4072 = vpop.f32.mrf.mxu0
    %v4073 = vadd.f32 %v4044, %v4072
    %4074 = vdwg.mxu0
    %4075 = vmatpush.bf16.msra.mxu0 %v2542
    %4076 = vmatpush.bf16.msra.mxu0 %v2537
    %4077 = vmatpush.bf16.msra.mxu0 %v2532
    %4078 = vmatpush.bf16.msra.mxu0 %v2527
    %4079 = vmatpush.bf16.msra.mxu0 %v2522
    %4080 = vmatpush.bf16.msra.mxu0 %v2517
    %4081 = vmatpush.bf16.msra.mxu0 %v2512
    %4082 = vmatpush.bf16.msra.mxu0 %v2507
    %4083 = vmatmul.bf16.gmra.mxu0 %v793
    %v4084 = vpop.f32.mrf.mxu0
    %v4085 = vadd.f32 %v4056, %v4084
    %v4086 = vpop.f32.mrf.mxu0
    %v4087 = vadd.f32 %v4058, %v4086
    %4088 = vmatmul.bf16.gmra.mxu0 %v803
    %v4089 = vpop.f32.mrf.mxu0
    %v4090 = vadd.f32 %v4061, %v4089
    %v4091 = vpop.f32.mrf.mxu0
    %v4092 = vadd.f32 %v4063, %v4091
    %4093 = vmatmul.bf16.gmra.mxu0 %v813
    %v4094 = vpop.f32.mrf.mxu0
    %v4095 = vadd.f32 %v4066, %v4094
    %v4096 = vpop.f32.mrf.mxu0
    %v4097 = vadd.f32 %v4068, %v4096
    %4098 = vmatmul.bf16.gmra.mxu0 %v823
    %v4099 = vpop.f32.mrf.mxu0
    %v4100 = vadd.f32 %v4071, %v4099
    %v4101 = vpop.f32.mrf.mxu0
    %v4102 = vadd.f32 %v4073, %v4101
    %4103 = vdwg.mxu0
    %4104 = vmatpush.bf16.msra.mxu0 %v2183
    %4105 = vmatpush.bf16.msra.mxu0 %v2178
    %4106 = vmatpush.bf16.msra.mxu0 %v2173
    %4107 = vmatpush.bf16.msra.mxu0 %v2168
    %4108 = vmatpush.bf16.msra.mxu0 %v2163
    %4109 = vmatpush.bf16.msra.mxu0 %v2158
    %4110 = vmatpush.bf16.msra.mxu0 %v2153
    %4111 = vmatpush.bf16.msra.mxu0 %v2148
    %4112 = vmatmul.bf16.gmra.mxu0 %v784
    %v4113 = vpop.f32.mrf.mxu0
    %v4114 = vadd.f32 0.0, %v4113
    %v4115 = vpop.f32.mrf.mxu0
    %v4116 = vadd.f32 0.0, %v4115
    %4117 = vmatmul.bf16.gmra.mxu0 %v794
    %v4118 = vpop.f32.mrf.mxu0
    %v4119 = vadd.f32 0.0, %v4118
    %v4120 = vpop.f32.mrf.mxu0
    %v4121 = vadd.f32 0.0, %v4120
    %4122 = vmatmul.bf16.gmra.mxu0 %v804
    %v4123 = vpop.f32.mrf.mxu0
    %v4124 = vadd.f32 0.0, %v4123
    %v4125 = vpop.f32.mrf.mxu0
    %v4126 = vadd.f32 0.0, %v4125
    %4127 = vmatmul.bf16.gmra.mxu0 %v814
    %v4128 = vpop.f32.mrf.mxu0
    %v4129 = vadd.f32 0.0, %v4128
    %v4130 = vpop.f32.mrf.mxu0
    %v4131 = vadd.f32 0.0, %v4130
    %4132 = vdwg.mxu0
    %4133 = vmatpush.bf16.msra.mxu0 %v2223
    %4134 = vmatpush.bf16.msra.mxu0 %v2218
    %4135 = vmatpush.bf16.msra.mxu0 %v2213
    %4136 = vmatpush.bf16.msra.mxu0 %v2208
    %4137 = vmatpush.bf16.msra.mxu0 %v2203
    %4138 = vmatpush.bf16.msra.mxu0 %v2198
    %4139 = vmatpush.bf16.msra.mxu0 %v2193
    %4140 = vmatpush.bf16.msra.mxu0 %v2188
    %4141 = vmatmul.bf16.gmra.mxu0 %v785
    %v4142 = vpop.f32.mrf.mxu0
    %v4143 = vadd.f32 %v4114, %v4142
    %v4144 = vpop.f32.mrf.mxu0
    %v4145 = vadd.f32 %v4116, %v4144
    %4146 = vmatmul.bf16.gmra.mxu0 %v795
    %v4147 = vpop.f32.mrf.mxu0
    %v4148 = vadd.f32 %v4119, %v4147
    %v4149 = vpop.f32.mrf.mxu0
    %v4150 = vadd.f32 %v4121, %v4149
    %4151 = vmatmul.bf16.gmra.mxu0 %v805
    %v4152 = vpop.f32.mrf.mxu0
    %v4153 = vadd.f32 %v4124, %v4152
    %v4154 = vpop.f32.mrf.mxu0
    %v4155 = vadd.f32 %v4126, %v4154
    %4156 = vmatmul.bf16.gmra.mxu0 %v815
    %v4157 = vpop.f32.mrf.mxu0
    %v4158 = vadd.f32 %v4129, %v4157
    %v4159 = vpop.f32.mrf.mxu0
    %v4160 = vadd.f32 %v4131, %v4159
    %4161 = vdwg.mxu0
    %4162 = vmatpush.bf16.msra.mxu0 %v2263
    %4163 = vmatpush.bf16.msra.mxu0 %v2258
    %4164 = vmatpush.bf16.msra.mxu0 %v2253
    %4165 = vmatpush.bf16.msra.mxu0 %v2248
    %4166 = vmatpush.bf16.msra.mxu0 %v2243
    %4167 = vmatpush.bf16.msra.mxu0 %v2238
    %4168 = vmatpush.bf16.msra.mxu0 %v2233
    %4169 = vmatpush.bf16.msra.mxu0 %v2228
    %4170 = vmatmul.bf16.gmra.mxu0 %v786
    %v4171 = vpop.f32.mrf.mxu0
    %v4172 = vadd.f32 %v4143, %v4171
    %v4173 = vpop.f32.mrf.mxu0
    %v4174 = vadd.f32 %v4145, %v4173
    %4175 = vmatmul.bf16.gmra.mxu0 %v796
    %v4176 = vpop.f32.mrf.mxu0
    %v4177 = vadd.f32 %v4148, %v4176
    %v4178 = vpop.f32.mrf.mxu0
    %v4179 = vadd.f32 %v4150, %v4178
    %4180 = vmatmul.bf16.gmra.mxu0 %v806
    %v4181 = vpop.f32.mrf.mxu0
    %v4182 = vadd.f32 %v4153, %v4181
    %v4183 = vpop.f32.mrf.mxu0
    %v4184 = vadd.f32 %v4155, %v4183
    %4185 = vmatmul.bf16.gmra.mxu0 %v816
    %v4186 = vpop.f32.mrf.mxu0
    %v4187 = vadd.f32 %v4158, %v4186
    %v4188 = vpop.f32.mrf.mxu0
    %v4189 = vadd.f32 %v4160, %v4188
    %4190 = vdwg.mxu0
    %4191 = vmatpush.bf16.msra.mxu0 %v2303
    %4192 = vmatpush.bf16.msra.mxu0 %v2298
    %4193 = vmatpush.bf16.msra.mxu0 %v2293
    %4194 = vmatpush.bf16.msra.mxu0 %v2288
    %4195 = vmatpush.bf16.msra.mxu0 %v2283
    %4196 = vmatpush.bf16.msra.mxu0 %v2278
    %4197 = vmatpush.bf16.msra.mxu0 %v2273
    %4198 = vmatpush.bf16.msra.mxu0 %v2268
    %4199 = vmatmul.bf16.gmra.mxu0 %v787
    %v4200 = vpop.f32.mrf.mxu0
    %v4201 = vadd.f32 %v4172, %v4200
    %v4202 = vpop.f32.mrf.mxu0
    %v4203 = vadd.f32 %v4174, %v4202
    %4204 = vmatmul.bf16.gmra.mxu0 %v797
    %v4205 = vpop.f32.mrf.mxu0
    %v4206 = vadd.f32 %v4177, %v4205
    %v4207 = vpop.f32.mrf.mxu0
    %v4208 = vadd.f32 %v4179, %v4207
    %4209 = vmatmul.bf16.gmra.mxu0 %v807
    %v4210 = vpop.f32.mrf.mxu0
    %v4211 = vadd.f32 %v4182, %v4210
    %v4212 = vpop.f32.mrf.mxu0
    %v4213 = vadd.f32 %v4184, %v4212
    %4214 = vmatmul.bf16.gmra.mxu0 %v817
    %v4215 = vpop.f32.mrf.mxu0
    %v4216 = vadd.f32 %v4187, %v4215
    %v4217 = vpop.f32.mrf.mxu0
    %v4218 = vadd.f32 %v4189, %v4217
    %4219 = vdwg.mxu0
    %4220 = vmatpush.bf16.msra.mxu0 %v2343
    %4221 = vmatpush.bf16.msra.mxu0 %v2338
    %4222 = vmatpush.bf16.msra.mxu0 %v2333
    %4223 = vmatpush.bf16.msra.mxu0 %v2328
    %4224 = vmatpush.bf16.msra.mxu0 %v2323
    %4225 = vmatpush.bf16.msra.mxu0 %v2318
    %4226 = vmatpush.bf16.msra.mxu0 %v2313
    %4227 = vmatpush.bf16.msra.mxu0 %v2308
    %4228 = vmatmul.bf16.gmra.mxu0 %v788
    %v4229 = vpop.f32.mrf.mxu0
    %v4230 = vadd.f32 %v4201, %v4229
    %v4231 = vpop.f32.mrf.mxu0
    %v4232 = vadd.f32 %v4203, %v4231
    %4233 = vmatmul.bf16.gmra.mxu0 %v798
    %v4234 = vpop.f32.mrf.mxu0
    %v4235 = vadd.f32 %v4206, %v4234
    %v4236 = vpop.f32.mrf.mxu0
    %v4237 = vadd.f32 %v4208, %v4236
    %4238 = vmatmul.bf16.gmra.mxu0 %v808
    %v4239 = vpop.f32.mrf.mxu0
    %v4240 = vadd.f32 %v4211, %v4239
    %v4241 = vpop.f32.mrf.mxu0
    %v4242 = vadd.f32 %v4213, %v4241
    %4243 = vmatmul.bf16.gmra.mxu0 %v818
    %v4244 = vpop.f32.mrf.mxu0
    %v4245 = vadd.f32 %v4216, %v4244
    %v4246 = vpop.f32.mrf.mxu0
    %v4247 = vadd.f32 %v4218, %v4246
    %4248 = vdwg.mxu0
    %4249 = vmatpush.bf16.msra.mxu0 %v2383
    %4250 = vmatpush.bf16.msra.mxu0 %v2378
    %4251 = vmatpush.bf16.msra.mxu0 %v2373
    %4252 = vmatpush.bf16.msra.mxu0 %v2368
    %4253 = vmatpush.bf16.msra.mxu0 %v2363
    %4254 = vmatpush.bf16.msra.mxu0 %v2358
    %4255 = vmatpush.bf16.msra.mxu0 %v2353
    %4256 = vmatpush.bf16.msra.mxu0 %v2348
    %4257 = vmatmul.bf16.gmra.mxu0 %v789
    %v4258 = vpop.f32.mrf.mxu0
    %v4259 = vadd.f32 %v4230, %v4258
    %v4260 = vpop.f32.mrf.mxu0
    %v4261 = vadd.f32 %v4232, %v4260
    %4262 = vmatmul.bf16.gmra.mxu0 %v799
    %v4263 = vpop.f32.mrf.mxu0
    %v4264 = vadd.f32 %v4235, %v4263
    %v4265 = vpop.f32.mrf.mxu0
    %v4266 = vadd.f32 %v4237, %v4265
    %4267 = vmatmul.bf16.gmra.mxu0 %v809
    %v4268 = vpop.f32.mrf.mxu0
    %v4269 = vadd.f32 %v4240, %v4268
    %v4270 = vpop.f32.mrf.mxu0
    %v4271 = vadd.f32 %v4242, %v4270
    %4272 = vmatmul.bf16.gmra.mxu0 %v819
    %v4273 = vpop.f32.mrf.mxu0
    %v4274 = vadd.f32 %v4245, %v4273
    %v4275 = vpop.f32.mrf.mxu0
    %v4276 = vadd.f32 %v4247, %v4275
    %4277 = vdwg.mxu0
    %4278 = vmatpush.bf16.msra.mxu0 %v2423
    %4279 = vmatpush.bf16.msra.mxu0 %v2418
    %4280 = vmatpush.bf16.msra.mxu0 %v2413
    %4281 = vmatpush.bf16.msra.mxu0 %v2408
    %4282 = vmatpush.bf16.msra.mxu0 %v2403
    %4283 = vmatpush.bf16.msra.mxu0 %v2398
    %4284 = vmatpush.bf16.msra.mxu0 %v2393
    %4285 = vmatpush.bf16.msra.mxu0 %v2388
    %4286 = vmatmul.bf16.gmra.mxu0 %v790
    %v4287 = vpop.f32.mrf.mxu0
    %v4288 = vadd.f32 %v4259, %v4287
    %v4289 = vpop.f32.mrf.mxu0
    %v4290 = vadd.f32 %v4261, %v4289
    %4291 = vmatmul.bf16.gmra.mxu0 %v800
    %v4292 = vpop.f32.mrf.mxu0
    %v4293 = vadd.f32 %v4264, %v4292
    %v4294 = vpop.f32.mrf.mxu0
    %v4295 = vadd.f32 %v4266, %v4294
    %4296 = vmatmul.bf16.gmra.mxu0 %v810
    %v4297 = vpop.f32.mrf.mxu0
    %v4298 = vadd.f32 %v4269, %v4297
    %v4299 = vpop.f32.mrf.mxu0
    %v4300 = vadd.f32 %v4271, %v4299
    %4301 = vmatmul.bf16.gmra.mxu0 %v820
    %v4302 = vpop.f32.mrf.mxu0
    %v4303 = vadd.f32 %v4274, %v4302
    %v4304 = vpop.f32.mrf.mxu0
    %v4305 = vadd.f32 %v4276, %v4304
    %4306 = vdwg.mxu0
    %4307 = vmatpush.bf16.msra.mxu0 %v2463
    %4308 = vmatpush.bf16.msra.mxu0 %v2458
    %4309 = vmatpush.bf16.msra.mxu0 %v2453
    %4310 = vmatpush.bf16.msra.mxu0 %v2448
    %4311 = vmatpush.bf16.msra.mxu0 %v2443
    %4312 = vmatpush.bf16.msra.mxu0 %v2438
    %4313 = vmatpush.bf16.msra.mxu0 %v2433
    %4314 = vmatpush.bf16.msra.mxu0 %v2428
    %4315 = vmatmul.bf16.gmra.mxu0 %v791
    %v4316 = vpop.f32.mrf.mxu0
    %v4317 = vadd.f32 %v4288, %v4316
    %v4318 = vpop.f32.mrf.mxu0
    %v4319 = vadd.f32 %v4290, %v4318
    %4320 = vmatmul.bf16.gmra.mxu0 %v801
    %v4321 = vpop.f32.mrf.mxu0
    %v4322 = vadd.f32 %v4293, %v4321
    %v4323 = vpop.f32.mrf.mxu0
    %v4324 = vadd.f32 %v4295, %v4323
    %4325 = vmatmul.bf16.gmra.mxu0 %v811
    %v4326 = vpop.f32.mrf.mxu0
    %v4327 = vadd.f32 %v4298, %v4326
    %v4328 = vpop.f32.mrf.mxu0
    %v4329 = vadd.f32 %v4300, %v4328
    %4330 = vmatmul.bf16.gmra.mxu0 %v821
    %v4331 = vpop.f32.mrf.mxu0
    %v4332 = vadd.f32 %v4303, %v4331
    %v4333 = vpop.f32.mrf.mxu0
    %v4334 = vadd.f32 %v4305, %v4333
    %4335 = vdwg.mxu0
    %4336 = vmatpush.bf16.msra.mxu0 %v2503
    %4337 = vmatpush.bf16.msra.mxu0 %v2498
    %4338 = vmatpush.bf16.msra.mxu0 %v2493
    %4339 = vmatpush.bf16.msra.mxu0 %v2488
    %4340 = vmatpush.bf16.msra.mxu0 %v2483
    %4341 = vmatpush.bf16.msra.mxu0 %v2478
    %4342 = vmatpush.bf16.msra.mxu0 %v2473
    %4343 = vmatpush.bf16.msra.mxu0 %v2468
    %4344 = vmatmul.bf16.gmra.mxu0 %v792
    %v4345 = vpop.f32.mrf.mxu0
    %v4346 = vadd.f32 %v4317, %v4345
    %v4347 = vpop.f32.mrf.mxu0
    %v4348 = vadd.f32 %v4319, %v4347
    %4349 = vmatmul.bf16.gmra.mxu0 %v802
    %v4350 = vpop.f32.mrf.mxu0
    %v4351 = vadd.f32 %v4322, %v4350
    %v4352 = vpop.f32.mrf.mxu0
    %v4353 = vadd.f32 %v4324, %v4352
    %4354 = vmatmul.bf16.gmra.mxu0 %v812
    %v4355 = vpop.f32.mrf.mxu0
    %v4356 = vadd.f32 %v4327, %v4355
    %v4357 = vpop.f32.mrf.mxu0
    %v4358 = vadd.f32 %v4329, %v4357
    %4359 = vmatmul.bf16.gmra.mxu0 %v822
    %v4360 = vpop.f32.mrf.mxu0
    %v4361 = vadd.f32 %v4332, %v4360
    %v4362 = vpop.f32.mrf.mxu0
    %v4363 = vadd.f32 %v4334, %v4362
    %4364 = vdwg.mxu0
    %4365 = vmatpush.bf16.msra.mxu0 %v2543
    %4366 = vmatpush.bf16.msra.mxu0 %v2538
    %4367 = vmatpush.bf16.msra.mxu0 %v2533
    %4368 = vmatpush.bf16.msra.mxu0 %v2528
    %4369 = vmatpush.bf16.msra.mxu0 %v2523
    %4370 = vmatpush.bf16.msra.mxu0 %v2518
    %4371 = vmatpush.bf16.msra.mxu0 %v2513
    %4372 = vmatpush.bf16.msra.mxu0 %v2508
    %4373 = vmatmul.bf16.gmra.mxu0 %v793
    %v4374 = vpop.f32.mrf.mxu0
    %v4375 = vadd.f32 %v4346, %v4374
    %v4376 = vpop.f32.mrf.mxu0
    %v4377 = vadd.f32 %v4348, %v4376
    %4378 = vmatmul.bf16.gmra.mxu0 %v803
    %v4379 = vpop.f32.mrf.mxu0
    %v4380 = vadd.f32 %v4351, %v4379
    %v4381 = vpop.f32.mrf.mxu0
    %v4382 = vadd.f32 %v4353, %v4381
    %4383 = vmatmul.bf16.gmra.mxu0 %v813
    %v4384 = vpop.f32.mrf.mxu0
    %v4385 = vadd.f32 %v4356, %v4384
    %v4386 = vpop.f32.mrf.mxu0
    %v4387 = vadd.f32 %v4358, %v4386
    %4388 = vmatmul.bf16.gmra.mxu0 %v823
    %v4389 = vpop.f32.mrf.mxu0
    %v4390 = vadd.f32 %v4361, %v4389
    %v4391 = vpop.f32.mrf.mxu0
    %v4392 = vadd.f32 %v4363, %v4391
    %4393 = vdwg.mxu0
    %v4394 = vadd.f32 %v104, %v3215
    %v4395 = vadd.f32 %v105, %v3505
    %v4396 = vadd.f32 %v106, %v3795
    %v4397 = vadd.f32 %v107, %v4085
    %v4398 = vadd.f32 %v108, %v4375
    %v4399 = vadd.f32 %v109, %v3217
    %v4400 = vadd.f32 %v110, %v3507
    %v4401 = vadd.f32 %v111, %v3797
    %v4402 = vadd.f32 %v112, %v4087
    %v4403 = vadd.f32 %v113, %v4377
    %v4404 = vadd.f32 %v114, %v3220
    %v4405 = vadd.f32 %v115, %v3510
    %v4406 = vadd.f32 %v116, %v3800
    %v4407 = vadd.f32 %v117, %v4090
    %v4408 = vadd.f32 %v118, %v4380
    %v4409 = vadd.f32 %v119, %v3222
    %v4410 = vadd.f32 %v120, %v3512
    %v4411 = vadd.f32 %v121, %v3802
    %v4412 = vadd.f32 %v122, %v4092
    %v4413 = vadd.f32 %v123, %v4382
    %v4414 = vadd.f32 %v124, %v3225
    %v4415 = vadd.f32 %v125, %v3515
    %v4416 = vadd.f32 %v126, %v3805
    %v4417 = vadd.f32 %v127, %v4095
    %v4418 = vadd.f32 %v128, %v4385
    %v4419 = vadd.f32 %v129, %v3227
    %v4420 = vadd.f32 %v130, %v3517
    %v4421 = vadd.f32 %v131, %v3807
    %v4422 = vadd.f32 %v132, %v4097
    %v4423 = vadd.f32 %v133, %v4387
    %v4424 = vadd.f32 %v134, %v3230
    %v4425 = vadd.f32 %v135, %v3520
    %v4426 = vadd.f32 %v136, %v3810
    %v4427 = vadd.f32 %v137, %v4100
    %v4428 = vadd.f32 %v138, %v4390
    %v4429 = vadd.f32 %v139, %v3232
    %v4430 = vadd.f32 %v140, %v3522
    %v4431 = vadd.f32 %v141, %v3812
    %v4432 = vadd.f32 %v142, %v4102
    %v4433 = vadd.f32 %v143, %v4392
    %4434 = vst [vmem:[#allocation2] sm:$0xff] %v4394
    %4435 = vst [vmem:[#allocation2 + $0x8] sm:$0xff] %v4395
    %4436 = vst [vmem:[#allocation2 + $0x10] sm:$0xff] %v4396
    %4437 = vst [vmem:[#allocation2 + $0x18] sm:$0xff] %v4397
    %4438 = vst [vmem:[#allocation2 + $0x20] sm:$0xff] %v4398
    %4439 = vst [vmem:[#allocation2 + $0x28] sm:$0xff] %v4399
    %4440 = vst [vmem:[#allocation2 + $0x30] sm:$0xff] %v4400
    %4441 = vst [vmem:[#allocation2 + $0x38] sm:$0xff] %v4401
    %4442 = vst [vmem:[#allocation2 + $0x40] sm:$0xff] %v4402
    %4443 = vst [vmem:[#allocation2 + $0x48] sm:$0xff] %v4403
    %4444 = vst [vmem:[#allocation2 + $0x50] sm:$0xff] %v4404
    %4445 = vst [vmem:[#allocation2 + $0x58] sm:$0xff] %v4405
    %4446 = vst [vmem:[#allocation2 + $0x60] sm:$0xff] %v4406
    %4447 = vst [vmem:[#allocation2 + $0x68] sm:$0xff] %v4407
    %4448 = vst [vmem:[#allocation2 + $0x70] sm:$0xff] %v4408
    %4449 = vst [vmem:[#allocation2 + $0x78] sm:$0xff] %v4409
    %4450 = vst [vmem:[#allocation2 + $0x80] sm:$0xff] %v4410
    %4451 = vst [vmem:[#allocation2 + $0x88] sm:$0xff] %v4411
    %4452 = vst [vmem:[#allocation2 + $0x90] sm:$0xff] %v4412
    %4453 = vst [vmem:[#allocation2 + $0x98] sm:$0xff] %v4413
    %4454 = vst [vmem:[#allocation2 + $0xa0] sm:$0xff] %v4414
    %4455 = vst [vmem:[#allocation2 + $0xa8] sm:$0xff] %v4415
    %4456 = vst [vmem:[#allocation2 + $0xb0] sm:$0xff] %v4416
    %4457 = vst [vmem:[#allocation2 + $0xb8] sm:$0xff] %v4417
    %4458 = vst [vmem:[#allocation2 + $0xc0] sm:$0xff] %v4418
    %4459 = vst [vmem:[#allocation2 + $0xc8] sm:$0xff] %v4419
    %4460 = vst [vmem:[#allocation2 + $0xd0] sm:$0xff] %v4420
    %4461 = vst [vmem:[#allocation2 + $0xd8] sm:$0xff] %v4421
    %4462 = vst [vmem:[#allocation2 + $0xe0] sm:$0xff] %v4422
    %4463 = vst [vmem:[#allocation2 + $0xe8] sm:$0xff] %v4423
    %4464 = vst [vmem:[#allocation2 + $0xf0] sm:$0xff] %v4424
    %4465 = vst [vmem:[#allocation2 + $0xf8] sm:$0xff] %v4425
    %4466 = vst [vmem:[#allocation2 + $0x100] sm:$0xff] %v4426
    %4467 = vst [vmem:[#allocation2 + $0x108] sm:$0xff] %v4427
    %4468 = vst [vmem:[#allocation2 + $0x110] sm:$0xff] %v4428
    %4469 = vst [vmem:[#allocation2 + $0x118] sm:$0xff] %v4429
    %4470 = vst [vmem:[#allocation2 + $0x120] sm:$0xff] %v4430
    %4471 = vst [vmem:[#allocation2 + $0x128] sm:$0xff] %v4431
    %4472 = vst [vmem:[#allocation2 + $0x130] sm:$0xff] %v4432
    %4473 = vst [vmem:[#allocation2 + $0x138] sm:$0xff] %v4433
    // Predicated region
    $region30: #{tpu_custom_call.1} parent=1 // pred_check
      %p4474 = pneg %p60
    $region31: #{tpu_custom_call.1} parent=1 // pred_check_branch
      %4476 = sbr.rel (%p4474) target = $region33
    $region32: #{tpu_custom_call.1} parent=1 // pred_region
      %v4477 = vld [vmem:[#allocation2] sm:$0xff]
      %v4478 = vld [vmem:[#allocation2 + $0x8] sm:$0xff]
      %v4479 = vld [vmem:[#allocation2 + $0x10] sm:$0xff]
      %v4480 = vld [vmem:[#allocation2 + $0x18] sm:$0xff]
      %v4481 = vld [vmem:[#allocation2 + $0x20] sm:$0xff]
      %v4482 = vld [vmem:[#allocation2 + $0x28] sm:$0xff]
      %v4483 = vld [vmem:[#allocation2 + $0x30] sm:$0xff]
      %v4484 = vld [vmem:[#allocation2 + $0x38] sm:$0xff]
      %v4485 = vld [vmem:[#allocation2 + $0x40] sm:$0xff]
      %v4486 = vld [vmem:[#allocation2 + $0x48] sm:$0xff]
      %v4487 = vld [vmem:[#allocation2 + $0x50] sm:$0xff]
      %v4488 = vld [vmem:[#allocation2 + $0x58] sm:$0xff]
      %v4489 = vld [vmem:[#allocation2 + $0x60] sm:$0xff]
      %v4490 = vld [vmem:[#allocation2 + $0x68] sm:$0xff]
      %v4491 = vld [vmem:[#allocation2 + $0x70] sm:$0xff]
      %v4492 = vld [vmem:[#allocation2 + $0x78] sm:$0xff]
      %v4493 = vld [vmem:[#allocation2 + $0x80] sm:$0xff]
      %v4494 = vld [vmem:[#allocation2 + $0x88] sm:$0xff]
      %v4495 = vld [vmem:[#allocation2 + $0x90] sm:$0xff]
      %v4496 = vld [vmem:[#allocation2 + $0x98] sm:$0xff]
      %v4497 = vld [vmem:[#allocation2 + $0xa0] sm:$0xff]
      %v4498 = vld [vmem:[#allocation2 + $0xa8] sm:$0xff]
      %v4499 = vld [vmem:[#allocation2 + $0xb0] sm:$0xff]
      %v4500 = vld [vmem:[#allocation2 + $0xb8] sm:$0xff]
      %v4501 = vld [vmem:[#allocation2 + $0xc0] sm:$0xff]
      %v4502 = vld [vmem:[#allocation2 + $0xc8] sm:$0xff]
      %v4503 = vld [vmem:[#allocation2 + $0xd0] sm:$0xff]
      %v4504 = vld [vmem:[#allocation2 + $0xd8] sm:$0xff]
      %v4505 = vld [vmem:[#allocation2 + $0xe0] sm:$0xff]
      %v4506 = vld [vmem:[#allocation2 + $0xe8] sm:$0xff]
      %v4507 = vld [vmem:[#allocation2 + $0xf0] sm:$0xff]
      %v4508 = vld [vmem:[#allocation2 + $0xf8] sm:$0xff]
      %v4509 = vld [vmem:[#allocation2 + $0x100] sm:$0xff]
      %v4510 = vld [vmem:[#allocation2 + $0x108] sm:$0xff]
      %v4511 = vld [vmem:[#allocation2 + $0x110] sm:$0xff]
      %v4512 = vld [vmem:[#allocation2 + $0x118] sm:$0xff]
      %v4513 = vld [vmem:[#allocation2 + $0x120] sm:$0xff]
      %v4514 = vld [vmem:[#allocation2 + $0x128] sm:$0xff]
      %v4515 = vld [vmem:[#allocation2 + $0x130] sm:$0xff]
      %v4516 = vld [vmem:[#allocation2 + $0x138] sm:$0xff]
      %v4517 = vld [vmem:[#allocation8] sm:$0x1f]
      %v4519 = vperm.slane %v4517, 0
      %v4520 = vperm.slane %v4517, 1
      %v4521 = vperm.slane %v4517, 2
      %v4522 = vperm.slane %v4517, 3
      %v4523 = vperm.slane %v4517, 4
      %v4529 = vadd.f32 %v4477, %v4519
      %v4530 = vadd.f32 %v4478, %v4520
      %v4531 = vadd.f32 %v4479, %v4521
      %v4532 = vadd.f32 %v4480, %v4522
      %v4533 = vadd.f32 %v4481, %v4523
      %v4534 = vadd.f32 %v4482, %v4519
      %v4535 = vadd.f32 %v4483, %v4520
      %v4536 = vadd.f32 %v4484, %v4521
      %v4537 = vadd.f32 %v4485, %v4522
      %v4538 = vadd.f32 %v4486, %v4523
      %v4539 = vadd.f32 %v4487, %v4519
      %v4540 = vadd.f32 %v4488, %v4520
      %v4541 = vadd.f32 %v4489, %v4521
      %v4542 = vadd.f32 %v4490, %v4522
      %v4543 = vadd.f32 %v4491, %v4523
      %v4544 = vadd.f32 %v4492, %v4519
      %v4545 = vadd.f32 %v4493, %v4520
      %v4546 = vadd.f32 %v4494, %v4521
      %v4547 = vadd.f32 %v4495, %v4522
      %v4548 = vadd.f32 %v4496, %v4523
      %v4549 = vadd.f32 %v4497, %v4519
      %v4550 = vadd.f32 %v4498, %v4520
      %v4551 = vadd.f32 %v4499, %v4521
      %v4552 = vadd.f32 %v4500, %v4522
      %v4553 = vadd.f32 %v4501, %v4523
      %v4554 = vadd.f32 %v4502, %v4519
      %v4555 = vadd.f32 %v4503, %v4520
      %v4556 = vadd.f32 %v4504, %v4521
      %v4557 = vadd.f32 %v4505, %v4522
      %v4558 = vadd.f32 %v4506, %v4523
      %v4559 = vadd.f32 %v4507, %v4519
      %v4560 = vadd.f32 %v4508, %v4520
      %v4561 = vadd.f32 %v4509, %v4521
      %v4562 = vadd.f32 %v4510, %v4522
      %v4563 = vadd.f32 %v4511, %v4523
      %v4564 = vadd.f32 %v4512, %v4519
      %v4565 = vadd.f32 %v4513, %v4520
      %v4566 = vadd.f32 %v4514, %v4521
      %v4567 = vadd.f32 %v4515, %v4522
      %v4568 = vadd.f32 %v4516, %v4523
      %4569 = vst [vmem:[#allocation9] sm:$0xff] %v4529
      %4570 = vst [vmem:[#allocation9 + $0x8] sm:$0xff] %v4530
      %4571 = vst [vmem:[#allocation9 + $0x10] sm:$0xff] %v4531
      %4572 = vst [vmem:[#allocation9 + $0x18] sm:$0xff] %v4532
      %4573 = vst [vmem:[#allocation9 + $0x20] sm:$0xff] %v4533
      %4574 = vst [vmem:[#allocation9 + $0x28] sm:$0xff] %v4534
      %4575 = vst [vmem:[#allocation9 + $0x30] sm:$0xff] %v4535
      %4576 = vst [vmem:[#allocation9 + $0x38] sm:$0xff] %v4536
      %4577 = vst [vmem:[#allocation9 + $0x40] sm:$0xff] %v4537
      %4578 = vst [vmem:[#allocation9 + $0x48] sm:$0xff] %v4538
      %4579 = vst [vmem:[#allocation9 + $0x50] sm:$0xff] %v4539
      %4580 = vst [vmem:[#allocation9 + $0x58] sm:$0xff] %v4540
      %4581 = vst [vmem:[#allocation9 + $0x60] sm:$0xff] %v4541
      %4582 = vst [vmem:[#allocation9 + $0x68] sm:$0xff] %v4542
      %4583 = vst [vmem:[#allocation9 + $0x70] sm:$0xff] %v4543
      %4584 = vst [vmem:[#allocation9 + $0x78] sm:$0xff] %v4544
      %4585 = vst [vmem:[#allocation9 + $0x80] sm:$0xff] %v4545
      %4586 = vst [vmem:[#allocation9 + $0x88] sm:$0xff] %v4546
      %4587 = vst [vmem:[#allocation9 + $0x90] sm:$0xff] %v4547
      %4588 = vst [vmem:[#allocation9 + $0x98] sm:$0xff] %v4548
      %4589 = vst [vmem:[#allocation9 + $0xa0] sm:$0xff] %v4549
      %4590 = vst [vmem:[#allocation9 + $0xa8] sm:$0xff] %v4550
      %4591 = vst [vmem:[#allocation9 + $0xb0] sm:$0xff] %v4551
      %4592 = vst [vmem:[#allocation9 + $0xb8] sm:$0xff] %v4552
      %4593 = vst [vmem:[#allocation9 + $0xc0] sm:$0xff] %v4553
      %4594 = vst [vmem:[#allocation9 + $0xc8] sm:$0xff] %v4554
      %4595 = vst [vmem:[#allocation9 + $0xd0] sm:$0xff] %v4555
      %4596 = vst [vmem:[#allocation9 + $0xd8] sm:$0xff] %v4556
      %4597 = vst [vmem:[#allocation9 + $0xe0] sm:$0xff] %v4557
      %4598 = vst [vmem:[#allocation9 + $0xe8] sm:$0xff] %v4558
      %4599 = vst [vmem:[#allocation9 + $0xf0] sm:$0xff] %v4559
      %4600 = vst [vmem:[#allocation9 + $0xf8] sm:$0xff] %v4560
      %4601 = vst [vmem:[#allocation9 + $0x100] sm:$0xff] %v4561
      %4602 = vst [vmem:[#allocation9 + $0x108] sm:$0xff] %v4562
      %4603 = vst [vmem:[#allocation9 + $0x110] sm:$0xff] %v4563
      %4604 = vst [vmem:[#allocation9 + $0x118] sm:$0xff] %v4564
      %4605 = vst [vmem:[#allocation9 + $0x120] sm:$0xff] %v4565
      %4606 = vst [vmem:[#allocation9 + $0x128] sm:$0xff] %v4566
      %4607 = vst [vmem:[#allocation9 + $0x130] sm:$0xff] %v4567
      %4608 = vst [vmem:[#allocation9 + $0x138] sm:$0xff] %v4568
    $region33: #{tpu_custom_call.1} parent=1 // pred_fallthru
      _
    // Predicated region
    $region34: #{tpu_custom_call.1} parent=1 // pred_check
      _
    $region35: #{tpu_custom_call.1} parent=1 // pred_check_branch
      %4610 = sbr.rel (0) target = $region37
    $region36: #{tpu_custom_call.1} parent=1 // pred_region
      %4612 = vsyncadd [#allocation5], 0
      %s4613 = sshll.u32 [#allocation9], 4
      %s4614 = int_to_ptr.vmem [resolvable:$true] %s4613
      %s4615 = sshll.u32 %s3, 4
      %s4616 = int_to_ptr.hbm [resolvable:$true] %s4615
      %4621 = dma.vmem_to_hbm [thread:$0]  %s4614, 5120, %s4616, [#allocation5], 640, 640, 40
    $region37: #{tpu_custom_call.1} parent=1 // pred_fallthru
      _
    // Predicated region
    $region38: #{tpu_custom_call.1} parent=1 // pred_check
      _
    $region39: #{tpu_custom_call.1} parent=1 // pred_check_branch
      %4623 = sbr.rel (0) target = $region41
    $region40: #{tpu_custom_call.1} parent=1 // pred_region
      %4625 = dma.done [#allocation5], 5120
    $region41: #{tpu_custom_call.1} parent=1 // pred_fallthru
      _
    %4626 = vsyncpa [#allocation4], 1
    %4627 = vsyncpa [#allocation7], 1
    %4628 = vsyncpa [#allocation5], 1

</llo_original>
